<compile_context>
chip_gen: v6e
topology: v6e:2x2x1
jax: 0.10.0
libtpu: 0.0.40
codegen_flags: <defaults>
</compile_context>

<pallas_src>
import math
import functools

import jax
import jax.numpy as jnp
from jax.experimental import pallas as pl
from jax.experimental.pallas import tpu as pltpu

LN_EPS = 1e-5  # PyTorch nn.LayerNorm default


def _layernorm(x, gamma, beta):
    mu = jnp.mean(x, axis=-1, keepdims=True)
    var = jnp.mean((x - mu) ** 2, axis=-1, keepdims=True)
    return (x - mu) * jax.lax.rsqrt(var + LN_EPS) * gamma + beta


# ----------------------------------------------------------------------------
# Single fused kernel:
#   token one-hot gather -> embed scale + PE add -> N transformer blocks
#   -> final LayerNorm -> mean-pool -> classifier MLP.
# ----------------------------------------------------------------------------
def fused_forward_kernel(
    tok_ref, emb_ref, pe_ref,
    wqkv_ref, bqkv_ref, wo_ref, bo_ref,
    g1_ref, be1_ref, w1_ref, b1_ref, w2_ref, b2_ref, g2_ref, be2_ref,
    gf_ref, bef_ref, wc1_ref, bc1_ref, wc2_ref, bc2_ref,
    out_ref,
    *, n_layers, n_heads, d_model, batch, seq,
):
    B, S, D, H = batch, seq, d_model, n_heads
    M = B * S
    dk = D // H
    V = emb_ref.shape[0]
    scale = 1.0 / math.sqrt(dk)
    f32 = jnp.float32

    # ---- embedding gather as a one-hot matmul (exact: one nonzero per row) ----
    tok = tok_ref[...]                                              # (M, 1) i32
    col = jax.lax.broadcasted_iota(jnp.int32, (M, V), 1)
    onehot = (col == tok).astype(f32)                               # (M, V)
    x = jnp.dot(onehot, emb_ref[...], preferred_element_type=f32)   # (M, D)

    # ---- embedding scale + positional encoding (pe is (S, D), broadcast) ----
    x = x * math.sqrt(D)
    x = (x.reshape(B, S, D) + pe_ref[...]).reshape(M, D)

    for l in range(n_layers):                       # static unrolled loop
        # ---- fused QKV projection: one (M,D)@(D,3D) MXU push ----
        qkv = jnp.dot(x, wqkv_ref[l], preferred_element_type=f32) + bqkv_ref[l]
        qkv3 = qkv.reshape(B, S, 3 * D)             # split rows into (B, S)

        # ---- attention: B-batched matmuls per head (no mask, no transposes) ----
        ctx_parts = []
        for h in range(H):
            q = qkv3[:, :, h * dk:(h + 1) * dk]                     # (B, S, dk)
            k = qkv3[:, :, D + h * dk:D + (h + 1) * dk]
            v = qkv3[:, :, 2 * D + h * dk:2 * D + (h + 1) * dk]
            s = jnp.einsum("bqd,bkd->bqk", q, k,
                           preferred_element_type=f32) * scale      # (B, S, S)
            s = s - jnp.max(s, axis=-1, keepdims=True)
            p = jnp.exp(s)
            denom = jnp.sum(p, axis=-1, keepdims=True)
            p = p * pl.reciprocal(denom, approx=True)               # EUP slot
            ctx_parts.append(jnp.einsum("bqk,bkd->bqd", p, v,
                                        preferred_element_type=f32))  # (B,S,dk)
        # Head-major lane concat matches PyTorch's transpose(1,2).view(B,S,D).
        ctx = jnp.concatenate(ctx_parts, axis=-1).reshape(M, D)

        # ---- output projection: single (M,D)@(D,D) contraction ----
        attn_out = jnp.dot(ctx, wo_ref[l], preferred_element_type=f32) + bo_ref[l]
        x1 = _layernorm(x + attn_out, g1_ref[l], be1_ref[l])

        # ---- feed-forward ----
        h1 = jnp.maximum(
            jnp.dot(x1, w1_ref[l], preferred_element_type=f32) + b1_ref[l], 0.0)
        ff = jnp.dot(h1, w2_ref[l], preferred_element_type=f32) + b2_ref[l]
        x = _layernorm(x1 + ff, g2_ref[l], be2_ref[l])

    # ---- final LN + mean pooling (XLU sublane reduce) + classifier MLP ----
    xn = _layernorm(x, gf_ref[...], bef_ref[...])                   # (M, D)
    pooled = jnp.mean(xn.reshape(B, S, D), axis=1)                  # (B, D)
    hcls = jnp.maximum(
        jnp.dot(pooled, wc1_ref[...], preferred_element_type=f32) + bc1_ref[...],
        0.0)
    logits = jnp.dot(hcls, wc2_ref[...], preferred_element_type=f32) + bc2_ref[...]
    out_ref[...] = logits                                           # (B, C_pad)


def _full_spec(a):
    nd = a.ndim
    return pl.BlockSpec(a.shape, lambda i, _nd=nd: (0,) * _nd)


def fused_forward(tokens, embedding, pe, packed, *, n_heads, batch, seq):
    B, S = batch, seq
    M = B * S
    D = embedding.shape[1]
    L = packed["wqkv"].shape[0]
    c_pad = packed["wc2p"].shape[1]

    tok2d = tokens.reshape(M, 1).astype(jnp.int32)

    inputs = [
        tok2d, embedding.astype(jnp.float32), pe[:S].astype(jnp.float32),
        packed["wqkv"], packed["bqkv"], packed["wo"], packed["bo"],
        packed["g1"], packed["be1"], packed["w1"], packed["b1"],
        packed["w2"], packed["b2"], packed["g2"], packed["be2"],
        packed["gf"], packed["bef"], packed["wc1"], packed["bc1"],
        packed["wc2p"], packed["bc2p"],
    ]

    kernel = functools.partial(
        fused_forward_kernel,
        n_layers=L, n_heads=n_heads, d_model=D, batch=B, seq=S)

    return pl.pallas_call(
        kernel,
        out_shape=jax.ShapeDtypeStruct((B, c_pad), jnp.float32),
        grid=(1,),
        in_specs=[_full_spec(a) for a in inputs],
        out_specs=pl.BlockSpec((B, c_pad), lambda i: (0, 0)),
        compiler_params=pltpu.CompilerParams(
            dimension_semantics=("arbitrary",),
            vmem_limit_bytes=32 * 1024 * 1024),
    )(*inputs)


# ----------------------------------------------------------------------------
# Parameter construction (deterministic, synthetic) + kernel-layout packing.
# ----------------------------------------------------------------------------
def make_params(key, vocab_size, d_model, n_heads, n_layers, n_classes):
    d_ff = d_model * 4
    ks = iter(jax.random.split(key, 16 + 12 * n_layers))

    def w(shape, scale=0.05):
        return (scale * jax.random.normal(next(ks), shape)).astype(jnp.float32)

    params = {
        "embedding": w((vocab_size, d_model), 0.1),
        "head": {
            "g": jnp.ones((1, d_model), jnp.float32),
            "be": jnp.zeros((1, d_model), jnp.float32),
            "wc1": w((d_model, d_model // 2)),
            "bc1": w((1, d_model // 2)),
            "wc2": w((d_model // 2, n_classes)),
            "bc2": w((1, n_classes)),
        },
        "blocks": [],
    }
    for _ in range(n_layers):
        params["blocks"].append({
            "wq": w((d_model, d_model)), "bq": w((1, d_model)),
            "wk": w((d_model, d_model)), "bk": w((1, d_model)),
            "wv": w((d_model, d_model)), "bv": w((1, d_model)),
            "wo": w((d_model, d_model)), "bo": w((1, d_model)),
            "g1": jnp.ones((1, d_model), jnp.float32),
            "be1": jnp.zeros((1, d_model), jnp.float32),
            "w1": w((d_model, d_ff)), "b1": w((1, d_ff)),
            "w2": w((d_ff, d_model)), "b2": w((1, d_model)),
            "g2": jnp.ones((1, d_model), jnp.float32),
            "be2": jnp.zeros((1, d_model), jnp.float32),
        })
    return params


def pack_params(params, lane_pad=128):
    """Re-arrange PyTorch-layout weights into the fused-kernel layout."""
    blocks = params["blocks"]

    # Fused QKV: columns are [Q (head-major dk groups) | K | V], so the kernel
    # can take q_h/k_h/v_h as contiguous lane slices of the (M, 3D) result.
    wqkv = jnp.stack([jnp.concatenate([p["wq"], p["wk"], p["wv"]], axis=1)
                      for p in blocks])                            # (L, D, 3D)
    bqkv = jnp.stack([jnp.concatenate([p["bq"], p["bk"], p["bv"]], axis=1)
                      for p in blocks])                            # (L, 1, 3D)
    wo = jnp.stack([p["wo"] for p in blocks])                      # (L, D, D)
    bo = jnp.stack([p["bo"] for p in blocks])
    g1 = jnp.stack([p["g1"] for p in blocks])
    be1 = jnp.stack([p["be1"] for p in blocks])
    w1 = jnp.stack([p["w1"] for p in blocks])
    b1 = jnp.stack([p["b1"] for p in blocks])
    w2 = jnp.stack([p["w2"] for p in blocks])
    b2 = jnp.stack([p["b2"] for p in blocks])
    g2 = jnp.stack([p["g2"] for p in blocks])
    be2 = jnp.stack([p["be2"] for p in blocks])

    head = params["head"]
    C = head["wc2"].shape[1]
    c_pad = lane_pad * ((C + lane_pad - 1) // lane_pad)
    wc2p = jnp.zeros((head["wc2"].shape[0], c_pad), jnp.float32).at[:, :C].set(head["wc2"])
    bc2p = jnp.zeros((1, c_pad), jnp.float32).at[:, :C].set(head["bc2"])

    return dict(wqkv=wqkv, bqkv=bqkv, wo=wo, bo=bo, g1=g1, be1=be1,
                w1=w1, b1=b1, w2=w2, b2=b2, g2=g2, be2=be2,
                gf=head["g"], bef=head["be"], wc1=head["wc1"], bc1=head["bc1"],
                wc2p=wc2p, bc2p=bc2p)


def positional_encoding(max_len, d_model):
    position = jnp.arange(max_len, dtype=jnp.float32)[:, None]
    div_term = jnp.exp(jnp.arange(0, d_model, 2, dtype=jnp.float32)
                       * -(math.log(10000.0) / d_model))
    pe = jnp.zeros((max_len, d_model), jnp.float32)
    pe = pe.at[:, 0::2].set(jnp.sin(position * div_term))
    pe = pe.at[:, 1::2].set(jnp.cos(position * div_term))
    return pe


# ----------------------------------------------------------------------------
# Full forward: everything (including the embedding gather) inside Pallas.
# ----------------------------------------------------------------------------
def intent_classifier_forward(tokens, embedding, packed, pe, n_heads, n_classes):
    B, S = tokens.shape
    logits_pad = fused_forward(tokens, embedding, pe, packed,
                               n_heads=n_heads, batch=B, seq=S)
    return logits_pad[:, :n_classes]


# ----------------------------------------------------------------------------
# Pure-JAX reference (for correctness check).
# ----------------------------------------------------------------------------
def reference_forward(tokens, params, pe, d_model, n_heads):
    B, S = tokens.shape
    x = params["embedding"][tokens] * math.sqrt(d_model)
    x = x + pe[None, :S]
    dk = d_model // n_heads
    for p in params["blocks"]:
        q = x @ p["wq"] + p["bq"]
        k = x @ p["wk"] + p["bk"]
        v = x @ p["wv"] + p["bv"]
        q = q.reshape(B, S, n_heads, dk).transpose(0, 2, 1, 3)
        k = k.reshape(B, S, n_heads, dk).transpose(0, 2, 1, 3)
        v = v.reshape(B, S, n_heads, dk).transpose(0, 2, 1, 3)
        s = jnp.einsum("bhqd,bhkd->bhqk", q, k) / math.sqrt(dk)
        a = jax.nn.softmax(s, axis=-1)
        ctx = jnp.einsum("bhqk,bhkd->bhqd", a, v).transpose(0, 2, 1, 3).reshape(B, S, d_model)
        attn_out = ctx @ p["wo"] + p["bo"]
        x = _layernorm(x + attn_out, p["g1"], p["be1"])
        ff = jnp.maximum(x @ p["w1"] + p["b1"], 0.0) @ p["w2"] + p["b2"]
        x = _layernorm(x + ff, p["g2"], p["be2"])
    hp = params["head"]
    x = _layernorm(x, hp["g"], hp["be"])
    pooled = x.mean(axis=1)
    h = jnp.maximum(pooled @ hp["wc1"] + hp["bc1"], 0.0)
    return h @ hp["wc2"] + hp["bc2"]


if __name__ == "__main__":
    # Small shapes consistent with the module's forward.
    VOCAB, D_MODEL, N_HEADS, N_LAYERS, N_CLASSES, MAX_LEN = 50, 32, 4, 2, 8, 16
    B, S = 2, 8

    key = jax.random.PRNGKey(0)
    kp, kt = jax.random.split(key)
    params = make_params(kp, VOCAB, D_MODEL, N_HEADS, N_LAYERS, N_CLASSES)
    packed = pack_params(params)
    pe = positional_encoding(MAX_LEN, D_MODEL)

    tokens = jax.random.randint(kt, (B, S), 0, VOCAB, dtype=jnp.int32)

    logits = intent_classifier_forward(tokens, params["embedding"], packed, pe,
                                       N_HEADS, N_CLASSES)
    logits = jax.block_until_ready(logits)

    ref = jax.block_until_ready(reference_forward(tokens, params, pe, D_MODEL, N_HEADS))
    assert logits.shape == (B, N_CLASSES)
    # Tolerance loosened slightly vs exact-division softmax because the kernel
    # uses pl.reciprocal(approx=True) (EUP) for the softmax denominator.
    assert jnp.allclose(logits, ref, atol=1e-2, rtol=1e-2), (logits, ref)

    print("KERNEL_OK")
</pallas_src>

<mosaic_0001>
module attributes {stable_mosaic.version = 11 : i64} {
  func.func @fused_forward_kernel(%arg0: i32, %arg1: memref<16x1xi32, #tpu.memory_space<vmem>>, %arg2: memref<50x32xf32, #tpu.memory_space<vmem>>, %arg3: memref<8x32xf32, #tpu.memory_space<vmem>>, %arg4: memref<2x32x96xf32, #tpu.memory_space<vmem>>, %arg5: memref<2x1x96xf32, #tpu.memory_space<vmem>>, %arg6: memref<2x32x32xf32, #tpu.memory_space<vmem>>, %arg7: memref<2x1x32xf32, #tpu.memory_space<vmem>>, %arg8: memref<2x1x32xf32, #tpu.memory_space<vmem>>, %arg9: memref<2x1x32xf32, #tpu.memory_space<vmem>>, %arg10: memref<2x32x128xf32, #tpu.memory_space<vmem>>, %arg11: memref<2x1x128xf32, #tpu.memory_space<vmem>>, %arg12: memref<2x128x32xf32, #tpu.memory_space<vmem>>, %arg13: memref<2x1x32xf32, #tpu.memory_space<vmem>>, %arg14: memref<2x1x32xf32, #tpu.memory_space<vmem>>, %arg15: memref<2x1x32xf32, #tpu.memory_space<vmem>>, %arg16: memref<1x32xf32, #tpu.memory_space<vmem>>, %arg17: memref<1x32xf32, #tpu.memory_space<vmem>>, %arg18: memref<32x16xf32, #tpu.memory_space<vmem>>, %arg19: memref<1x16xf32, #tpu.memory_space<vmem>>, %arg20: memref<16x128xf32, #tpu.memory_space<vmem>>, %arg21: memref<1x128xf32, #tpu.memory_space<vmem>>, %arg22: memref<2x128xf32, #tpu.memory_space<vmem>>) attributes {dimension_semantics = [#tpu.dimension_semantics<arbitrary>], iteration_bounds = array<i64: 1>, scalar_prefetch = 0 : i64, scratch_operands = 0 : i64, tpu.core_type = #tpu.core_type<tc>, window_params = [{pipeline_mode = #tpu.pipeline_mode<synchronous>, transform_indices = @transform_0, window_bounds = array<i64: 16, 1>}, {pipeline_mode = #tpu.pipeline_mode<synchronous>, transform_indices = @transform_1, window_bounds = array<i64: 50, 32>}, {pipeline_mode = #tpu.pipeline_mode<synchronous>, transform_indices = @transform_2, window_bounds = array<i64: 8, 32>}, {pipeline_mode = #tpu.pipeline_mode<synchronous>, transform_indices = @transform_3, window_bounds = array<i64: 2, 32, 96>}, {pipeline_mode = #tpu.pipeline_mode<synchronous>, transform_indices = @transform_4, window_bounds = array<i64: 2, 1, 96>}, {pipeline_mode = #tpu.pipeline_mode<synchronous>, transform_indices = @transform_5, window_bounds = array<i64: 2, 32, 32>}, {pipeline_mode = #tpu.pipeline_mode<synchronous>, transform_indices = @transform_6, window_bounds = array<i64: 2, 1, 32>}, {pipeline_mode = #tpu.pipeline_mode<synchronous>, transform_indices = @transform_7, window_bounds = array<i64: 2, 1, 32>}, {pipeline_mode = #tpu.pipeline_mode<synchronous>, transform_indices = @transform_8, window_bounds = array<i64: 2, 1, 32>}, {pipeline_mode = #tpu.pipeline_mode<synchronous>, transform_indices = @transform_9, window_bounds = array<i64: 2, 32, 128>}, {pipeline_mode = #tpu.pipeline_mode<synchronous>, transform_indices = @transform_10, window_bounds = array<i64: 2, 1, 128>}, {pipeline_mode = #tpu.pipeline_mode<synchronous>, transform_indices = @transform_11, window_bounds = array<i64: 2, 128, 32>}, {pipeline_mode = #tpu.pipeline_mode<synchronous>, transform_indices = @transform_12, window_bounds = array<i64: 2, 1, 32>}, {pipeline_mode = #tpu.pipeline_mode<synchronous>, transform_indices = @transform_13, window_bounds = array<i64: 2, 1, 32>}, {pipeline_mode = #tpu.pipeline_mode<synchronous>, transform_indices = @transform_14, window_bounds = array<i64: 2, 1, 32>}, {pipeline_mode = #tpu.pipeline_mode<synchronous>, transform_indices = @transform_15, window_bounds = array<i64: 1, 32>}, {pipeline_mode = #tpu.pipeline_mode<synchronous>, transform_indices = @transform_16, window_bounds = array<i64: 1, 32>}, {pipeline_mode = #tpu.pipeline_mode<synchronous>, transform_indices = @transform_17, window_bounds = array<i64: 32, 16>}, {pipeline_mode = #tpu.pipeline_mode<synchronous>, transform_indices = @transform_18, window_bounds = array<i64: 1, 16>}, {pipeline_mode = #tpu.pipeline_mode<synchronous>, transform_indices = @transform_19, window_bounds = array<i64: 16, 128>}, {pipeline_mode = #tpu.pipeline_mode<synchronous>, transform_indices = @transform_20, window_bounds = array<i64: 1, 128>}, {pipeline_mode = #tpu.pipeline_mode<synchronous>, transform_indices = @transform_21, window_bounds = array<i64: 2, 128>}]} {
    %c0 = arith.constant 0 : index
    %c0_0 = arith.constant 0 : index
    %0 = vector.load %arg1[%c0, %c0_0] : memref<16x1xi32, #tpu.memory_space<vmem>>, vector<16x1xi32>
    %1 = tpu.iota {dimensions = array<i32: 1>} : vector<16x50xi32>
    %2 = vector.broadcast %0 : vector<16x1xi32> to vector<16x50xi32>
    %3 = arith.cmpi eq, %1, %2 : vector<16x50xi32>
    %4 = arith.extui %3 : vector<16x50xi1> to vector<16x50xi32>
    %5 = arith.sitofp %4 : vector<16x50xi32> to vector<16x50xf32>
    %c0_1 = arith.constant 0 : index
    %c0_2 = arith.constant 0 : index
    %6 = vector.load %arg2[%c0_1, %c0_2] : memref<50x32xf32, #tpu.memory_space<vmem>>, vector<50x32xf32>
    %cst = arith.constant dense<0.000000e+00> : vector<16x32xf32>
    %7 = tpu.matmul %5, %6, %cst {dimension_numbers = #tpu.dot_dimension_numbers<[1], [0], [0], [1], [0, 0, 1, 1], [], []>} : vector<16x50xf32>, vector<50x32xf32>, vector<16x32xf32> -> vector<16x32xf32>
    %cst_3 = arith.constant 5.65685415 : f32
    %8 = vector.broadcast %cst_3 : f32 to vector<16x32xf32>
    %9 = arith.mulf %7, %8 : vector<16x32xf32>
    %10 = vector.shape_cast %9 : vector<16x32xf32> to vector<2x8x32xf32>
    %c0_4 = arith.constant 0 : index
    %c0_5 = arith.constant 0 : index
    %11 = vector.load %arg3[%c0_4, %c0_5] : memref<8x32xf32, #tpu.memory_space<vmem>>, vector<8x32xf32>
    %12 = vector.shape_cast %11 : vector<8x32xf32> to vector<1x8x32xf32>
    %13 = vector.broadcast %12 : vector<1x8x32xf32> to vector<2x8x32xf32>
    %14 = arith.addf %10, %13 : vector<2x8x32xf32>
    %15 = vector.shape_cast %14 : vector<2x8x32xf32> to vector<16x32xf32>
    %c0_6 = arith.constant 0 : index
    %c0_7 = arith.constant 0 : index
    %c0_8 = arith.constant 0 : index
    %16 = vector.load %arg4[%c0_6, %c0_7, %c0_8] : memref<2x32x96xf32, #tpu.memory_space<vmem>>, vector<1x32x96xf32>
    %17 = vector.shape_cast %16 : vector<1x32x96xf32> to vector<32x96xf32>
    %cst_9 = arith.constant dense<0.000000e+00> : vector<16x96xf32>
    %18 = tpu.matmul %15, %17, %cst_9 {dimension_numbers = #tpu.dot_dimension_numbers<[1], [0], [0], [1], [0, 0, 1, 1], [], []>} : vector<16x32xf32>, vector<32x96xf32>, vector<16x96xf32> -> vector<16x96xf32>
    %c0_10 = arith.constant 0 : index
    %c0_11 = arith.constant 0 : index
    %c0_12 = arith.constant 0 : index
    %19 = vector.load %arg5[%c0_10, %c0_11, %c0_12] : memref<2x1x96xf32, #tpu.memory_space<vmem>>, vector<1x1x96xf32>
    %20 = vector.shape_cast %19 : vector<1x1x96xf32> to vector<1x96xf32>
    %21 = vector.broadcast %20 : vector<1x96xf32> to vector<16x96xf32>
    %22 = arith.addf %18, %21 : vector<16x96xf32>
    %23 = vector.shape_cast %22 : vector<16x96xf32> to vector<2x8x96xf32>
    %24 = vector.extract_strided_slice %23 {offsets = [0, 0, 0], sizes = [2, 8, 8], strides = [1, 1, 1]} : vector<2x8x96xf32> to vector<2x8x8xf32>
    %25 = vector.extract_strided_slice %23 {offsets = [0, 0, 32], sizes = [2, 8, 8], strides = [1, 1, 1]} : vector<2x8x96xf32> to vector<2x8x8xf32>
    %26 = vector.extract_strided_slice %23 {offsets = [0, 0, 64], sizes = [2, 8, 8], strides = [1, 1, 1]} : vector<2x8x96xf32> to vector<2x8x8xf32>
    "tpu.trace_start"() <{level = 10 : i32, message = "bqd,bkd->bqk"}> : () -> ()
    %cst_13 = arith.constant dense<0.000000e+00> : vector<2x8x8xf32>
    %27 = tpu.matmul %24, %25, %cst_13 {dimension_numbers = #tpu.dot_dimension_numbers<[2], [2], [1], [1], [0, 0, 0, 1, 1, 1], [0], [0]>} : vector<2x8x8xf32>, vector<2x8x8xf32>, vector<2x8x8xf32> -> vector<2x8x8xf32>
    "tpu.trace_stop"() : () -> ()
    %cst_14 = arith.constant 0.353553385 : f32
    %28 = vector.broadcast %cst_14 : f32 to vector<2x8x8xf32>
    %29 = arith.mulf %27, %28 : vector<2x8x8xf32>
    %cst_15 = arith.constant dense<0xFF800000> : vector<2x8xf32>
    %30 = vector.multi_reduction <maximumf>, %29, %cst_15 [2] : vector<2x8x8xf32> to vector<2x8xf32>
    %31 = vector.shape_cast %30 : vector<2x8xf32> to vector<2x8x1xf32>
    %32 = vector.broadcast %31 : vector<2x8x1xf32> to vector<2x8x8xf32>
    %33 = arith.subf %29, %32 : vector<2x8x8xf32>
    %34 = math.exp %33 : vector<2x8x8xf32>
    %cst_16 = arith.constant dense<0.000000e+00> : vector<2x8xf32>
    %35 = vector.multi_reduction <add>, %34, %cst_16 [2] : vector<2x8x8xf32> to vector<2x8xf32>
    %36 = vector.shape_cast %35 : vector<2x8xf32> to vector<2x8x1xf32>
    %37 = tpu.reciprocal %36 {approx = true} : vector<2x8x1xf32> -> vector<2x8x1xf32>
    %38 = vector.broadcast %37 : vector<2x8x1xf32> to vector<2x8x8xf32>
    %39 = arith.mulf %34, %38 : vector<2x8x8xf32>
    "tpu.trace_start"() <{level = 10 : i32, message = "bqk,bkd->bqd"}> : () -> ()
    %cst_17 = arith.constant dense<0.000000e+00> : vector<2x8x8xf32>
    %40 = tpu.matmul %39, %26, %cst_17 {dimension_numbers = #tpu.dot_dimension_numbers<[2], [1], [1], [2], [0, 0, 0, 1, 1, 2], [0], [0]>} : vector<2x8x8xf32>, vector<2x8x8xf32>, vector<2x8x8xf32> -> vector<2x8x8xf32>
    "tpu.trace_stop"() : () -> ()
    %41 = vector.extract_strided_slice %23 {offsets = [0, 0, 8], sizes = [2, 8, 8], strides = [1, 1, 1]} : vector<2x8x96xf32> to vector<2x8x8xf32>
    %42 = vector.extract_strided_slice %23 {offsets = [0, 0, 40], sizes = [2, 8, 8], strides = [1, 1, 1]} : vector<2x8x96xf32> to vector<2x8x8xf32>
    %43 = vector.extract_strided_slice %23 {offsets = [0, 0, 72], sizes = [2, 8, 8], strides = [1, 1, 1]} : vector<2x8x96xf32> to vector<2x8x8xf32>
    "tpu.trace_start"() <{level = 10 : i32, message = "bqd,bkd->bqk"}> : () -> ()
    %cst_18 = arith.constant dense<0.000000e+00> : vector<2x8x8xf32>
    %44 = tpu.matmul %41, %42, %cst_18 {dimension_numbers = #tpu.dot_dimension_numbers<[2], [2], [1], [1], [0, 0, 0, 1, 1, 1], [0], [0]>} : vector<2x8x8xf32>, vector<2x8x8xf32>, vector<2x8x8xf32> -> vector<2x8x8xf32>
    "tpu.trace_stop"() : () -> ()
    %cst_19 = arith.constant 0.353553385 : f32
    %45 = vector.broadcast %cst_19 : f32 to vector<2x8x8xf32>
    %46 = arith.mulf %44, %45 : vector<2x8x8xf32>
    %cst_20 = arith.constant dense<0xFF800000> : vector<2x8xf32>
    %47 = vector.multi_reduction <maximumf>, %46, %cst_20 [2] : vector<2x8x8xf32> to vector<2x8xf32>
    %48 = vector.shape_cast %47 : vector<2x8xf32> to vector<2x8x1xf32>
    %49 = vector.broadcast %48 : vector<2x8x1xf32> to vector<2x8x8xf32>
    %50 = arith.subf %46, %49 : vector<2x8x8xf32>
    %51 = math.exp %50 : vector<2x8x8xf32>
    %cst_21 = arith.constant dense<0.000000e+00> : vector<2x8xf32>
    %52 = vector.multi_reduction <add>, %51, %cst_21 [2] : vector<2x8x8xf32> to vector<2x8xf32>
    %53 = vector.shape_cast %52 : vector<2x8xf32> to vector<2x8x1xf32>
    %54 = tpu.reciprocal %53 {approx = true} : vector<2x8x1xf32> -> vector<2x8x1xf32>
    %55 = vector.broadcast %54 : vector<2x8x1xf32> to vector<2x8x8xf32>
    %56 = arith.mulf %51, %55 : vector<2x8x8xf32>
    "tpu.trace_start"() <{level = 10 : i32, message = "bqk,bkd->bqd"}> : () -> ()
    %cst_22 = arith.constant dense<0.000000e+00> : vector<2x8x8xf32>
    %57 = tpu.matmul %56, %43, %cst_22 {dimension_numbers = #tpu.dot_dimension_numbers<[2], [1], [1], [2], [0, 0, 0, 1, 1, 2], [0], [0]>} : vector<2x8x8xf32>, vector<2x8x8xf32>, vector<2x8x8xf32> -> vector<2x8x8xf32>
    "tpu.trace_stop"() : () -> ()
    %58 = vector.extract_strided_slice %23 {offsets = [0, 0, 16], sizes = [2, 8, 8], strides = [1, 1, 1]} : vector<2x8x96xf32> to vector<2x8x8xf32>
    %59 = vector.extract_strided_slice %23 {offsets = [0, 0, 48], sizes = [2, 8, 8], strides = [1, 1, 1]} : vector<2x8x96xf32> to vector<2x8x8xf32>
    %60 = vector.extract_strided_slice %23 {offsets = [0, 0, 80], sizes = [2, 8, 8], strides = [1, 1, 1]} : vector<2x8x96xf32> to vector<2x8x8xf32>
    "tpu.trace_start"() <{level = 10 : i32, message = "bqd,bkd->bqk"}> : () -> ()
    %cst_23 = arith.constant dense<0.000000e+00> : vector<2x8x8xf32>
    %61 = tpu.matmul %58, %59, %cst_23 {dimension_numbers = #tpu.dot_dimension_numbers<[2], [2], [1], [1], [0, 0, 0, 1, 1, 1], [0], [0]>} : vector<2x8x8xf32>, vector<2x8x8xf32>, vector<2x8x8xf32> -> vector<2x8x8xf32>
    "tpu.trace_stop"() : () -> ()
    %cst_24 = arith.constant 0.353553385 : f32
    %62 = vector.broadcast %cst_24 : f32 to vector<2x8x8xf32>
    %63 = arith.mulf %61, %62 : vector<2x8x8xf32>
    %cst_25 = arith.constant dense<0xFF800000> : vector<2x8xf32>
    %64 = vector.multi_reduction <maximumf>, %63, %cst_25 [2] : vector<2x8x8xf32> to vector<2x8xf32>
    %65 = vector.shape_cast %64 : vector<2x8xf32> to vector<2x8x1xf32>
    %66 = vector.broadcast %65 : vector<2x8x1xf32> to vector<2x8x8xf32>
    %67 = arith.subf %63, %66 : vector<2x8x8xf32>
    %68 = math.exp %67 : vector<2x8x8xf32>
    %cst_26 = arith.constant dense<0.000000e+00> : vector<2x8xf32>
    %69 = vector.multi_reduction <add>, %68, %cst_26 [2] : vector<2x8x8xf32> to vector<2x8xf32>
    %70 = vector.shape_cast %69 : vector<2x8xf32> to vector<2x8x1xf32>
    %71 = tpu.reciprocal %70 {approx = true} : vector<2x8x1xf32> -> vector<2x8x1xf32>
    %72 = vector.broadcast %71 : vector<2x8x1xf32> to vector<2x8x8xf32>
    %73 = arith.mulf %68, %72 : vector<2x8x8xf32>
    "tpu.trace_start"() <{level = 10 : i32, message = "bqk,bkd->bqd"}> : () -> ()
    %cst_27 = arith.constant dense<0.000000e+00> : vector<2x8x8xf32>
    %74 = tpu.matmul %73, %60, %cst_27 {dimension_numbers = #tpu.dot_dimension_numbers<[2], [1], [1], [2], [0, 0, 0, 1, 1, 2], [0], [0]>} : vector<2x8x8xf32>, vector<2x8x8xf32>, vector<2x8x8xf32> -> vector<2x8x8xf32>
    "tpu.trace_stop"() : () -> ()
    %75 = vector.extract_strided_slice %23 {offsets = [0, 0, 24], sizes = [2, 8, 8], strides = [1, 1, 1]} : vector<2x8x96xf32> to vector<2x8x8xf32>
    %76 = vector.extract_strided_slice %23 {offsets = [0, 0, 56], sizes = [2, 8, 8], strides = [1, 1, 1]} : vector<2x8x96xf32> to vector<2x8x8xf32>
    %77 = vector.extract_strided_slice %23 {offsets = [0, 0, 88], sizes = [2, 8, 8], strides = [1, 1, 1]} : vector<2x8x96xf32> to vector<2x8x8xf32>
    "tpu.trace_start"() <{level = 10 : i32, message = "bqd,bkd->bqk"}> : () -> ()
    %cst_28 = arith.constant dense<0.000000e+00> : vector<2x8x8xf32>
    %78 = tpu.matmul %75, %76, %cst_28 {dimension_numbers = #tpu.dot_dimension_numbers<[2], [2], [1], [1], [0, 0, 0, 1, 1, 1], [0], [0]>} : vector<2x8x8xf32>, vector<2x8x8xf32>, vector<2x8x8xf32> -> vector<2x8x8xf32>
    "tpu.trace_stop"() : () -> ()
    %cst_29 = arith.constant 0.353553385 : f32
    %79 = vector.broadcast %cst_29 : f32 to vector<2x8x8xf32>
    %80 = arith.mulf %78, %79 : vector<2x8x8xf32>
    %cst_30 = arith.constant dense<0xFF800000> : vector<2x8xf32>
    %81 = vector.multi_reduction <maximumf>, %80, %cst_30 [2] : vector<2x8x8xf32> to vector<2x8xf32>
    %82 = vector.shape_cast %81 : vector<2x8xf32> to vector<2x8x1xf32>
    %83 = vector.broadcast %82 : vector<2x8x1xf32> to vector<2x8x8xf32>
    %84 = arith.subf %80, %83 : vector<2x8x8xf32>
    %85 = math.exp %84 : vector<2x8x8xf32>
    %cst_31 = arith.constant dense<0.000000e+00> : vector<2x8xf32>
    %86 = vector.multi_reduction <add>, %85, %cst_31 [2] : vector<2x8x8xf32> to vector<2x8xf32>
    %87 = vector.shape_cast %86 : vector<2x8xf32> to vector<2x8x1xf32>
    %88 = tpu.reciprocal %87 {approx = true} : vector<2x8x1xf32> -> vector<2x8x1xf32>
    %89 = vector.broadcast %88 : vector<2x8x1xf32> to vector<2x8x8xf32>
    %90 = arith.mulf %85, %89 : vector<2x8x8xf32>
    "tpu.trace_start"() <{level = 10 : i32, message = "bqk,bkd->bqd"}> : () -> ()
    %cst_32 = arith.constant dense<0.000000e+00> : vector<2x8x8xf32>
    %91 = tpu.matmul %90, %77, %cst_32 {dimension_numbers = #tpu.dot_dimension_numbers<[2], [1], [1], [2], [0, 0, 0, 1, 1, 2], [0], [0]>} : vector<2x8x8xf32>, vector<2x8x8xf32>, vector<2x8x8xf32> -> vector<2x8x8xf32>
    "tpu.trace_stop"() : () -> ()
    %92 = tpu.concatenate %40, %57, %74, %91 in 2 : vector<2x8x8xf32>, vector<2x8x8xf32>, vector<2x8x8xf32>, vector<2x8x8xf32> -> vector<2x8x32xf32>
    %93 = vector.shape_cast %92 : vector<2x8x32xf32> to vector<16x32xf32>
    %c0_33 = arith.constant 0 : index
    %c0_34 = arith.constant 0 : index
    %c0_35 = arith.constant 0 : index
    %94 = vector.load %arg6[%c0_33, %c0_34, %c0_35] : memref<2x32x32xf32, #tpu.memory_space<vmem>>, vector<1x32x32xf32>
    %95 = vector.shape_cast %94 : vector<1x32x32xf32> to vector<32x32xf32>
    %cst_36 = arith.constant dense<0.000000e+00> : vector<16x32xf32>
    %96 = tpu.matmul %93, %95, %cst_36 {dimension_numbers = #tpu.dot_dimension_numbers<[1], [0], [0], [1], [0, 0, 1, 1], [], []>} : vector<16x32xf32>, vector<32x32xf32>, vector<16x32xf32> -> vector<16x32xf32>
    %c0_37 = arith.constant 0 : index
    %c0_38 = arith.constant 0 : index
    %c0_39 = arith.constant 0 : index
    %97 = vector.load %arg7[%c0_37, %c0_38, %c0_39] : memref<2x1x32xf32, #tpu.memory_space<vmem>>, vector<1x1x32xf32>
    %98 = vector.shape_cast %97 : vector<1x1x32xf32> to vector<1x32xf32>
    %99 = vector.broadcast %98 : vector<1x32xf32> to vector<16x32xf32>
    %100 = arith.addf %96, %99 : vector<16x32xf32>
    %101 = arith.addf %15, %100 : vector<16x32xf32>
    %c0_40 = arith.constant 0 : index
    %c0_41 = arith.constant 0 : index
    %c0_42 = arith.constant 0 : index
    %102 = vector.load %arg8[%c0_40, %c0_41, %c0_42] : memref<2x1x32xf32, #tpu.memory_space<vmem>>, vector<1x1x32xf32>
    %103 = vector.shape_cast %102 : vector<1x1x32xf32> to vector<1x32xf32>
    %c0_43 = arith.constant 0 : index
    %c0_44 = arith.constant 0 : index
    %c0_45 = arith.constant 0 : index
    %104 = vector.load %arg9[%c0_43, %c0_44, %c0_45] : memref<2x1x32xf32, #tpu.memory_space<vmem>>, vector<1x1x32xf32>
    %105 = vector.shape_cast %104 : vector<1x1x32xf32> to vector<1x32xf32>
    %cst_46 = arith.constant dense<0.000000e+00> : vector<16xf32>
    %106 = vector.multi_reduction <add>, %101, %cst_46 [1] : vector<16x32xf32> to vector<16xf32>
    %107 = vector.shape_cast %106 : vector<16xf32> to vector<16x1xf32>
    %cst_47 = arith.constant 3.200000e+01 : f32
    %108 = vector.broadcast %cst_47 : f32 to vector<16x1xf32>
    %109 = arith.divf %107, %108 : vector<16x1xf32>
    %110 = vector.broadcast %109 : vector<16x1xf32> to vector<16x32xf32>
    %111 = arith.subf %101, %110 : vector<16x32xf32>
    %112 = arith.mulf %111, %111 : vector<16x32xf32>
    %cst_48 = arith.constant dense<0.000000e+00> : vector<16xf32>
    %113 = vector.multi_reduction <add>, %112, %cst_48 [1] : vector<16x32xf32> to vector<16xf32>
    %114 = vector.shape_cast %113 : vector<16xf32> to vector<16x1xf32>
    %cst_49 = arith.constant 3.200000e+01 : f32
    %115 = vector.broadcast %cst_49 : f32 to vector<16x1xf32>
    %116 = arith.divf %114, %115 : vector<16x1xf32>
    %117 = vector.broadcast %109 : vector<16x1xf32> to vector<16x32xf32>
    %118 = arith.subf %101, %117 : vector<16x32xf32>
    %cst_50 = arith.constant 9.99999974E-6 : f32
    %119 = vector.broadcast %cst_50 : f32 to vector<16x1xf32>
    %120 = arith.addf %116, %119 : vector<16x1xf32>
    %121 = math.rsqrt %120 : vector<16x1xf32>
    %122 = vector.broadcast %121 : vector<16x1xf32> to vector<16x32xf32>
    %123 = arith.mulf %118, %122 : vector<16x32xf32>
    %124 = vector.broadcast %103 : vector<1x32xf32> to vector<16x32xf32>
    %125 = arith.mulf %123, %124 : vector<16x32xf32>
    %126 = vector.broadcast %105 : vector<1x32xf32> to vector<16x32xf32>
    %127 = arith.addf %125, %126 : vector<16x32xf32>
    %c0_51 = arith.constant 0 : index
    %c0_52 = arith.constant 0 : index
    %c0_53 = arith.constant 0 : index
    %128 = vector.load %arg10[%c0_51, %c0_52, %c0_53] : memref<2x32x128xf32, #tpu.memory_space<vmem>>, vector<1x32x128xf32>
    %129 = vector.shape_cast %128 : vector<1x32x128xf32> to vector<32x128xf32>
    %cst_54 = arith.constant dense<0.000000e+00> : vector<16x128xf32>
    %130 = tpu.matmul %127, %129, %cst_54 {dimension_numbers = #tpu.dot_dimension_numbers<[1], [0], [0], [1], [0, 0, 1, 1], [], []>} : vector<16x32xf32>, vector<32x128xf32>, vector<16x128xf32> -> vector<16x128xf32>
    %c0_55 = arith.constant 0 : index
    %c0_56 = arith.constant 0 : index
    %c0_57 = arith.constant 0 : index
    %131 = vector.load %arg11[%c0_55, %c0_56, %c0_57] : memref<2x1x128xf32, #tpu.memory_space<vmem>>, vector<1x1x128xf32>
    %132 = vector.shape_cast %131 : vector<1x1x128xf32> to vector<1x128xf32>
    %133 = vector.broadcast %132 : vector<1x128xf32> to vector<16x128xf32>
    %134 = arith.addf %130, %133 : vector<16x128xf32>
    %cst_58 = arith.constant 0.000000e+00 : f32
    %135 = vector.broadcast %cst_58 : f32 to vector<16x128xf32>
    %136 = arith.maximumf %134, %135 : vector<16x128xf32>
    %c0_59 = arith.constant 0 : index
    %c0_60 = arith.constant 0 : index
    %c0_61 = arith.constant 0 : index
    %137 = vector.load %arg12[%c0_59, %c0_60, %c0_61] : memref<2x128x32xf32, #tpu.memory_space<vmem>>, vector<1x128x32xf32>
    %138 = vector.shape_cast %137 : vector<1x128x32xf32> to vector<128x32xf32>
    %cst_62 = arith.constant dense<0.000000e+00> : vector<16x32xf32>
    %139 = tpu.matmul %136, %138, %cst_62 {dimension_numbers = #tpu.dot_dimension_numbers<[1], [0], [0], [1], [0, 0, 1, 1], [], []>} : vector<16x128xf32>, vector<128x32xf32>, vector<16x32xf32> -> vector<16x32xf32>
    %c0_63 = arith.constant 0 : index
    %c0_64 = arith.constant 0 : index
    %c0_65 = arith.constant 0 : index
    %140 = vector.load %arg13[%c0_63, %c0_64, %c0_65] : memref<2x1x32xf32, #tpu.memory_space<vmem>>, vector<1x1x32xf32>
    %141 = vector.shape_cast %140 : vector<1x1x32xf32> to vector<1x32xf32>
    %142 = vector.broadcast %141 : vector<1x32xf32> to vector<16x32xf32>
    %143 = arith.addf %139, %142 : vector<16x32xf32>
    %144 = arith.addf %127, %143 : vector<16x32xf32>
    %c0_66 = arith.constant 0 : index
    %c0_67 = arith.constant 0 : index
    %c0_68 = arith.constant 0 : index
    %145 = vector.load %arg14[%c0_66, %c0_67, %c0_68] : memref<2x1x32xf32, #tpu.memory_space<vmem>>, vector<1x1x32xf32>
    %146 = vector.shape_cast %145 : vector<1x1x32xf32> to vector<1x32xf32>
    %c0_69 = arith.constant 0 : index
    %c0_70 = arith.constant 0 : index
    %c0_71 = arith.constant 0 : index
    %147 = vector.load %arg15[%c0_69, %c0_70, %c0_71] : memref<2x1x32xf32, #tpu.memory_space<vmem>>, vector<1x1x32xf32>
    %148 = vector.shape_cast %147 : vector<1x1x32xf32> to vector<1x32xf32>
    %cst_72 = arith.constant dense<0.000000e+00> : vector<16xf32>
    %149 = vector.multi_reduction <add>, %144, %cst_72 [1] : vector<16x32xf32> to vector<16xf32>
    %150 = vector.shape_cast %149 : vector<16xf32> to vector<16x1xf32>
    %cst_73 = arith.constant 3.200000e+01 : f32
    %151 = vector.broadcast %cst_73 : f32 to vector<16x1xf32>
    %152 = arith.divf %150, %151 : vector<16x1xf32>
    %153 = vector.broadcast %152 : vector<16x1xf32> to vector<16x32xf32>
    %154 = arith.subf %144, %153 : vector<16x32xf32>
    %155 = arith.mulf %154, %154 : vector<16x32xf32>
    %cst_74 = arith.constant dense<0.000000e+00> : vector<16xf32>
    %156 = vector.multi_reduction <add>, %155, %cst_74 [1] : vector<16x32xf32> to vector<16xf32>
    %157 = vector.shape_cast %156 : vector<16xf32> to vector<16x1xf32>
    %cst_75 = arith.constant 3.200000e+01 : f32
    %158 = vector.broadcast %cst_75 : f32 to vector<16x1xf32>
    %159 = arith.divf %157, %158 : vector<16x1xf32>
    %160 = vector.broadcast %152 : vector<16x1xf32> to vector<16x32xf32>
    %161 = arith.subf %144, %160 : vector<16x32xf32>
    %cst_76 = arith.constant 9.99999974E-6 : f32
    %162 = vector.broadcast %cst_76 : f32 to vector<16x1xf32>
    %163 = arith.addf %159, %162 : vector<16x1xf32>
    %164 = math.rsqrt %163 : vector<16x1xf32>
    %165 = vector.broadcast %164 : vector<16x1xf32> to vector<16x32xf32>
    %166 = arith.mulf %161, %165 : vector<16x32xf32>
    %167 = vector.broadcast %146 : vector<1x32xf32> to vector<16x32xf32>
    %168 = arith.mulf %166, %167 : vector<16x32xf32>
    %169 = vector.broadcast %148 : vector<1x32xf32> to vector<16x32xf32>
    %170 = arith.addf %168, %169 : vector<16x32xf32>
    %c1 = arith.constant 1 : index
    %c0_77 = arith.constant 0 : index
    %c0_78 = arith.constant 0 : index
    %171 = vector.load %arg4[%c1, %c0_77, %c0_78] : memref<2x32x96xf32, #tpu.memory_space<vmem>>, vector<1x32x96xf32>
    %172 = vector.shape_cast %171 : vector<1x32x96xf32> to vector<32x96xf32>
    %cst_79 = arith.constant dense<0.000000e+00> : vector<16x96xf32>
    %173 = tpu.matmul %170, %172, %cst_79 {dimension_numbers = #tpu.dot_dimension_numbers<[1], [0], [0], [1], [0, 0, 1, 1], [], []>} : vector<16x32xf32>, vector<32x96xf32>, vector<16x96xf32> -> vector<16x96xf32>
    %c1_80 = arith.constant 1 : index
    %c0_81 = arith.constant 0 : index
    %c0_82 = arith.constant 0 : index
    %174 = vector.load %arg5[%c1_80, %c0_81, %c0_82] : memref<2x1x96xf32, #tpu.memory_space<vmem>>, vector<1x1x96xf32>
    %175 = vector.shape_cast %174 : vector<1x1x96xf32> to vector<1x96xf32>
    %176 = vector.broadcast %175 : vector<1x96xf32> to vector<16x96xf32>
    %177 = arith.addf %173, %176 : vector<16x96xf32>
    %178 = vector.shape_cast %177 : vector<16x96xf32> to vector<2x8x96xf32>
    %179 = vector.extract_strided_slice %178 {offsets = [0, 0, 0], sizes = [2, 8, 8], strides = [1, 1, 1]} : vector<2x8x96xf32> to vector<2x8x8xf32>
    %180 = vector.extract_strided_slice %178 {offsets = [0, 0, 32], sizes = [2, 8, 8], strides = [1, 1, 1]} : vector<2x8x96xf32> to vector<2x8x8xf32>
    %181 = vector.extract_strided_slice %178 {offsets = [0, 0, 64], sizes = [2, 8, 8], strides = [1, 1, 1]} : vector<2x8x96xf32> to vector<2x8x8xf32>
    "tpu.trace_start"() <{level = 10 : i32, message = "bqd,bkd->bqk"}> : () -> ()
    %cst_83 = arith.constant dense<0.000000e+00> : vector<2x8x8xf32>
    %182 = tpu.matmul %179, %180, %cst_83 {dimension_numbers = #tpu.dot_dimension_numbers<[2], [2], [1], [1], [0, 0, 0, 1, 1, 1], [0], [0]>} : vector<2x8x8xf32>, vector<2x8x8xf32>, vector<2x8x8xf32> -> vector<2x8x8xf32>
    "tpu.trace_stop"() : () -> ()
    %cst_84 = arith.constant 0.353553385 : f32
    %183 = vector.broadcast %cst_84 : f32 to vector<2x8x8xf32>
    %184 = arith.mulf %182, %183 : vector<2x8x8xf32>
    %cst_85 = arith.constant dense<0xFF800000> : vector<2x8xf32>
    %185 = vector.multi_reduction <maximumf>, %184, %cst_85 [2] : vector<2x8x8xf32> to vector<2x8xf32>
    %186 = vector.shape_cast %185 : vector<2x8xf32> to vector<2x8x1xf32>
    %187 = vector.broadcast %186 : vector<2x8x1xf32> to vector<2x8x8xf32>
    %188 = arith.subf %184, %187 : vector<2x8x8xf32>
    %189 = math.exp %188 : vector<2x8x8xf32>
    %cst_86 = arith.constant dense<0.000000e+00> : vector<2x8xf32>
    %190 = vector.multi_reduction <add>, %189, %cst_86 [2] : vector<2x8x8xf32> to vector<2x8xf32>
    %191 = vector.shape_cast %190 : vector<2x8xf32> to vector<2x8x1xf32>
    %192 = tpu.reciprocal %191 {approx = true} : vector<2x8x1xf32> -> vector<2x8x1xf32>
    %193 = vector.broadcast %192 : vector<2x8x1xf32> to vector<2x8x8xf32>
    %194 = arith.mulf %189, %193 : vector<2x8x8xf32>
    "tpu.trace_start"() <{level = 10 : i32, message = "bqk,bkd->bqd"}> : () -> ()
    %cst_87 = arith.constant dense<0.000000e+00> : vector<2x8x8xf32>
    %195 = tpu.matmul %194, %181, %cst_87 {dimension_numbers = #tpu.dot_dimension_numbers<[2], [1], [1], [2], [0, 0, 0, 1, 1, 2], [0], [0]>} : vector<2x8x8xf32>, vector<2x8x8xf32>, vector<2x8x8xf32> -> vector<2x8x8xf32>
    "tpu.trace_stop"() : () -> ()
    %196 = vector.extract_strided_slice %178 {offsets = [0, 0, 8], sizes = [2, 8, 8], strides = [1, 1, 1]} : vector<2x8x96xf32> to vector<2x8x8xf32>
    %197 = vector.extract_strided_slice %178 {offsets = [0, 0, 40], sizes = [2, 8, 8], strides = [1, 1, 1]} : vector<2x8x96xf32> to vector<2x8x8xf32>
    %198 = vector.extract_strided_slice %178 {offsets = [0, 0, 72], sizes = [2, 8, 8], strides = [1, 1, 1]} : vector<2x8x96xf32> to vector<2x8x8xf32>
    "tpu.trace_start"() <{level = 10 : i32, message = "bqd,bkd->bqk"}> : () -> ()
    %cst_88 = arith.constant dense<0.000000e+00> : vector<2x8x8xf32>
    %199 = tpu.matmul %196, %197, %cst_88 {dimension_numbers = #tpu.dot_dimension_numbers<[2], [2], [1], [1], [0, 0, 0, 1, 1, 1], [0], [0]>} : vector<2x8x8xf32>, vector<2x8x8xf32>, vector<2x8x8xf32> -> vector<2x8x8xf32>
    "tpu.trace_stop"() : () -> ()
    %cst_89 = arith.constant 0.353553385 : f32
    %200 = vector.broadcast %cst_89 : f32 to vector<2x8x8xf32>
    %201 = arith.mulf %199, %200 : vector<2x8x8xf32>
    %cst_90 = arith.constant dense<0xFF800000> : vector<2x8xf32>
    %202 = vector.multi_reduction <maximumf>, %201, %cst_90 [2] : vector<2x8x8xf32> to vector<2x8xf32>
    %203 = vector.shape_cast %202 : vector<2x8xf32> to vector<2x8x1xf32>
    %204 = vector.broadcast %203 : vector<2x8x1xf32> to vector<2x8x8xf32>
    %205 = arith.subf %201, %204 : vector<2x8x8xf32>
    %206 = math.exp %205 : vector<2x8x8xf32>
    %cst_91 = arith.constant dense<0.000000e+00> : vector<2x8xf32>
    %207 = vector.multi_reduction <add>, %206, %cst_91 [2] : vector<2x8x8xf32> to vector<2x8xf32>
    %208 = vector.shape_cast %207 : vector<2x8xf32> to vector<2x8x1xf32>
    %209 = tpu.reciprocal %208 {approx = true} : vector<2x8x1xf32> -> vector<2x8x1xf32>
    %210 = vector.broadcast %209 : vector<2x8x1xf32> to vector<2x8x8xf32>
    %211 = arith.mulf %206, %210 : vector<2x8x8xf32>
    "tpu.trace_start"() <{level = 10 : i32, message = "bqk,bkd->bqd"}> : () -> ()
    %cst_92 = arith.constant dense<0.000000e+00> : vector<2x8x8xf32>
    %212 = tpu.matmul %211, %198, %cst_92 {dimension_numbers = #tpu.dot_dimension_numbers<[2], [1], [1], [2], [0, 0, 0, 1, 1, 2], [0], [0]>} : vector<2x8x8xf32>, vector<2x8x8xf32>, vector<2x8x8xf32> -> vector<2x8x8xf32>
    "tpu.trace_stop"() : () -> ()
    %213 = vector.extract_strided_slice %178 {offsets = [0, 0, 16], sizes = [2, 8, 8], strides = [1, 1, 1]} : vector<2x8x96xf32> to vector<2x8x8xf32>
    %214 = vector.extract_strided_slice %178 {offsets = [0, 0, 48], sizes = [2, 8, 8], strides = [1, 1, 1]} : vector<2x8x96xf32> to vector<2x8x8xf32>
    %215 = vector.extract_strided_slice %178 {offsets = [0, 0, 80], sizes = [2, 8, 8], strides = [1, 1, 1]} : vector<2x8x96xf32> to vector<2x8x8xf32>
    "tpu.trace_start"() <{level = 10 : i32, message = "bqd,bkd->bqk"}> : () -> ()
    %cst_93 = arith.constant dense<0.000000e+00> : vector<2x8x8xf32>
    %216 = tpu.matmul %213, %214, %cst_93 {dimension_numbers = #tpu.dot_dimension_numbers<[2], [2], [1], [1], [0, 0, 0, 1, 1, 1], [0], [0]>} : vector<2x8x8xf32>, vector<2x8x8xf32>, vector<2x8x8xf32> -> vector<2x8x8xf32>
    "tpu.trace_stop"() : () -> ()
    %cst_94 = arith.constant 0.353553385 : f32
    %217 = vector.broadcast %cst_94 : f32 to vector<2x8x8xf32>
    %218 = arith.mulf %216, %217 : vector<2x8x8xf32>
    %cst_95 = arith.constant dense<0xFF800000> : vector<2x8xf32>
    %219 = vector.multi_reduction <maximumf>, %218, %cst_95 [2] : vector<2x8x8xf32> to vector<2x8xf32>
    %220 = vector.shape_cast %219 : vector<2x8xf32> to vector<2x8x1xf32>
    %221 = vector.broadcast %220 : vector<2x8x1xf32> to vector<2x8x8xf32>
    %222 = arith.subf %218, %221 : vector<2x8x8xf32>
    %223 = math.exp %222 : vector<2x8x8xf32>
    %cst_96 = arith.constant dense<0.000000e+00> : vector<2x8xf32>
    %224 = vector.multi_reduction <add>, %223, %cst_96 [2] : vector<2x8x8xf32> to vector<2x8xf32>
    %225 = vector.shape_cast %224 : vector<2x8xf32> to vector<2x8x1xf32>
    %226 = tpu.reciprocal %225 {approx = true} : vector<2x8x1xf32> -> vector<2x8x1xf32>
    %227 = vector.broadcast %226 : vector<2x8x1xf32> to vector<2x8x8xf32>
    %228 = arith.mulf %223, %227 : vector<2x8x8xf32>
    "tpu.trace_start"() <{level = 10 : i32, message = "bqk,bkd->bqd"}> : () -> ()
    %cst_97 = arith.constant dense<0.000000e+00> : vector<2x8x8xf32>
    %229 = tpu.matmul %228, %215, %cst_97 {dimension_numbers = #tpu.dot_dimension_numbers<[2], [1], [1], [2], [0, 0, 0, 1, 1, 2], [0], [0]>} : vector<2x8x8xf32>, vector<2x8x8xf32>, vector<2x8x8xf32> -> vector<2x8x8xf32>
    "tpu.trace_stop"() : () -> ()
    %230 = vector.extract_strided_slice %178 {offsets = [0, 0, 24], sizes = [2, 8, 8], strides = [1, 1, 1]} : vector<2x8x96xf32> to vector<2x8x8xf32>
    %231 = vector.extract_strided_slice %178 {offsets = [0, 0, 56], sizes = [2, 8, 8], strides = [1, 1, 1]} : vector<2x8x96xf32> to vector<2x8x8xf32>
    %232 = vector.extract_strided_slice %178 {offsets = [0, 0, 88], sizes = [2, 8, 8], strides = [1, 1, 1]} : vector<2x8x96xf32> to vector<2x8x8xf32>
    "tpu.trace_start"() <{level = 10 : i32, message = "bqd,bkd->bqk"}> : () -> ()
    %cst_98 = arith.constant dense<0.000000e+00> : vector<2x8x8xf32>
    %233 = tpu.matmul %230, %231, %cst_98 {dimension_numbers = #tpu.dot_dimension_numbers<[2], [2], [1], [1], [0, 0, 0, 1, 1, 1], [0], [0]>} : vector<2x8x8xf32>, vector<2x8x8xf32>, vector<2x8x8xf32> -> vector<2x8x8xf32>
    "tpu.trace_stop"() : () -> ()
    %cst_99 = arith.constant 0.353553385 : f32
    %234 = vector.broadcast %cst_99 : f32 to vector<2x8x8xf32>
    %235 = arith.mulf %233, %234 : vector<2x8x8xf32>
    %cst_100 = arith.constant dense<0xFF800000> : vector<2x8xf32>
    %236 = vector.multi_reduction <maximumf>, %235, %cst_100 [2] : vector<2x8x8xf32> to vector<2x8xf32>
    %237 = vector.shape_cast %236 : vector<2x8xf32> to vector<2x8x1xf32>
    %238 = vector.broadcast %237 : vector<2x8x1xf32> to vector<2x8x8xf32>
    %239 = arith.subf %235, %238 : vector<2x8x8xf32>
    %240 = math.exp %239 : vector<2x8x8xf32>
    %cst_101 = arith.constant dense<0.000000e+00> : vector<2x8xf32>
    %241 = vector.multi_reduction <add>, %240, %cst_101 [2] : vector<2x8x8xf32> to vector<2x8xf32>
    %242 = vector.shape_cast %241 : vector<2x8xf32> to vector<2x8x1xf32>
    %243 = tpu.reciprocal %242 {approx = true} : vector<2x8x1xf32> -> vector<2x8x1xf32>
    %244 = vector.broadcast %243 : vector<2x8x1xf32> to vector<2x8x8xf32>
    %245 = arith.mulf %240, %244 : vector<2x8x8xf32>
    "tpu.trace_start"() <{level = 10 : i32, message = "bqk,bkd->bqd"}> : () -> ()
    %cst_102 = arith.constant dense<0.000000e+00> : vector<2x8x8xf32>
    %246 = tpu.matmul %245, %232, %cst_102 {dimension_numbers = #tpu.dot_dimension_numbers<[2], [1], [1], [2], [0, 0, 0, 1, 1, 2], [0], [0]>} : vector<2x8x8xf32>, vector<2x8x8xf32>, vector<2x8x8xf32> -> vector<2x8x8xf32>
    "tpu.trace_stop"() : () -> ()
    %247 = tpu.concatenate %195, %212, %229, %246 in 2 : vector<2x8x8xf32>, vector<2x8x8xf32>, vector<2x8x8xf32>, vector<2x8x8xf32> -> vector<2x8x32xf32>
    %248 = vector.shape_cast %247 : vector<2x8x32xf32> to vector<16x32xf32>
    %c1_103 = arith.constant 1 : index
    %c0_104 = arith.constant 0 : index
    %c0_105 = arith.constant 0 : index
    %249 = vector.load %arg6[%c1_103, %c0_104, %c0_105] : memref<2x32x32xf32, #tpu.memory_space<vmem>>, vector<1x32x32xf32>
    %250 = vector.shape_cast %249 : vector<1x32x32xf32> to vector<32x32xf32>
    %cst_106 = arith.constant dense<0.000000e+00> : vector<16x32xf32>
    %251 = tpu.matmul %248, %250, %cst_106 {dimension_numbers = #tpu.dot_dimension_numbers<[1], [0], [0], [1], [0, 0, 1, 1], [], []>} : vector<16x32xf32>, vector<32x32xf32>, vector<16x32xf32> -> vector<16x32xf32>
    %c1_107 = arith.constant 1 : index
    %c0_108 = arith.constant 0 : index
    %c0_109 = arith.constant 0 : index
    %252 = vector.load %arg7[%c1_107, %c0_108, %c0_109] : memref<2x1x32xf32, #tpu.memory_space<vmem>>, vector<1x1x32xf32>
    %253 = vector.shape_cast %252 : vector<1x1x32xf32> to vector<1x32xf32>
    %254 = vector.broadcast %253 : vector<1x32xf32> to vector<16x32xf32>
    %255 = arith.addf %251, %254 : vector<16x32xf32>
    %256 = arith.addf %170, %255 : vector<16x32xf32>
    %c1_110 = arith.constant 1 : index
    %c0_111 = arith.constant 0 : index
    %c0_112 = arith.constant 0 : index
    %257 = vector.load %arg8[%c1_110, %c0_111, %c0_112] : memref<2x1x32xf32, #tpu.memory_space<vmem>>, vector<1x1x32xf32>
    %258 = vector.shape_cast %257 : vector<1x1x32xf32> to vector<1x32xf32>
    %c1_113 = arith.constant 1 : index
    %c0_114 = arith.constant 0 : index
    %c0_115 = arith.constant 0 : index
    %259 = vector.load %arg9[%c1_113, %c0_114, %c0_115] : memref<2x1x32xf32, #tpu.memory_space<vmem>>, vector<1x1x32xf32>
    %260 = vector.shape_cast %259 : vector<1x1x32xf32> to vector<1x32xf32>
    %cst_116 = arith.constant dense<0.000000e+00> : vector<16xf32>
    %261 = vector.multi_reduction <add>, %256, %cst_116 [1] : vector<16x32xf32> to vector<16xf32>
    %262 = vector.shape_cast %261 : vector<16xf32> to vector<16x1xf32>
    %cst_117 = arith.constant 3.200000e+01 : f32
    %263 = vector.broadcast %cst_117 : f32 to vector<16x1xf32>
    %264 = arith.divf %262, %263 : vector<16x1xf32>
    %265 = vector.broadcast %264 : vector<16x1xf32> to vector<16x32xf32>
    %266 = arith.subf %256, %265 : vector<16x32xf32>
    %267 = arith.mulf %266, %266 : vector<16x32xf32>
    %cst_118 = arith.constant dense<0.000000e+00> : vector<16xf32>
    %268 = vector.multi_reduction <add>, %267, %cst_118 [1] : vector<16x32xf32> to vector<16xf32>
    %269 = vector.shape_cast %268 : vector<16xf32> to vector<16x1xf32>
    %cst_119 = arith.constant 3.200000e+01 : f32
    %270 = vector.broadcast %cst_119 : f32 to vector<16x1xf32>
    %271 = arith.divf %269, %270 : vector<16x1xf32>
    %272 = vector.broadcast %264 : vector<16x1xf32> to vector<16x32xf32>
    %273 = arith.subf %256, %272 : vector<16x32xf32>
    %cst_120 = arith.constant 9.99999974E-6 : f32
    %274 = vector.broadcast %cst_120 : f32 to vector<16x1xf32>
    %275 = arith.addf %271, %274 : vector<16x1xf32>
    %276 = math.rsqrt %275 : vector<16x1xf32>
    %277 = vector.broadcast %276 : vector<16x1xf32> to vector<16x32xf32>
    %278 = arith.mulf %273, %277 : vector<16x32xf32>
    %279 = vector.broadcast %258 : vector<1x32xf32> to vector<16x32xf32>
    %280 = arith.mulf %278, %279 : vector<16x32xf32>
    %281 = vector.broadcast %260 : vector<1x32xf32> to vector<16x32xf32>
    %282 = arith.addf %280, %281 : vector<16x32xf32>
    %c1_121 = arith.constant 1 : index
    %c0_122 = arith.constant 0 : index
    %c0_123 = arith.constant 0 : index
    %283 = vector.load %arg10[%c1_121, %c0_122, %c0_123] : memref<2x32x128xf32, #tpu.memory_space<vmem>>, vector<1x32x128xf32>
    %284 = vector.shape_cast %283 : vector<1x32x128xf32> to vector<32x128xf32>
    %cst_124 = arith.constant dense<0.000000e+00> : vector<16x128xf32>
    %285 = tpu.matmul %282, %284, %cst_124 {dimension_numbers = #tpu.dot_dimension_numbers<[1], [0], [0], [1], [0, 0, 1, 1], [], []>} : vector<16x32xf32>, vector<32x128xf32>, vector<16x128xf32> -> vector<16x128xf32>
    %c1_125 = arith.constant 1 : index
    %c0_126 = arith.constant 0 : index
    %c0_127 = arith.constant 0 : index
    %286 = vector.load %arg11[%c1_125, %c0_126, %c0_127] : memref<2x1x128xf32, #tpu.memory_space<vmem>>, vector<1x1x128xf32>
    %287 = vector.shape_cast %286 : vector<1x1x128xf32> to vector<1x128xf32>
    %288 = vector.broadcast %287 : vector<1x128xf32> to vector<16x128xf32>
    %289 = arith.addf %285, %288 : vector<16x128xf32>
    %cst_128 = arith.constant 0.000000e+00 : f32
    %290 = vector.broadcast %cst_128 : f32 to vector<16x128xf32>
    %291 = arith.maximumf %289, %290 : vector<16x128xf32>
    %c1_129 = arith.constant 1 : index
    %c0_130 = arith.constant 0 : index
    %c0_131 = arith.constant 0 : index
    %292 = vector.load %arg12[%c1_129, %c0_130, %c0_131] : memref<2x128x32xf32, #tpu.memory_space<vmem>>, vector<1x128x32xf32>
    %293 = vector.shape_cast %292 : vector<1x128x32xf32> to vector<128x32xf32>
    %cst_132 = arith.constant dense<0.000000e+00> : vector<16x32xf32>
    %294 = tpu.matmul %291, %293, %cst_132 {dimension_numbers = #tpu.dot_dimension_numbers<[1], [0], [0], [1], [0, 0, 1, 1], [], []>} : vector<16x128xf32>, vector<128x32xf32>, vector<16x32xf32> -> vector<16x32xf32>
    %c1_133 = arith.constant 1 : index
    %c0_134 = arith.constant 0 : index
    %c0_135 = arith.constant 0 : index
    %295 = vector.load %arg13[%c1_133, %c0_134, %c0_135] : memref<2x1x32xf32, #tpu.memory_space<vmem>>, vector<1x1x32xf32>
    %296 = vector.shape_cast %295 : vector<1x1x32xf32> to vector<1x32xf32>
    %297 = vector.broadcast %296 : vector<1x32xf32> to vector<16x32xf32>
    %298 = arith.addf %294, %297 : vector<16x32xf32>
    %299 = arith.addf %282, %298 : vector<16x32xf32>
    %c1_136 = arith.constant 1 : index
    %c0_137 = arith.constant 0 : index
    %c0_138 = arith.constant 0 : index
    %300 = vector.load %arg14[%c1_136, %c0_137, %c0_138] : memref<2x1x32xf32, #tpu.memory_space<vmem>>, vector<1x1x32xf32>
    %301 = vector.shape_cast %300 : vector<1x1x32xf32> to vector<1x32xf32>
    %c1_139 = arith.constant 1 : index
    %c0_140 = arith.constant 0 : index
    %c0_141 = arith.constant 0 : index
    %302 = vector.load %arg15[%c1_139, %c0_140, %c0_141] : memref<2x1x32xf32, #tpu.memory_space<vmem>>, vector<1x1x32xf32>
    %303 = vector.shape_cast %302 : vector<1x1x32xf32> to vector<1x32xf32>
    %cst_142 = arith.constant dense<0.000000e+00> : vector<16xf32>
    %304 = vector.multi_reduction <add>, %299, %cst_142 [1] : vector<16x32xf32> to vector<16xf32>
    %305 = vector.shape_cast %304 : vector<16xf32> to vector<16x1xf32>
    %cst_143 = arith.constant 3.200000e+01 : f32
    %306 = vector.broadcast %cst_143 : f32 to vector<16x1xf32>
    %307 = arith.divf %305, %306 : vector<16x1xf32>
    %308 = vector.broadcast %307 : vector<16x1xf32> to vector<16x32xf32>
    %309 = arith.subf %299, %308 : vector<16x32xf32>
    %310 = arith.mulf %309, %309 : vector<16x32xf32>
    %cst_144 = arith.constant dense<0.000000e+00> : vector<16xf32>
    %311 = vector.multi_reduction <add>, %310, %cst_144 [1] : vector<16x32xf32> to vector<16xf32>
    %312 = vector.shape_cast %311 : vector<16xf32> to vector<16x1xf32>
    %cst_145 = arith.constant 3.200000e+01 : f32
    %313 = vector.broadcast %cst_145 : f32 to vector<16x1xf32>
    %314 = arith.divf %312, %313 : vector<16x1xf32>
    %315 = vector.broadcast %307 : vector<16x1xf32> to vector<16x32xf32>
    %316 = arith.subf %299, %315 : vector<16x32xf32>
    %cst_146 = arith.constant 9.99999974E-6 : f32
    %317 = vector.broadcast %cst_146 : f32 to vector<16x1xf32>
    %318 = arith.addf %314, %317 : vector<16x1xf32>
    %319 = math.rsqrt %318 : vector<16x1xf32>
    %320 = vector.broadcast %319 : vector<16x1xf32> to vector<16x32xf32>
    %321 = arith.mulf %316, %320 : vector<16x32xf32>
    %322 = vector.broadcast %301 : vector<1x32xf32> to vector<16x32xf32>
    %323 = arith.mulf %321, %322 : vector<16x32xf32>
    %324 = vector.broadcast %303 : vector<1x32xf32> to vector<16x32xf32>
    %325 = arith.addf %323, %324 : vector<16x32xf32>
    %c0_147 = arith.constant 0 : index
    %c0_148 = arith.constant 0 : index
    %326 = vector.load %arg16[%c0_147, %c0_148] : memref<1x32xf32, #tpu.memory_space<vmem>>, vector<1x32xf32>
    %c0_149 = arith.constant 0 : index
    %c0_150 = arith.constant 0 : index
    %327 = vector.load %arg17[%c0_149, %c0_150] : memref<1x32xf32, #tpu.memory_space<vmem>>, vector<1x32xf32>
    %cst_151 = arith.constant dense<0.000000e+00> : vector<16xf32>
    %328 = vector.multi_reduction <add>, %325, %cst_151 [1] : vector<16x32xf32> to vector<16xf32>
    %329 = vector.shape_cast %328 : vector<16xf32> to vector<16x1xf32>
    %cst_152 = arith.constant 3.200000e+01 : f32
    %330 = vector.broadcast %cst_152 : f32 to vector<16x1xf32>
    %331 = arith.divf %329, %330 : vector<16x1xf32>
    %332 = vector.broadcast %331 : vector<16x1xf32> to vector<16x32xf32>
    %333 = arith.subf %325, %332 : vector<16x32xf32>
    %334 = arith.mulf %333, %333 : vector<16x32xf32>
    %cst_153 = arith.constant dense<0.000000e+00> : vector<16xf32>
    %335 = vector.multi_reduction <add>, %334, %cst_153 [1] : vector<16x32xf32> to vector<16xf32>
    %336 = vector.shape_cast %335 : vector<16xf32> to vector<16x1xf32>
    %cst_154 = arith.constant 3.200000e+01 : f32
    %337 = vector.broadcast %cst_154 : f32 to vector<16x1xf32>
    %338 = arith.divf %336, %337 : vector<16x1xf32>
    %339 = vector.broadcast %331 : vector<16x1xf32> to vector<16x32xf32>
    %340 = arith.subf %325, %339 : vector<16x32xf32>
    %cst_155 = arith.constant 9.99999974E-6 : f32
    %341 = vector.broadcast %cst_155 : f32 to vector<16x1xf32>
    %342 = arith.addf %338, %341 : vector<16x1xf32>
    %343 = math.rsqrt %342 : vector<16x1xf32>
    %344 = vector.broadcast %343 : vector<16x1xf32> to vector<16x32xf32>
    %345 = arith.mulf %340, %344 : vector<16x32xf32>
    %346 = vector.broadcast %326 : vector<1x32xf32> to vector<16x32xf32>
    %347 = arith.mulf %345, %346 : vector<16x32xf32>
    %348 = vector.broadcast %327 : vector<1x32xf32> to vector<16x32xf32>
    %349 = arith.addf %347, %348 : vector<16x32xf32>
    %350 = vector.shape_cast %349 : vector<16x32xf32> to vector<2x8x32xf32>
    %cst_156 = arith.constant dense<0.000000e+00> : vector<2x32xf32>
    %351 = vector.multi_reduction <add>, %350, %cst_156 [1] : vector<2x8x32xf32> to vector<2x32xf32>
    %cst_157 = arith.constant 8.000000e+00 : f32
    %352 = vector.broadcast %cst_157 : f32 to vector<2x32xf32>
    %353 = arith.divf %351, %352 : vector<2x32xf32>
    %c0_158 = arith.constant 0 : index
    %c0_159 = arith.constant 0 : index
    %354 = vector.load %arg18[%c0_158, %c0_159] : memref<32x16xf32, #tpu.memory_space<vmem>>, vector<32x16xf32>
    %cst_160 = arith.constant dense<0.000000e+00> : vector<2x16xf32>
    %355 = tpu.matmul %353, %354, %cst_160 {dimension_numbers = #tpu.dot_dimension_numbers<[1], [0], [0], [1], [0, 0, 1, 1], [], []>} : vector<2x32xf32>, vector<32x16xf32>, vector<2x16xf32> -> vector<2x16xf32>
    %c0_161 = arith.constant 0 : index
    %c0_162 = arith.constant 0 : index
    %356 = vector.load %arg19[%c0_161, %c0_162] : memref<1x16xf32, #tpu.memory_space<vmem>>, vector<1x16xf32>
    %357 = vector.broadcast %356 : vector<1x16xf32> to vector<2x16xf32>
    %358 = arith.addf %355, %357 : vector<2x16xf32>
    %cst_163 = arith.constant 0.000000e+00 : f32
    %359 = vector.broadcast %cst_163 : f32 to vector<2x16xf32>
    %360 = arith.maximumf %358, %359 : vector<2x16xf32>
    %c0_164 = arith.constant 0 : index
    %c0_165 = arith.constant 0 : index
    %361 = vector.load %arg20[%c0_164, %c0_165] : memref<16x128xf32, #tpu.memory_space<vmem>>, vector<16x128xf32>
    %cst_166 = arith.constant dense<0.000000e+00> : vector<2x128xf32>
    %362 = tpu.matmul %360, %361, %cst_166 {dimension_numbers = #tpu.dot_dimension_numbers<[1], [0], [0], [1], [0, 0, 1, 1], [], []>} : vector<2x16xf32>, vector<16x128xf32>, vector<2x128xf32> -> vector<2x128xf32>
    %c0_167 = arith.constant 0 : index
    %c0_168 = arith.constant 0 : index
    %363 = vector.load %arg21[%c0_167, %c0_168] : memref<1x128xf32, #tpu.memory_space<vmem>>, vector<1x128xf32>
    %364 = vector.broadcast %363 : vector<1x128xf32> to vector<2x128xf32>
    %365 = arith.addf %362, %364 : vector<2x128xf32>
    %c0_169 = arith.constant 0 : index
    %c0_170 = arith.constant 0 : index
    %366 = vector.load %arg22[%c0_169, %c0_170] : memref<2x128xf32, #tpu.memory_space<vmem>>, vector<2x128xf32>
    tpu.vector_store %arg22[%c0_169, %c0_170], %365 {strides = array<i32>} : memref<2x128xf32, #tpu.memory_space<vmem>>, vector<2x128xf32>,
    return
  }
  func.func @transform_0(%arg0: i32) -> (i32, i32) {
    %c0_i32 = arith.constant 0 : i32
    %c0_i32_0 = arith.constant 0 : i32
    %c0_i32_1 = arith.constant 0 : i32
    return %c0_i32, %c0_i32_0 : i32, i32
  }
  func.func @transform_1(%arg0: i32) -> (i32, i32) {
    %c0_i32 = arith.constant 0 : i32
    %c0_i32_0 = arith.constant 0 : i32
    %c0_i32_1 = arith.constant 0 : i32
    return %c0_i32, %c0_i32_0 : i32, i32
  }
  func.func @transform_2(%arg0: i32) -> (i32, i32) {
    %c0_i32 = arith.constant 0 : i32
    %c0_i32_0 = arith.constant 0 : i32
    %c0_i32_1 = arith.constant 0 : i32
    return %c0_i32, %c0_i32_0 : i32, i32
  }
  func.func @transform_3(%arg0: i32) -> (i32, i32, i32) {
    %c0_i32 = arith.constant 0 : i32
    %c0_i32_0 = arith.constant 0 : i32
    %c0_i32_1 = arith.constant 0 : i32
    %c0_i32_2 = arith.constant 0 : i32
    return %c0_i32, %c0_i32_0, %c0_i32_1 : i32, i32, i32
  }
  func.func @transform_4(%arg0: i32) -> (i32, i32, i32) {
    %c0_i32 = arith.constant 0 : i32
    %c0_i32_0 = arith.constant 0 : i32
    %c0_i32_1 = arith.constant 0 : i32
    %c0_i32_2 = arith.constant 0 : i32
    return %c0_i32, %c0_i32_0, %c0_i32_1 : i32, i32, i32
  }
  func.func @transform_5(%arg0: i32) -> (i32, i32, i32) {
    %c0_i32 = arith.constant 0 : i32
    %c0_i32_0 = arith.constant 0 : i32
    %c0_i32_1 = arith.constant 0 : i32
    %c0_i32_2 = arith.constant 0 : i32
    return %c0_i32, %c0_i32_0, %c0_i32_1 : i32, i32, i32
  }
  func.func @transform_6(%arg0: i32) -> (i32, i32, i32) {
    %c0_i32 = arith.constant 0 : i32
    %c0_i32_0 = arith.constant 0 : i32
    %c0_i32_1 = arith.constant 0 : i32
    %c0_i32_2 = arith.constant 0 : i32
    return %c0_i32, %c0_i32_0, %c0_i32_1 : i32, i32, i32
  }
  func.func @transform_7(%arg0: i32) -> (i32, i32, i32) {
    %c0_i32 = arith.constant 0 : i32
    %c0_i32_0 = arith.constant 0 : i32
    %c0_i32_1 = arith.constant 0 : i32
    %c0_i32_2 = arith.constant 0 : i32
    return %c0_i32, %c0_i32_0, %c0_i32_1 : i32, i32, i32
  }
  func.func @transform_8(%arg0: i32) -> (i32, i32, i32) {
    %c0_i32 = arith.constant 0 : i32
    %c0_i32_0 = arith.constant 0 : i32
    %c0_i32_1 = arith.constant 0 : i32
    %c0_i32_2 = arith.constant 0 : i32
    return %c0_i32, %c0_i32_0, %c0_i32_1 : i32, i32, i32
  }
  func.func @transform_9(%arg0: i32) -> (i32, i32, i32) {
    %c0_i32 = arith.constant 0 : i32
    %c0_i32_0 = arith.constant 0 : i32
    %c0_i32_1 = arith.constant 0 : i32
    %c0_i32_2 = arith.constant 0 : i32
    return %c0_i32, %c0_i32_0, %c0_i32_1 : i32, i32, i32
  }
  func.func @transform_10(%arg0: i32) -> (i32, i32, i32) {
    %c0_i32 = arith.constant 0 : i32
    %c0_i32_0 = arith.constant 0 : i32
    %c0_i32_1 = arith.constant 0 : i32
    %c0_i32_2 = arith.constant 0 : i32
    return %c0_i32, %c0_i32_0, %c0_i32_1 : i32, i32, i32
  }
  func.func @transform_11(%arg0: i32) -> (i32, i32, i32) {
    %c0_i32 = arith.constant 0 : i32
    %c0_i32_0 = arith.constant 0 : i32
    %c0_i32_1 = arith.constant 0 : i32
    %c0_i32_2 = arith.constant 0 : i32
    return %c0_i32, %c0_i32_0, %c0_i32_1 : i32, i32, i32
  }
  func.func @transform_12(%arg0: i32) -> (i32, i32, i32) {
    %c0_i32 = arith.constant 0 : i32
    %c0_i32_0 = arith.constant 0 : i32
    %c0_i32_1 = arith.constant 0 : i32
    %c0_i32_2 = arith.constant 0 : i32
    return %c0_i32, %c0_i32_0, %c0_i32_1 : i32, i32, i32
  }
  func.func @transform_13(%arg0: i32) -> (i32, i32, i32) {
    %c0_i32 = arith.constant 0 : i32
    %c0_i32_0 = arith.constant 0 : i32
    %c0_i32_1 = arith.constant 0 : i32
    %c0_i32_2 = arith.constant 0 : i32
    return %c0_i32, %c0_i32_0, %c0_i32_1 : i32, i32, i32
  }
  func.func @transform_14(%arg0: i32) -> (i32, i32, i32) {
    %c0_i32 = arith.constant 0 : i32
    %c0_i32_0 = arith.constant 0 : i32
    %c0_i32_1 = arith.constant 0 : i32
    %c0_i32_2 = arith.constant 0 : i32
    return %c0_i32, %c0_i32_0, %c0_i32_1 : i32, i32, i32
  }
  func.func @transform_15(%arg0: i32) -> (i32, i32) {
    %c0_i32 = arith.constant 0 : i32
    %c0_i32_0 = arith.constant 0 : i32
    %c0_i32_1 = arith.constant 0 : i32
    return %c0_i32, %c0_i32_0 : i32, i32
  }
  func.func @transform_16(%arg0: i32) -> (i32, i32) {
    %c0_i32 = arith.constant 0 : i32
    %c0_i32_0 = arith.constant 0 : i32
    %c0_i32_1 = arith.constant 0 : i32
    return %c0_i32, %c0_i32_0 : i32, i32
  }
  func.func @transform_17(%arg0: i32) -> (i32, i32) {
    %c0_i32 = arith.constant 0 : i32
    %c0_i32_0 = arith.constant 0 : i32
    %c0_i32_1 = arith.constant 0 : i32
    return %c0_i32, %c0_i32_0 : i32, i32
  }
  func.func @transform_18(%arg0: i32) -> (i32, i32) {
    %c0_i32 = arith.constant 0 : i32
    %c0_i32_0 = arith.constant 0 : i32
    %c0_i32_1 = arith.constant 0 : i32
    return %c0_i32, %c0_i32_0 : i32, i32
  }
  func.func @transform_19(%arg0: i32) -> (i32, i32) {
    %c0_i32 = arith.constant 0 : i32
    %c0_i32_0 = arith.constant 0 : i32
    %c0_i32_1 = arith.constant 0 : i32
    return %c0_i32, %c0_i32_0 : i32, i32
  }
  func.func @transform_20(%arg0: i32) -> (i32, i32) {
    %c0_i32 = arith.constant 0 : i32
    %c0_i32_0 = arith.constant 0 : i32
    %c0_i32_1 = arith.constant 0 : i32
    return %c0_i32, %c0_i32_0 : i32, i32
  }
  func.func @transform_21(%arg0: i32) -> (i32, i32) {
    %c0_i32 = arith.constant 0 : i32
    %c0_i32_0 = arith.constant 0 : i32
    %c0_i32_1 = arith.constant 0 : i32
    return %c0_i32, %c0_i32_0 : i32, i32
  }
}

</mosaic_0001>

<llo_original>
// kernel: tpu_custom_call.1
$region0: #{tpu_custom_call.1}
  #allocation0 [shape = 'u32[]', space=smem, size = 0x4, offset = 0x4, fixed_abs, tag = 'smem constant byte address 0x4 - core index']
  #allocation1 [shape = 'u32[144,128]{1,0:T(1,128)}', space=vmem, size = 0x12000, scoped, tag = 'internal scratch']
  %s0 = inlined_call_operand.vmem [shape: s32[16,1], index: 0, kind: input, shape index: {}]
  %s1 = inlined_call_operand.vmem [shape: f32[50,32], index: 1, kind: input, shape index: {}]
  %s2 = inlined_call_operand.vmem [shape: f32[8,32], index: 2, kind: input, shape index: {}]
  %s3 = inlined_call_operand.vmem [shape: f32[2,32,96], index: 3, kind: input, shape index: {}]
  %s4 = inlined_call_operand.vmem [shape: f32[2,1,96], index: 4, kind: input, shape index: {}]
  %s5 = inlined_call_operand.vmem [shape: f32[2,32,32], index: 5, kind: input, shape index: {}]
  %s6 = inlined_call_operand.vmem [shape: f32[2,1,32], index: 6, kind: input, shape index: {}]
  %s7 = inlined_call_operand.vmem [shape: f32[2,1,32], index: 7, kind: input, shape index: {}]
  %s8 = inlined_call_operand.vmem [shape: f32[2,1,32], index: 8, kind: input, shape index: {}]
  %s9 = inlined_call_operand.vmem [shape: f32[2,32,128], index: 9, kind: input, shape index: {}]
  %s10 = inlined_call_operand.vmem [shape: f32[2,1,128], index: 10, kind: input, shape index: {}]
  %s11 = inlined_call_operand.vmem [shape: f32[2,128,32], index: 11, kind: input, shape index: {}]
  %s12 = inlined_call_operand.vmem [shape: f32[2,1,32], index: 12, kind: input, shape index: {}]
  %s13 = inlined_call_operand.vmem [shape: f32[2,1,32], index: 13, kind: input, shape index: {}]
  %s14 = inlined_call_operand.vmem [shape: f32[2,1,32], index: 14, kind: input, shape index: {}]
  %s15 = inlined_call_operand.vmem [shape: f32[1,32], index: 15, kind: input, shape index: {}]
  %s16 = inlined_call_operand.vmem [shape: f32[1,32], index: 16, kind: input, shape index: {}]
  %s17 = inlined_call_operand.vmem [shape: f32[32,16], index: 17, kind: input, shape index: {}]
  %s18 = inlined_call_operand.vmem [shape: f32[1,16], index: 18, kind: input, shape index: {}]
  %s19 = inlined_call_operand.vmem [shape: f32[16,128], index: 19, kind: input, shape index: {}]
  %s20 = inlined_call_operand.vmem [shape: f32[1,128], index: 20, kind: input, shape index: {}]
  %s21 = inlined_call_operand.hbm [shape: f32[2,128], index: 21, kind: output, shape index: {}]
  %s22 = sld [smem:[#allocation0]]
  $region94: #{tpu_custom_call.1} parent=0
    _
  %s24 = ssub.s32 1, %s22
  %s25 = scalar_select 0, %s24, %s22
  $region1: #{tpu_custom_call.1} parent=0
    #allocation2 [shape = 'u8[1024]{0}', space=vmem, size = 0x400, scoped, tag = 'output window, operand 0, single buffered']
    #allocation3 [shape = 's32[1]{0}', space=sflag, size = 0x4, scoped, tag = 'scoped memory for tpu_custom_call.1']
    %26 = vsyncpa [#allocation3], 0
    // Predicated region
    $region2: #{tpu_custom_call.1} parent=1 // pred_check
      _
    $region3: #{tpu_custom_call.1} parent=1 // pred_check_branch
      %28 = sbr.rel (0) target = $region5
    $region4: #{tpu_custom_call.1} parent=1 // pred_region
      _
    $region5: #{tpu_custom_call.1} parent=1 // pred_fallthru
      _
    // Predicated region
    $region6: #{tpu_custom_call.1} parent=1 // pred_check
      _
    $region7: #{tpu_custom_call.1} parent=1 // pred_check_branch
      %30 = sbr.rel (0) target = $region9
    $region8: #{tpu_custom_call.1} parent=1 // pred_region
      _
    $region9: #{tpu_custom_call.1} parent=1 // pred_fallthru
      _
    // Predicated region
    $region10: #{tpu_custom_call.1} parent=1 // pred_check
      _
    $region11: #{tpu_custom_call.1} parent=1 // pred_check_branch
      %32 = sbr.rel (0) target = $region13
    $region12: #{tpu_custom_call.1} parent=1 // pred_region
      _
    $region13: #{tpu_custom_call.1} parent=1 // pred_fallthru
      _
    // Predicated region
    $region14: #{tpu_custom_call.1} parent=1 // pred_check
      _
    $region15: #{tpu_custom_call.1} parent=1 // pred_check_branch
      %34 = sbr.rel (0) target = $region17
    $region16: #{tpu_custom_call.1} parent=1 // pred_region
      _
    $region17: #{tpu_custom_call.1} parent=1 // pred_fallthru
      _
    // Predicated region
    $region18: #{tpu_custom_call.1} parent=1 // pred_check
      _
    $region19: #{tpu_custom_call.1} parent=1 // pred_check_branch
      %36 = sbr.rel (0) target = $region21
    $region20: #{tpu_custom_call.1} parent=1 // pred_region
      _
    $region21: #{tpu_custom_call.1} parent=1 // pred_fallthru
      _
    // Predicated region
    $region22: #{tpu_custom_call.1} parent=1 // pred_check
      _
    $region23: #{tpu_custom_call.1} parent=1 // pred_check_branch
      %38 = sbr.rel (0) target = $region25
    $region24: #{tpu_custom_call.1} parent=1 // pred_region
      _
    $region25: #{tpu_custom_call.1} parent=1 // pred_fallthru
      _
    // Predicated region
    $region26: #{tpu_custom_call.1} parent=1 // pred_check
      _
    $region27: #{tpu_custom_call.1} parent=1 // pred_check_branch
      %40 = sbr.rel (0) target = $region29
    $region28: #{tpu_custom_call.1} parent=1 // pred_region
      _
    $region29: #{tpu_custom_call.1} parent=1 // pred_fallthru
      _
    // Predicated region
    $region30: #{tpu_custom_call.1} parent=1 // pred_check
      _
    $region31: #{tpu_custom_call.1} parent=1 // pred_check_branch
      %42 = sbr.rel (0) target = $region33
    $region32: #{tpu_custom_call.1} parent=1 // pred_region
      _
    $region33: #{tpu_custom_call.1} parent=1 // pred_fallthru
      _
    // Predicated region
    $region34: #{tpu_custom_call.1} parent=1 // pred_check
      _
    $region35: #{tpu_custom_call.1} parent=1 // pred_check_branch
      %44 = sbr.rel (0) target = $region37
    $region36: #{tpu_custom_call.1} parent=1 // pred_region
      _
    $region37: #{tpu_custom_call.1} parent=1 // pred_fallthru
      _
    // Predicated region
    $region38: #{tpu_custom_call.1} parent=1 // pred_check
      _
    $region39: #{tpu_custom_call.1} parent=1 // pred_check_branch
      %46 = sbr.rel (0) target = $region41
    $region40: #{tpu_custom_call.1} parent=1 // pred_region
      _
    $region41: #{tpu_custom_call.1} parent=1 // pred_fallthru
      _
    // Predicated region
    $region42: #{tpu_custom_call.1} parent=1 // pred_check
      _
    $region43: #{tpu_custom_call.1} parent=1 // pred_check_branch
      %48 = sbr.rel (0) target = $region45
    $region44: #{tpu_custom_call.1} parent=1 // pred_region
      _
    $region45: #{tpu_custom_call.1} parent=1 // pred_fallthru
      _
    // Predicated region
    $region46: #{tpu_custom_call.1} parent=1 // pred_check
      _
    $region47: #{tpu_custom_call.1} parent=1 // pred_check_branch
      %50 = sbr.rel (0) target = $region49
    $region48: #{tpu_custom_call.1} parent=1 // pred_region
      _
    $region49: #{tpu_custom_call.1} parent=1 // pred_fallthru
      _
    // Predicated region
    $region50: #{tpu_custom_call.1} parent=1 // pred_check
      _
    $region51: #{tpu_custom_call.1} parent=1 // pred_check_branch
      %52 = sbr.rel (0) target = $region53
    $region52: #{tpu_custom_call.1} parent=1 // pred_region
      _
    $region53: #{tpu_custom_call.1} parent=1 // pred_fallthru
      _
    // Predicated region
    $region54: #{tpu_custom_call.1} parent=1 // pred_check
      _
    $region55: #{tpu_custom_call.1} parent=1 // pred_check_branch
      %54 = sbr.rel (0) target = $region57
    $region56: #{tpu_custom_call.1} parent=1 // pred_region
      _
    $region57: #{tpu_custom_call.1} parent=1 // pred_fallthru
      _
    // Predicated region
    $region58: #{tpu_custom_call.1} parent=1 // pred_check
      _
    $region59: #{tpu_custom_call.1} parent=1 // pred_check_branch
      %56 = sbr.rel (0) target = $region61
    $region60: #{tpu_custom_call.1} parent=1 // pred_region
      _
    $region61: #{tpu_custom_call.1} parent=1 // pred_fallthru
      _
    // Predicated region
    $region62: #{tpu_custom_call.1} parent=1 // pred_check
      _
    $region63: #{tpu_custom_call.1} parent=1 // pred_check_branch
      %58 = sbr.rel (0) target = $region65
    $region64: #{tpu_custom_call.1} parent=1 // pred_region
      _
    $region65: #{tpu_custom_call.1} parent=1 // pred_fallthru
      _
    // Predicated region
    $region66: #{tpu_custom_call.1} parent=1 // pred_check
      _
    $region67: #{tpu_custom_call.1} parent=1 // pred_check_branch
      %60 = sbr.rel (0) target = $region69
    $region68: #{tpu_custom_call.1} parent=1 // pred_region
      _
    $region69: #{tpu_custom_call.1} parent=1 // pred_fallthru
      _
    // Predicated region
    $region70: #{tpu_custom_call.1} parent=1 // pred_check
      _
    $region71: #{tpu_custom_call.1} parent=1 // pred_check_branch
      %62 = sbr.rel (0) target = $region73
    $region72: #{tpu_custom_call.1} parent=1 // pred_region
      _
    $region73: #{tpu_custom_call.1} parent=1 // pred_fallthru
      _
    // Predicated region
    $region74: #{tpu_custom_call.1} parent=1 // pred_check
      _
    $region75: #{tpu_custom_call.1} parent=1 // pred_check_branch
      %64 = sbr.rel (0) target = $region77
    $region76: #{tpu_custom_call.1} parent=1 // pred_region
      _
    $region77: #{tpu_custom_call.1} parent=1 // pred_fallthru
      _
    // Predicated region
    $region78: #{tpu_custom_call.1} parent=1 // pred_check
      _
    $region79: #{tpu_custom_call.1} parent=1 // pred_check_branch
      %66 = sbr.rel (0) target = $region81
    $region80: #{tpu_custom_call.1} parent=1 // pred_region
      _
    $region81: #{tpu_custom_call.1} parent=1 // pred_fallthru
      _
    // Predicated region
    $region82: #{tpu_custom_call.1} parent=1 // pred_check
      _
    $region83: #{tpu_custom_call.1} parent=1 // pred_check_branch
      %68 = sbr.rel (0) target = $region85
    $region84: #{tpu_custom_call.1} parent=1 // pred_region
      _
    $region85: #{tpu_custom_call.1} parent=1 // pred_fallthru
      _
    %v69 = vld [vmem:[%s0] sm:$0xff]
    %v70 = vld [vmem:[%s0 + $0x8] sm:$0xff]
    %v71 = vlaneseq
    %v72 = vand.u32 %v71, 127
    %73 = vset.pattern.permute.xlu0 0
    %74 = vperm.xlu0 %73, %v69
    %v75 = vpop.permute.xlu0 %74
    %76 = vset.pattern.permute.xlu0 0
    %77 = vperm.xlu0 %76, %v70
    %v78 = vpop.permute.xlu0 %77
    %vm79 = vcmp.eq.s32.totalorder %v72, %v75
    %vm80 = vcmp.eq.s32.totalorder %v72, %v78
    %v81 = vsel %vm79, 1, 0
    %v82 = vsel %vm80, 1, 0
    %v83 = vcvt.s32.f32 %v81
    %v84 = vcvt.s32.f32 %v82
    %v85 = vld [vmem:[%s1] sm:$0xff]
    %v86 = vld [vmem:[%s1 + $0x8] sm:$0xff]
    %v87 = vld [vmem:[%s1 + $0x10] sm:$0xff]
    %v88 = vld [vmem:[%s1 + $0x18] sm:$0xff]
    %v89 = vld [vmem:[%s1 + $0x20] sm:$0xff]
    %v90 = vld [vmem:[%s1 + $0x28] sm:$0xff]
    %v91 = vld [vmem:[%s1 + $0x30] sm:$0x3]
    %vm92 = vcmask 408576
    %v94 = vsel %vm92, %v83, 0
    %v97 = vsel %vm92, %v84, 0
    %vm99 = vcmask 1041408
    %v101 = vsel %vm99, %v91, 0
    %103 = vmatprep.subr.mxu0 0.0
    %104 = vmatpush1.msra.mxu0 0.0
    %105 = vmatprep.subr.mxu0 0.0
    %106 = vmatpush1.msra.mxu0 0.0
    %107 = vmatprep.subr.mxu0 0.0
    %108 = vmatpush1.msra.mxu0 0.0
    %109 = vmatprep.subr.mxu0 0.0
    %110 = vmatpush1.msra.mxu0 0.0
    %111 = vmatprep.subr.mxu0 0.0
    %112 = vmatpush1.msra.mxu0 0.0
    %113 = vmatprep.subr.mxu0 0.0
    %114 = vmatpush1.msra.mxu0 0.0
    %115 = vmatprep.subr.mxu0 0.0
    %116 = vmatpush1.msra.mxu0 0.0
    %117 = vmatprep.subr.mxu0 0.0
    %118 = vmatpush1.msra.mxu0 0.0
    %119 = vmatprep.subr.mxu0 0.0
    %120 = vmatpush1.msra.mxu0 0.0
    %121 = vmatprep.subr.mxu0 0.0
    %122 = vmatpush1.msra.mxu0 %v101
    %123 = vmatprep.subr.mxu0 0.0
    %124 = vmatpush1.msra.mxu0 %v90
    %125 = vmatprep.subr.mxu0 0.0
    %126 = vmatpush1.msra.mxu0 %v89
    %127 = vmatprep.subr.mxu0 0.0
    %128 = vmatpush1.msra.mxu0 %v88
    %129 = vmatprep.subr.mxu0 0.0
    %130 = vmatpush1.msra.mxu0 %v87
    %131 = vmatprep.subr.mxu0 0.0
    %132 = vmatpush1.msra.mxu0 %v86
    %133 = vmatprep.subr.mxu0 0.0
    %134 = vmatpush1.msra.mxu0 %v85
    %135 = vmatprep.subr.mxu0 0.0
    %136 = vmatpush2.msra.mxu0 0.0
    %137 = vmatprep.subr.mxu0 0.0
    %138 = vmatpush2.msra.mxu0 0.0
    %139 = vmatprep.subr.mxu0 0.0
    %140 = vmatpush2.msra.mxu0 0.0
    %141 = vmatprep.subr.mxu0 0.0
    %142 = vmatpush2.msra.mxu0 0.0
    %143 = vmatprep.subr.mxu0 0.0
    %144 = vmatpush2.msra.mxu0 0.0
    %145 = vmatprep.subr.mxu0 0.0
    %146 = vmatpush2.msra.mxu0 0.0
    %147 = vmatprep.subr.mxu0 0.0
    %148 = vmatpush2.msra.mxu0 0.0
    %149 = vmatprep.subr.mxu0 0.0
    %150 = vmatpush2.msra.mxu0 0.0
    %151 = vmatprep.subr.mxu0 0.0
    %152 = vmatpush2.msra.mxu0 0.0
    %153 = vmatprep.subr.mxu0 0.0
    %154 = vmatpush2.msra.mxu0 0.0
    %155 = vmatprep.subr.mxu0 0.0
    %156 = vmatpush2.msra.mxu0 0.0
    %157 = vmatprep.subr.mxu0 0.0
    %158 = vmatpush2.msra.mxu0 0.0
    %159 = vmatprep.subr.mxu0 0.0
    %160 = vmatpush2.msra.mxu0 0.0
    %161 = vmatprep.subr.mxu0 0.0
    %162 = vmatpush2.msra.mxu0 0.0
    %163 = vmatprep.subr.mxu0 0.0
    %164 = vmatpush2.msra.mxu0 0.0
    %165 = vmatprep.subr.mxu0 0.0
    %166 = vmatpush2.msra.mxu0 0.0
    %167 = vmatprep.mubr.f32.mxu0 0.0
    %168 = vmatmul.mubr.f32.gmra.mxu0 %v94
    %v169 = vpop.f32.mrf.mxu0
    %v170 = vadd.f32 0.0, %v169
    %v171 = vpop.f32.mrf.mxu0
    %172 = vmatprep.mubr.f32.mxu0 0.0
    %173 = vmatmul.mubr.f32.gmra.mxu0 %v97
    %v174 = vpop.f32.mrf.mxu0
    %v175 = vadd.f32 0.0, %v174
    %v176 = vpop.f32.mrf.mxu0
    %177 = vdwg.mxu0
    %v178 = vmul.f32 %v170, 5.656854
    %v179 = vmul.f32 %v175, 5.656854
    %v180 = vld [vmem:[%s2] sm:$0xff]
    %v181 = vadd.f32 %v178, %v180
    %v182 = vadd.f32 %v179, %v180
    %v183 = vld [vmem:[%s3] sm:$0xff]
    %v184 = vld [vmem:[%s3 + $0x8] sm:$0xff]
    %v185 = vld [vmem:[%s3 + $0x10] sm:$0xff]
    %v186 = vld [vmem:[%s3 + $0x18] sm:$0xff]
    %v187 = vld [vmem:[%s4] sm:$0x1]
    %v189 = vlaneseq
    %v190 = vshrl.u32 %v189, 7
    %v191 = vsub.s32 0, %v190
    %v192 = vrot.slane %v187, %v191
    %vm194 = vcmask 261120
    %v196 = vsel %vm194, %v181, 0
    %v199 = vsel %vm194, %v182, 0
    %201 = vmatprep.subr.mxu0 0.0
    %202 = vmatpush1.msra.mxu0 0.0
    %203 = vmatprep.subr.mxu0 0.0
    %204 = vmatpush1.msra.mxu0 0.0
    %205 = vmatprep.subr.mxu0 0.0
    %206 = vmatpush1.msra.mxu0 0.0
    %207 = vmatprep.subr.mxu0 0.0
    %208 = vmatpush1.msra.mxu0 0.0
    %209 = vmatprep.subr.mxu0 0.0
    %210 = vmatpush1.msra.mxu0 0.0
    %211 = vmatprep.subr.mxu0 0.0
    %212 = vmatpush1.msra.mxu0 0.0
    %213 = vmatprep.subr.mxu0 0.0
    %214 = vmatpush1.msra.mxu0 0.0
    %215 = vmatprep.subr.mxu0 0.0
    %216 = vmatpush1.msra.mxu0 0.0
    %217 = vmatprep.subr.mxu0 0.0
    %218 = vmatpush1.msra.mxu0 0.0
    %219 = vmatprep.subr.mxu0 0.0
    %220 = vmatpush1.msra.mxu0 0.0
    %221 = vmatprep.subr.mxu0 0.0
    %222 = vmatpush1.msra.mxu0 0.0
    %223 = vmatprep.subr.mxu0 0.0
    %224 = vmatpush1.msra.mxu0 0.0
    %225 = vmatprep.subr.mxu0 0.0
    %226 = vmatpush1.msra.mxu0 %v186
    %227 = vmatprep.subr.mxu0 0.0
    %228 = vmatpush1.msra.mxu0 %v185
    %229 = vmatprep.subr.mxu0 0.0
    %230 = vmatpush1.msra.mxu0 %v184
    %231 = vmatprep.subr.mxu0 0.0
    %232 = vmatpush1.msra.mxu0 %v183
    %233 = vmatprep.subr.mxu0 0.0
    %234 = vmatpush2.msra.mxu0 0.0
    %235 = vmatprep.subr.mxu0 0.0
    %236 = vmatpush2.msra.mxu0 0.0
    %237 = vmatprep.subr.mxu0 0.0
    %238 = vmatpush2.msra.mxu0 0.0
    %239 = vmatprep.subr.mxu0 0.0
    %240 = vmatpush2.msra.mxu0 0.0
    %241 = vmatprep.subr.mxu0 0.0
    %242 = vmatpush2.msra.mxu0 0.0
    %243 = vmatprep.subr.mxu0 0.0
    %244 = vmatpush2.msra.mxu0 0.0
    %245 = vmatprep.subr.mxu0 0.0
    %246 = vmatpush2.msra.mxu0 0.0
    %247 = vmatprep.subr.mxu0 0.0
    %248 = vmatpush2.msra.mxu0 0.0
    %249 = vmatprep.subr.mxu0 0.0
    %250 = vmatpush2.msra.mxu0 0.0
    %251 = vmatprep.subr.mxu0 0.0
    %252 = vmatpush2.msra.mxu0 0.0
    %253 = vmatprep.subr.mxu0 0.0
    %254 = vmatpush2.msra.mxu0 0.0
    %255 = vmatprep.subr.mxu0 0.0
    %256 = vmatpush2.msra.mxu0 0.0
    %257 = vmatprep.subr.mxu0 0.0
    %258 = vmatpush2.msra.mxu0 0.0
    %259 = vmatprep.subr.mxu0 0.0
    %260 = vmatpush2.msra.mxu0 0.0
    %261 = vmatprep.subr.mxu0 0.0
    %262 = vmatpush2.msra.mxu0 0.0
    %263 = vmatprep.subr.mxu0 0.0
    %264 = vmatpush2.msra.mxu0 0.0
    %265 = vmatprep.mubr.f32.mxu0 0.0
    %266 = vmatmul.mubr.f32.gmra.mxu0 %v196
    %v267 = vpop.f32.mrf.mxu0
    %v268 = vadd.f32 %v192, %v267
    %v269 = vpop.f32.mrf.mxu0
    %270 = vmatprep.mubr.f32.mxu0 0.0
    %271 = vmatmul.mubr.f32.gmra.mxu0 %v199
    %v272 = vpop.f32.mrf.mxu0
    %v273 = vadd.f32 %v192, %v272
    %v274 = vpop.f32.mrf.mxu0
    %275 = vdwg.mxu0
    %277 = vrot.lane.b32.xlu0 %v268, 96
    %v278 = vpop.permute.xlu0 %277
    %vm279 = vcmask 64512
    %v280 = vsel %vm279, %v268, 0
    %v282 = vsel %vm279, %v278, 0
    %284 = vmatprep.subr.mxu0 0.0
    %285 = vmatpush1.xpose.msra.mxu0 0.0
    %286 = vmatprep.subr.mxu0 0.0
    %287 = vmatpush1.xpose.msra.mxu0 0.0
    %288 = vmatprep.subr.mxu0 0.0
    %289 = vmatpush1.xpose.msra.mxu0 0.0
    %290 = vmatprep.subr.mxu0 0.0
    %291 = vmatpush1.xpose.msra.mxu0 0.0
    %292 = vmatprep.subr.mxu0 0.0
    %293 = vmatpush1.xpose.msra.mxu0 0.0
    %294 = vmatprep.subr.mxu0 0.0
    %295 = vmatpush1.xpose.msra.mxu0 0.0
    %296 = vmatprep.subr.mxu0 0.0
    %297 = vmatpush1.xpose.msra.mxu0 0.0
    %298 = vmatprep.subr.mxu0 0.0
    %299 = vmatpush1.xpose.msra.mxu0 0.0
    %300 = vmatprep.subr.mxu0 0.0
    %301 = vmatpush1.xpose.msra.mxu0 0.0
    %302 = vmatprep.subr.mxu0 0.0
    %303 = vmatpush1.xpose.msra.mxu0 0.0
    %304 = vmatprep.subr.mxu0 0.0
    %305 = vmatpush1.xpose.msra.mxu0 0.0
    %306 = vmatprep.subr.mxu0 0.0
    %307 = vmatpush1.xpose.msra.mxu0 0.0
    %308 = vmatprep.subr.mxu0 0.0
    %309 = vmatpush1.xpose.msra.mxu0 0.0
    %310 = vmatprep.subr.mxu0 0.0
    %311 = vmatpush1.xpose.msra.mxu0 0.0
    %312 = vmatprep.subr.mxu0 0.0
    %313 = vmatpush1.xpose.msra.mxu0 0.0
    %314 = vmatprep.subr.mxu0 0.0
    %315 = vmatpush1.xpose.msra.mxu0 %v282
    %316 = vmatprep.subr.mxu0 0.0
    %317 = vmatpush2.xpose.msra.mxu0 0.0
    %318 = vmatprep.subr.mxu0 0.0
    %319 = vmatpush2.xpose.msra.mxu0 0.0
    %320 = vmatprep.subr.mxu0 0.0
    %321 = vmatpush2.xpose.msra.mxu0 0.0
    %322 = vmatprep.subr.mxu0 0.0
    %323 = vmatpush2.xpose.msra.mxu0 0.0
    %324 = vmatprep.subr.mxu0 0.0
    %325 = vmatpush2.xpose.msra.mxu0 0.0
    %326 = vmatprep.subr.mxu0 0.0
    %327 = vmatpush2.xpose.msra.mxu0 0.0
    %328 = vmatprep.subr.mxu0 0.0
    %329 = vmatpush2.xpose.msra.mxu0 0.0
    %330 = vmatprep.subr.mxu0 0.0
    %331 = vmatpush2.xpose.msra.mxu0 0.0
    %332 = vmatprep.subr.mxu0 0.0
    %333 = vmatpush2.xpose.msra.mxu0 0.0
    %334 = vmatprep.subr.mxu0 0.0
    %335 = vmatpush2.xpose.msra.mxu0 0.0
    %336 = vmatprep.subr.mxu0 0.0
    %337 = vmatpush2.xpose.msra.mxu0 0.0
    %338 = vmatprep.subr.mxu0 0.0
    %339 = vmatpush2.xpose.msra.mxu0 0.0
    %340 = vmatprep.subr.mxu0 0.0
    %341 = vmatpush2.xpose.msra.mxu0 0.0
    %342 = vmatprep.subr.mxu0 0.0
    %343 = vmatpush2.xpose.msra.mxu0 0.0
    %344 = vmatprep.subr.mxu0 0.0
    %345 = vmatpush2.xpose.msra.mxu0 0.0
    %346 = vmatprep.subr.mxu0 0.0
    %347 = vmatpush2.xpose.msra.mxu0 0.0
    %348 = vmatprep.mubr.f32.mxu0 0.0
    %349 = vmatmul.mubr.f32.gmra.mxu0 %v280
    %v350 = vpop.f32.mrf.mxu0
    %v351 = vadd.f32 0.0, %v350
    %v352 = vpop.f32.mrf.mxu0
    %353 = vdwg.mxu0
    %355 = vrot.lane.b32.xlu0 %v273, 96
    %v356 = vpop.permute.xlu0 %355
    %v357 = vsel %vm279, %v273, 0
    %v359 = vsel %vm279, %v356, 0
    %361 = vmatprep.subr.mxu0 0.0
    %362 = vmatpush1.xpose.msra.mxu0 0.0
    %363 = vmatprep.subr.mxu0 0.0
    %364 = vmatpush1.xpose.msra.mxu0 0.0
    %365 = vmatprep.subr.mxu0 0.0
    %366 = vmatpush1.xpose.msra.mxu0 0.0
    %367 = vmatprep.subr.mxu0 0.0
    %368 = vmatpush1.xpose.msra.mxu0 0.0
    %369 = vmatprep.subr.mxu0 0.0
    %370 = vmatpush1.xpose.msra.mxu0 0.0
    %371 = vmatprep.subr.mxu0 0.0
    %372 = vmatpush1.xpose.msra.mxu0 0.0
    %373 = vmatprep.subr.mxu0 0.0
    %374 = vmatpush1.xpose.msra.mxu0 0.0
    %375 = vmatprep.subr.mxu0 0.0
    %376 = vmatpush1.xpose.msra.mxu0 0.0
    %377 = vmatprep.subr.mxu0 0.0
    %378 = vmatpush1.xpose.msra.mxu0 0.0
    %379 = vmatprep.subr.mxu0 0.0
    %380 = vmatpush1.xpose.msra.mxu0 0.0
    %381 = vmatprep.subr.mxu0 0.0
    %382 = vmatpush1.xpose.msra.mxu0 0.0
    %383 = vmatprep.subr.mxu0 0.0
    %384 = vmatpush1.xpose.msra.mxu0 0.0
    %385 = vmatprep.subr.mxu0 0.0
    %386 = vmatpush1.xpose.msra.mxu0 0.0
    %387 = vmatprep.subr.mxu0 0.0
    %388 = vmatpush1.xpose.msra.mxu0 0.0
    %389 = vmatprep.subr.mxu0 0.0
    %390 = vmatpush1.xpose.msra.mxu0 0.0
    %391 = vmatprep.subr.mxu0 0.0
    %392 = vmatpush1.xpose.msra.mxu0 %v359
    %393 = vmatprep.subr.mxu0 0.0
    %394 = vmatpush2.xpose.msra.mxu0 0.0
    %395 = vmatprep.subr.mxu0 0.0
    %396 = vmatpush2.xpose.msra.mxu0 0.0
    %397 = vmatprep.subr.mxu0 0.0
    %398 = vmatpush2.xpose.msra.mxu0 0.0
    %399 = vmatprep.subr.mxu0 0.0
    %400 = vmatpush2.xpose.msra.mxu0 0.0
    %401 = vmatprep.subr.mxu0 0.0
    %402 = vmatpush2.xpose.msra.mxu0 0.0
    %403 = vmatprep.subr.mxu0 0.0
    %404 = vmatpush2.xpose.msra.mxu0 0.0
    %405 = vmatprep.subr.mxu0 0.0
    %406 = vmatpush2.xpose.msra.mxu0 0.0
    %407 = vmatprep.subr.mxu0 0.0
    %408 = vmatpush2.xpose.msra.mxu0 0.0
    %409 = vmatprep.subr.mxu0 0.0
    %410 = vmatpush2.xpose.msra.mxu0 0.0
    %411 = vmatprep.subr.mxu0 0.0
    %412 = vmatpush2.xpose.msra.mxu0 0.0
    %413 = vmatprep.subr.mxu0 0.0
    %414 = vmatpush2.xpose.msra.mxu0 0.0
    %415 = vmatprep.subr.mxu0 0.0
    %416 = vmatpush2.xpose.msra.mxu0 0.0
    %417 = vmatprep.subr.mxu0 0.0
    %418 = vmatpush2.xpose.msra.mxu0 0.0
    %419 = vmatprep.subr.mxu0 0.0
    %420 = vmatpush2.xpose.msra.mxu0 0.0
    %421 = vmatprep.subr.mxu0 0.0
    %422 = vmatpush2.xpose.msra.mxu0 0.0
    %423 = vmatprep.subr.mxu0 0.0
    %424 = vmatpush2.xpose.msra.mxu0 0.0
    %425 = vmatprep.mubr.f32.mxu0 0.0
    %426 = vmatmul.mubr.f32.gmra.mxu0 %v357
    %v427 = vpop.f32.mrf.mxu0
    %v428 = vadd.f32 0.0, %v427
    %v429 = vpop.f32.mrf.mxu0
    %430 = vdwg.mxu0
    %v431 = vmul.f32 %v351, 0.35355338
    %v432 = vmul.f32 %v428, 0.35355338
    %v433 = vsel %vm279, %v431, -inf
    %434 = vmax.xlane.f32.xlu0 %v433
    %v435 = vpop.xlane.xlu0 %434
    %v436 = vsel %vm279, %v432, -inf
    %437 = vmax.xlane.f32.xlu0 %v436
    %v438 = vpop.xlane.xlu0 %437
    %v439 = vsub.f32 %v431, %v435
    %v440 = vsub.f32 %v432, %v438
    %v441 = vmul.f32 %v439, 1.442695
    %v442 = vpow.pop %v441
    %v443 = vmul.f32 %v440, 1.442695
    %v444 = vpow.pop %v443
    %v445 = vsel %vm279, %v442, 0.0
    %446 = vadd.xlane.f32.xlu0 %v445
    %v447 = vpop.xlane.xlu0 %446
    %v448 = vsel %vm279, %v444, 0.0
    %449 = vadd.xlane.f32.xlu0 %v448
    %v450 = vpop.xlane.xlu0 %449
    %v451 = vrcp.pop %v447
    %v452 = vrcp.pop %v450
    %v453 = vmul.f32 %v442, %v451
    %v454 = vmul.f32 %v444, %v452
    %455 = vrot.lane.b32.xlu0 %v268, 64
    %v456 = vpop.permute.xlu0 %455
    %v459 = vsel %vm279, %v453, 0
    %461 = vmatprep.subr.mxu0 0.0
    %462 = vmatpush1.msra.mxu0 0.0
    %463 = vmatprep.subr.mxu0 0.0
    %464 = vmatpush1.msra.mxu0 0.0
    %465 = vmatprep.subr.mxu0 0.0
    %466 = vmatpush1.msra.mxu0 0.0
    %467 = vmatprep.subr.mxu0 0.0
    %468 = vmatpush1.msra.mxu0 0.0
    %469 = vmatprep.subr.mxu0 0.0
    %470 = vmatpush1.msra.mxu0 0.0
    %471 = vmatprep.subr.mxu0 0.0
    %472 = vmatpush1.msra.mxu0 0.0
    %473 = vmatprep.subr.mxu0 0.0
    %474 = vmatpush1.msra.mxu0 0.0
    %475 = vmatprep.subr.mxu0 0.0
    %476 = vmatpush1.msra.mxu0 0.0
    %477 = vmatprep.subr.mxu0 0.0
    %478 = vmatpush1.msra.mxu0 0.0
    %479 = vmatprep.subr.mxu0 0.0
    %480 = vmatpush1.msra.mxu0 0.0
    %481 = vmatprep.subr.mxu0 0.0
    %482 = vmatpush1.msra.mxu0 0.0
    %483 = vmatprep.subr.mxu0 0.0
    %484 = vmatpush1.msra.mxu0 0.0
    %485 = vmatprep.subr.mxu0 0.0
    %486 = vmatpush1.msra.mxu0 0.0
    %487 = vmatprep.subr.mxu0 0.0
    %488 = vmatpush1.msra.mxu0 0.0
    %489 = vmatprep.subr.mxu0 0.0
    %490 = vmatpush1.msra.mxu0 0.0
    %491 = vmatprep.subr.mxu0 0.0
    %492 = vmatpush1.msra.mxu0 %v456
    %493 = vmatprep.subr.mxu0 0.0
    %494 = vmatpush2.msra.mxu0 0.0
    %495 = vmatprep.subr.mxu0 0.0
    %496 = vmatpush2.msra.mxu0 0.0
    %497 = vmatprep.subr.mxu0 0.0
    %498 = vmatpush2.msra.mxu0 0.0
    %499 = vmatprep.subr.mxu0 0.0
    %500 = vmatpush2.msra.mxu0 0.0
    %501 = vmatprep.subr.mxu0 0.0
    %502 = vmatpush2.msra.mxu0 0.0
    %503 = vmatprep.subr.mxu0 0.0
    %504 = vmatpush2.msra.mxu0 0.0
    %505 = vmatprep.subr.mxu0 0.0
    %506 = vmatpush2.msra.mxu0 0.0
    %507 = vmatprep.subr.mxu0 0.0
    %508 = vmatpush2.msra.mxu0 0.0
    %509 = vmatprep.subr.mxu0 0.0
    %510 = vmatpush2.msra.mxu0 0.0
    %511 = vmatprep.subr.mxu0 0.0
    %512 = vmatpush2.msra.mxu0 0.0
    %513 = vmatprep.subr.mxu0 0.0
    %514 = vmatpush2.msra.mxu0 0.0
    %515 = vmatprep.subr.mxu0 0.0
    %516 = vmatpush2.msra.mxu0 0.0
    %517 = vmatprep.subr.mxu0 0.0
    %518 = vmatpush2.msra.mxu0 0.0
    %519 = vmatprep.subr.mxu0 0.0
    %520 = vmatpush2.msra.mxu0 0.0
    %521 = vmatprep.subr.mxu0 0.0
    %522 = vmatpush2.msra.mxu0 0.0
    %523 = vmatprep.subr.mxu0 0.0
    %524 = vmatpush2.msra.mxu0 0.0
    %525 = vmatprep.mubr.f32.mxu0 0.0
    %526 = vmatmul.mubr.f32.gmra.mxu0 %v459
    %v527 = vpop.f32.mrf.mxu0
    %v528 = vadd.f32 0.0, %v527
    %v529 = vpop.f32.mrf.mxu0
    %530 = vdwg.mxu0
    %531 = vrot.lane.b32.xlu0 %v273, 64
    %v532 = vpop.permute.xlu0 %531
    %v535 = vsel %vm279, %v454, 0
    %537 = vmatprep.subr.mxu0 0.0
    %538 = vmatpush1.msra.mxu0 0.0
    %539 = vmatprep.subr.mxu0 0.0
    %540 = vmatpush1.msra.mxu0 0.0
    %541 = vmatprep.subr.mxu0 0.0
    %542 = vmatpush1.msra.mxu0 0.0
    %543 = vmatprep.subr.mxu0 0.0
    %544 = vmatpush1.msra.mxu0 0.0
    %545 = vmatprep.subr.mxu0 0.0
    %546 = vmatpush1.msra.mxu0 0.0
    %547 = vmatprep.subr.mxu0 0.0
    %548 = vmatpush1.msra.mxu0 0.0
    %549 = vmatprep.subr.mxu0 0.0
    %550 = vmatpush1.msra.mxu0 0.0
    %551 = vmatprep.subr.mxu0 0.0
    %552 = vmatpush1.msra.mxu0 0.0
    %553 = vmatprep.subr.mxu0 0.0
    %554 = vmatpush1.msra.mxu0 0.0
    %555 = vmatprep.subr.mxu0 0.0
    %556 = vmatpush1.msra.mxu0 0.0
    %557 = vmatprep.subr.mxu0 0.0
    %558 = vmatpush1.msra.mxu0 0.0
    %559 = vmatprep.subr.mxu0 0.0
    %560 = vmatpush1.msra.mxu0 0.0
    %561 = vmatprep.subr.mxu0 0.0
    %562 = vmatpush1.msra.mxu0 0.0
    %563 = vmatprep.subr.mxu0 0.0
    %564 = vmatpush1.msra.mxu0 0.0
    %565 = vmatprep.subr.mxu0 0.0
    %566 = vmatpush1.msra.mxu0 0.0
    %567 = vmatprep.subr.mxu0 0.0
    %568 = vmatpush1.msra.mxu0 %v532
    %569 = vmatprep.subr.mxu0 0.0
    %570 = vmatpush2.msra.mxu0 0.0
    %571 = vmatprep.subr.mxu0 0.0
    %572 = vmatpush2.msra.mxu0 0.0
    %573 = vmatprep.subr.mxu0 0.0
    %574 = vmatpush2.msra.mxu0 0.0
    %575 = vmatprep.subr.mxu0 0.0
    %576 = vmatpush2.msra.mxu0 0.0
    %577 = vmatprep.subr.mxu0 0.0
    %578 = vmatpush2.msra.mxu0 0.0
    %579 = vmatprep.subr.mxu0 0.0
    %580 = vmatpush2.msra.mxu0 0.0
    %581 = vmatprep.subr.mxu0 0.0
    %582 = vmatpush2.msra.mxu0 0.0
    %583 = vmatprep.subr.mxu0 0.0
    %584 = vmatpush2.msra.mxu0 0.0
    %585 = vmatprep.subr.mxu0 0.0
    %586 = vmatpush2.msra.mxu0 0.0
    %587 = vmatprep.subr.mxu0 0.0
    %588 = vmatpush2.msra.mxu0 0.0
    %589 = vmatprep.subr.mxu0 0.0
    %590 = vmatpush2.msra.mxu0 0.0
    %591 = vmatprep.subr.mxu0 0.0
    %592 = vmatpush2.msra.mxu0 0.0
    %593 = vmatprep.subr.mxu0 0.0
    %594 = vmatpush2.msra.mxu0 0.0
    %595 = vmatprep.subr.mxu0 0.0
    %596 = vmatpush2.msra.mxu0 0.0
    %597 = vmatprep.subr.mxu0 0.0
    %598 = vmatpush2.msra.mxu0 0.0
    %599 = vmatprep.subr.mxu0 0.0
    %600 = vmatpush2.msra.mxu0 0.0
    %601 = vmatprep.mubr.f32.mxu0 0.0
    %602 = vmatmul.mubr.f32.gmra.mxu0 %v535
    %v603 = vpop.f32.mrf.mxu0
    %v604 = vadd.f32 0.0, %v603
    %v605 = vpop.f32.mrf.mxu0
    %606 = vdwg.mxu0
    %607 = vrot.lane.b32.xlu0 %v268, 120
    %v608 = vpop.permute.xlu0 %607
    %609 = vrot.lane.b32.xlu0 %v268, 88
    %v610 = vpop.permute.xlu0 %609
    %v611 = vsel %vm279, %v608, 0
    %v613 = vsel %vm279, %v610, 0
    %615 = vmatprep.subr.mxu0 0.0
    %616 = vmatpush1.xpose.msra.mxu0 0.0
    %617 = vmatprep.subr.mxu0 0.0
    %618 = vmatpush1.xpose.msra.mxu0 0.0
    %619 = vmatprep.subr.mxu0 0.0
    %620 = vmatpush1.xpose.msra.mxu0 0.0
    %621 = vmatprep.subr.mxu0 0.0
    %622 = vmatpush1.xpose.msra.mxu0 0.0
    %623 = vmatprep.subr.mxu0 0.0
    %624 = vmatpush1.xpose.msra.mxu0 0.0
    %625 = vmatprep.subr.mxu0 0.0
    %626 = vmatpush1.xpose.msra.mxu0 0.0
    %627 = vmatprep.subr.mxu0 0.0
    %628 = vmatpush1.xpose.msra.mxu0 0.0
    %629 = vmatprep.subr.mxu0 0.0
    %630 = vmatpush1.xpose.msra.mxu0 0.0
    %631 = vmatprep.subr.mxu0 0.0
    %632 = vmatpush1.xpose.msra.mxu0 0.0
    %633 = vmatprep.subr.mxu0 0.0
    %634 = vmatpush1.xpose.msra.mxu0 0.0
    %635 = vmatprep.subr.mxu0 0.0
    %636 = vmatpush1.xpose.msra.mxu0 0.0
    %637 = vmatprep.subr.mxu0 0.0
    %638 = vmatpush1.xpose.msra.mxu0 0.0
    %639 = vmatprep.subr.mxu0 0.0
    %640 = vmatpush1.xpose.msra.mxu0 0.0
    %641 = vmatprep.subr.mxu0 0.0
    %642 = vmatpush1.xpose.msra.mxu0 0.0
    %643 = vmatprep.subr.mxu0 0.0
    %644 = vmatpush1.xpose.msra.mxu0 0.0
    %645 = vmatprep.subr.mxu0 0.0
    %646 = vmatpush1.xpose.msra.mxu0 %v613
    %647 = vmatprep.subr.mxu0 0.0
    %648 = vmatpush2.xpose.msra.mxu0 0.0
    %649 = vmatprep.subr.mxu0 0.0
    %650 = vmatpush2.xpose.msra.mxu0 0.0
    %651 = vmatprep.subr.mxu0 0.0
    %652 = vmatpush2.xpose.msra.mxu0 0.0
    %653 = vmatprep.subr.mxu0 0.0
    %654 = vmatpush2.xpose.msra.mxu0 0.0
    %655 = vmatprep.subr.mxu0 0.0
    %656 = vmatpush2.xpose.msra.mxu0 0.0
    %657 = vmatprep.subr.mxu0 0.0
    %658 = vmatpush2.xpose.msra.mxu0 0.0
    %659 = vmatprep.subr.mxu0 0.0
    %660 = vmatpush2.xpose.msra.mxu0 0.0
    %661 = vmatprep.subr.mxu0 0.0
    %662 = vmatpush2.xpose.msra.mxu0 0.0
    %663 = vmatprep.subr.mxu0 0.0
    %664 = vmatpush2.xpose.msra.mxu0 0.0
    %665 = vmatprep.subr.mxu0 0.0
    %666 = vmatpush2.xpose.msra.mxu0 0.0
    %667 = vmatprep.subr.mxu0 0.0
    %668 = vmatpush2.xpose.msra.mxu0 0.0
    %669 = vmatprep.subr.mxu0 0.0
    %670 = vmatpush2.xpose.msra.mxu0 0.0
    %671 = vmatprep.subr.mxu0 0.0
    %672 = vmatpush2.xpose.msra.mxu0 0.0
    %673 = vmatprep.subr.mxu0 0.0
    %674 = vmatpush2.xpose.msra.mxu0 0.0
    %675 = vmatprep.subr.mxu0 0.0
    %676 = vmatpush2.xpose.msra.mxu0 0.0
    %677 = vmatprep.subr.mxu0 0.0
    %678 = vmatpush2.xpose.msra.mxu0 0.0
    %679 = vmatprep.mubr.f32.mxu0 0.0
    %680 = vmatmul.mubr.f32.gmra.mxu0 %v611
    %v681 = vpop.f32.mrf.mxu0
    %v682 = vadd.f32 0.0, %v681
    %v683 = vpop.f32.mrf.mxu0
    %684 = vdwg.mxu0
    %685 = vrot.lane.b32.xlu0 %v273, 120
    %v686 = vpop.permute.xlu0 %685
    %687 = vrot.lane.b32.xlu0 %v273, 88
    %v688 = vpop.permute.xlu0 %687
    %v689 = vsel %vm279, %v686, 0
    %v691 = vsel %vm279, %v688, 0
    %693 = vmatprep.subr.mxu0 0.0
    %694 = vmatpush1.xpose.msra.mxu0 0.0
    %695 = vmatprep.subr.mxu0 0.0
    %696 = vmatpush1.xpose.msra.mxu0 0.0
    %697 = vmatprep.subr.mxu0 0.0
    %698 = vmatpush1.xpose.msra.mxu0 0.0
    %699 = vmatprep.subr.mxu0 0.0
    %700 = vmatpush1.xpose.msra.mxu0 0.0
    %701 = vmatprep.subr.mxu0 0.0
    %702 = vmatpush1.xpose.msra.mxu0 0.0
    %703 = vmatprep.subr.mxu0 0.0
    %704 = vmatpush1.xpose.msra.mxu0 0.0
    %705 = vmatprep.subr.mxu0 0.0
    %706 = vmatpush1.xpose.msra.mxu0 0.0
    %707 = vmatprep.subr.mxu0 0.0
    %708 = vmatpush1.xpose.msra.mxu0 0.0
    %709 = vmatprep.subr.mxu0 0.0
    %710 = vmatpush1.xpose.msra.mxu0 0.0
    %711 = vmatprep.subr.mxu0 0.0
    %712 = vmatpush1.xpose.msra.mxu0 0.0
    %713 = vmatprep.subr.mxu0 0.0
    %714 = vmatpush1.xpose.msra.mxu0 0.0
    %715 = vmatprep.subr.mxu0 0.0
    %716 = vmatpush1.xpose.msra.mxu0 0.0
    %717 = vmatprep.subr.mxu0 0.0
    %718 = vmatpush1.xpose.msra.mxu0 0.0
    %719 = vmatprep.subr.mxu0 0.0
    %720 = vmatpush1.xpose.msra.mxu0 0.0
    %721 = vmatprep.subr.mxu0 0.0
    %722 = vmatpush1.xpose.msra.mxu0 0.0
    %723 = vmatprep.subr.mxu0 0.0
    %724 = vmatpush1.xpose.msra.mxu0 %v691
    %725 = vmatprep.subr.mxu0 0.0
    %726 = vmatpush2.xpose.msra.mxu0 0.0
    %727 = vmatprep.subr.mxu0 0.0
    %728 = vmatpush2.xpose.msra.mxu0 0.0
    %729 = vmatprep.subr.mxu0 0.0
    %730 = vmatpush2.xpose.msra.mxu0 0.0
    %731 = vmatprep.subr.mxu0 0.0
    %732 = vmatpush2.xpose.msra.mxu0 0.0
    %733 = vmatprep.subr.mxu0 0.0
    %734 = vmatpush2.xpose.msra.mxu0 0.0
    %735 = vmatprep.subr.mxu0 0.0
    %736 = vmatpush2.xpose.msra.mxu0 0.0
    %737 = vmatprep.subr.mxu0 0.0
    %738 = vmatpush2.xpose.msra.mxu0 0.0
    %739 = vmatprep.subr.mxu0 0.0
    %740 = vmatpush2.xpose.msra.mxu0 0.0
    %741 = vmatprep.subr.mxu0 0.0
    %742 = vmatpush2.xpose.msra.mxu0 0.0
    %743 = vmatprep.subr.mxu0 0.0
    %744 = vmatpush2.xpose.msra.mxu0 0.0
    %745 = vmatprep.subr.mxu0 0.0
    %746 = vmatpush2.xpose.msra.mxu0 0.0
    %747 = vmatprep.subr.mxu0 0.0
    %748 = vmatpush2.xpose.msra.mxu0 0.0
    %749 = vmatprep.subr.mxu0 0.0
    %750 = vmatpush2.xpose.msra.mxu0 0.0
    %751 = vmatprep.subr.mxu0 0.0
    %752 = vmatpush2.xpose.msra.mxu0 0.0
    %753 = vmatprep.subr.mxu0 0.0
    %754 = vmatpush2.xpose.msra.mxu0 0.0
    %755 = vmatprep.subr.mxu0 0.0
    %756 = vmatpush2.xpose.msra.mxu0 0.0
    %757 = vmatprep.mubr.f32.mxu0 0.0
    %758 = vmatmul.mubr.f32.gmra.mxu0 %v689
    %v759 = vpop.f32.mrf.mxu0
    %v760 = vadd.f32 0.0, %v759
    %v761 = vpop.f32.mrf.mxu0
    %762 = vdwg.mxu0
    %v763 = vmul.f32 %v682, 0.35355338
    %v764 = vmul.f32 %v760, 0.35355338
    %v765 = vsel %vm279, %v763, -inf
    %766 = vmax.xlane.f32.xlu0 %v765
    %v767 = vpop.xlane.xlu0 %766
    %v768 = vsel %vm279, %v764, -inf
    %769 = vmax.xlane.f32.xlu0 %v768
    %v770 = vpop.xlane.xlu0 %769
    %v771 = vsub.f32 %v763, %v767
    %v772 = vsub.f32 %v764, %v770
    %v773 = vmul.f32 %v771, 1.442695
    %v774 = vpow.pop %v773
    %v775 = vmul.f32 %v772, 1.442695
    %v776 = vpow.pop %v775
    %v777 = vsel %vm279, %v774, 0.0
    %778 = vadd.xlane.f32.xlu0 %v777
    %v779 = vpop.xlane.xlu0 %778
    %v780 = vsel %vm279, %v776, 0.0
    %781 = vadd.xlane.f32.xlu0 %v780
    %v782 = vpop.xlane.xlu0 %781
    %v783 = vrcp.pop %v779
    %v784 = vrcp.pop %v782
    %v785 = vmul.f32 %v774, %v783
    %v786 = vmul.f32 %v776, %v784
    %787 = vrot.lane.b32.xlu0 %v268, 56
    %v788 = vpop.permute.xlu0 %787
    %v791 = vsel %vm279, %v785, 0
    %793 = vmatprep.subr.mxu0 0.0
    %794 = vmatpush1.msra.mxu0 0.0
    %795 = vmatprep.subr.mxu0 0.0
    %796 = vmatpush1.msra.mxu0 0.0
    %797 = vmatprep.subr.mxu0 0.0
    %798 = vmatpush1.msra.mxu0 0.0
    %799 = vmatprep.subr.mxu0 0.0
    %800 = vmatpush1.msra.mxu0 0.0
    %801 = vmatprep.subr.mxu0 0.0
    %802 = vmatpush1.msra.mxu0 0.0
    %803 = vmatprep.subr.mxu0 0.0
    %804 = vmatpush1.msra.mxu0 0.0
    %805 = vmatprep.subr.mxu0 0.0
    %806 = vmatpush1.msra.mxu0 0.0
    %807 = vmatprep.subr.mxu0 0.0
    %808 = vmatpush1.msra.mxu0 0.0
    %809 = vmatprep.subr.mxu0 0.0
    %810 = vmatpush1.msra.mxu0 0.0
    %811 = vmatprep.subr.mxu0 0.0
    %812 = vmatpush1.msra.mxu0 0.0
    %813 = vmatprep.subr.mxu0 0.0
    %814 = vmatpush1.msra.mxu0 0.0
    %815 = vmatprep.subr.mxu0 0.0
    %816 = vmatpush1.msra.mxu0 0.0
    %817 = vmatprep.subr.mxu0 0.0
    %818 = vmatpush1.msra.mxu0 0.0
    %819 = vmatprep.subr.mxu0 0.0
    %820 = vmatpush1.msra.mxu0 0.0
    %821 = vmatprep.subr.mxu0 0.0
    %822 = vmatpush1.msra.mxu0 0.0
    %823 = vmatprep.subr.mxu0 0.0
    %824 = vmatpush1.msra.mxu0 %v788
    %825 = vmatprep.subr.mxu0 0.0
    %826 = vmatpush2.msra.mxu0 0.0
    %827 = vmatprep.subr.mxu0 0.0
    %828 = vmatpush2.msra.mxu0 0.0
    %829 = vmatprep.subr.mxu0 0.0
    %830 = vmatpush2.msra.mxu0 0.0
    %831 = vmatprep.subr.mxu0 0.0
    %832 = vmatpush2.msra.mxu0 0.0
    %833 = vmatprep.subr.mxu0 0.0
    %834 = vmatpush2.msra.mxu0 0.0
    %835 = vmatprep.subr.mxu0 0.0
    %836 = vmatpush2.msra.mxu0 0.0
    %837 = vmatprep.subr.mxu0 0.0
    %838 = vmatpush2.msra.mxu0 0.0
    %839 = vmatprep.subr.mxu0 0.0
    %840 = vmatpush2.msra.mxu0 0.0
    %841 = vmatprep.subr.mxu0 0.0
    %842 = vmatpush2.msra.mxu0 0.0
    %843 = vmatprep.subr.mxu0 0.0
    %844 = vmatpush2.msra.mxu0 0.0
    %845 = vmatprep.subr.mxu0 0.0
    %846 = vmatpush2.msra.mxu0 0.0
    %847 = vmatprep.subr.mxu0 0.0
    %848 = vmatpush2.msra.mxu0 0.0
    %849 = vmatprep.subr.mxu0 0.0
    %850 = vmatpush2.msra.mxu0 0.0
    %851 = vmatprep.subr.mxu0 0.0
    %852 = vmatpush2.msra.mxu0 0.0
    %853 = vmatprep.subr.mxu0 0.0
    %854 = vmatpush2.msra.mxu0 0.0
    %855 = vmatprep.subr.mxu0 0.0
    %856 = vmatpush2.msra.mxu0 0.0
    %857 = vmatprep.mubr.f32.mxu0 0.0
    %858 = vmatmul.mubr.f32.gmra.mxu0 %v791
    %v859 = vpop.f32.mrf.mxu0
    %v860 = vadd.f32 0.0, %v859
    %v861 = vpop.f32.mrf.mxu0
    %862 = vdwg.mxu0
    %863 = vrot.lane.b32.xlu0 %v273, 56
    %v864 = vpop.permute.xlu0 %863
    %v867 = vsel %vm279, %v786, 0
    %869 = vmatprep.subr.mxu0 0.0
    %870 = vmatpush1.msra.mxu0 0.0
    %871 = vmatprep.subr.mxu0 0.0
    %872 = vmatpush1.msra.mxu0 0.0
    %873 = vmatprep.subr.mxu0 0.0
    %874 = vmatpush1.msra.mxu0 0.0
    %875 = vmatprep.subr.mxu0 0.0
    %876 = vmatpush1.msra.mxu0 0.0
    %877 = vmatprep.subr.mxu0 0.0
    %878 = vmatpush1.msra.mxu0 0.0
    %879 = vmatprep.subr.mxu0 0.0
    %880 = vmatpush1.msra.mxu0 0.0
    %881 = vmatprep.subr.mxu0 0.0
    %882 = vmatpush1.msra.mxu0 0.0
    %883 = vmatprep.subr.mxu0 0.0
    %884 = vmatpush1.msra.mxu0 0.0
    %885 = vmatprep.subr.mxu0 0.0
    %886 = vmatpush1.msra.mxu0 0.0
    %887 = vmatprep.subr.mxu0 0.0
    %888 = vmatpush1.msra.mxu0 0.0
    %889 = vmatprep.subr.mxu0 0.0
    %890 = vmatpush1.msra.mxu0 0.0
    %891 = vmatprep.subr.mxu0 0.0
    %892 = vmatpush1.msra.mxu0 0.0
    %893 = vmatprep.subr.mxu0 0.0
    %894 = vmatpush1.msra.mxu0 0.0
    %895 = vmatprep.subr.mxu0 0.0
    %896 = vmatpush1.msra.mxu0 0.0
    %897 = vmatprep.subr.mxu0 0.0
    %898 = vmatpush1.msra.mxu0 0.0
    %899 = vmatprep.subr.mxu0 0.0
    %900 = vmatpush1.msra.mxu0 %v864
    %901 = vmatprep.subr.mxu0 0.0
    %902 = vmatpush2.msra.mxu0 0.0
    %903 = vmatprep.subr.mxu0 0.0
    %904 = vmatpush2.msra.mxu0 0.0
    %905 = vmatprep.subr.mxu0 0.0
    %906 = vmatpush2.msra.mxu0 0.0
    %907 = vmatprep.subr.mxu0 0.0
    %908 = vmatpush2.msra.mxu0 0.0
    %909 = vmatprep.subr.mxu0 0.0
    %910 = vmatpush2.msra.mxu0 0.0
    %911 = vmatprep.subr.mxu0 0.0
    %912 = vmatpush2.msra.mxu0 0.0
    %913 = vmatprep.subr.mxu0 0.0
    %914 = vmatpush2.msra.mxu0 0.0
    %915 = vmatprep.subr.mxu0 0.0
    %916 = vmatpush2.msra.mxu0 0.0
    %917 = vmatprep.subr.mxu0 0.0
    %918 = vmatpush2.msra.mxu0 0.0
    %919 = vmatprep.subr.mxu0 0.0
    %920 = vmatpush2.msra.mxu0 0.0
    %921 = vmatprep.subr.mxu0 0.0
    %922 = vmatpush2.msra.mxu0 0.0
    %923 = vmatprep.subr.mxu0 0.0
    %924 = vmatpush2.msra.mxu0 0.0
    %925 = vmatprep.subr.mxu0 0.0
    %926 = vmatpush2.msra.mxu0 0.0
    %927 = vmatprep.subr.mxu0 0.0
    %928 = vmatpush2.msra.mxu0 0.0
    %929 = vmatprep.subr.mxu0 0.0
    %930 = vmatpush2.msra.mxu0 0.0
    %931 = vmatprep.subr.mxu0 0.0
    %932 = vmatpush2.msra.mxu0 0.0
    %933 = vmatprep.mubr.f32.mxu0 0.0
    %934 = vmatmul.mubr.f32.gmra.mxu0 %v867
    %v935 = vpop.f32.mrf.mxu0
    %v936 = vadd.f32 0.0, %v935
    %v937 = vpop.f32.mrf.mxu0
    %938 = vdwg.mxu0
    %939 = vrot.lane.b32.xlu0 %v268, 112
    %v940 = vpop.permute.xlu0 %939
    %941 = vrot.lane.b32.xlu0 %v268, 80
    %v942 = vpop.permute.xlu0 %941
    %v943 = vsel %vm279, %v940, 0
    %v945 = vsel %vm279, %v942, 0
    %947 = vmatprep.subr.mxu0 0.0
    %948 = vmatpush1.xpose.msra.mxu0 0.0
    %949 = vmatprep.subr.mxu0 0.0
    %950 = vmatpush1.xpose.msra.mxu0 0.0
    %951 = vmatprep.subr.mxu0 0.0
    %952 = vmatpush1.xpose.msra.mxu0 0.0
    %953 = vmatprep.subr.mxu0 0.0
    %954 = vmatpush1.xpose.msra.mxu0 0.0
    %955 = vmatprep.subr.mxu0 0.0
    %956 = vmatpush1.xpose.msra.mxu0 0.0
    %957 = vmatprep.subr.mxu0 0.0
    %958 = vmatpush1.xpose.msra.mxu0 0.0
    %959 = vmatprep.subr.mxu0 0.0
    %960 = vmatpush1.xpose.msra.mxu0 0.0
    %961 = vmatprep.subr.mxu0 0.0
    %962 = vmatpush1.xpose.msra.mxu0 0.0
    %963 = vmatprep.subr.mxu0 0.0
    %964 = vmatpush1.xpose.msra.mxu0 0.0
    %965 = vmatprep.subr.mxu0 0.0
    %966 = vmatpush1.xpose.msra.mxu0 0.0
    %967 = vmatprep.subr.mxu0 0.0
    %968 = vmatpush1.xpose.msra.mxu0 0.0
    %969 = vmatprep.subr.mxu0 0.0
    %970 = vmatpush1.xpose.msra.mxu0 0.0
    %971 = vmatprep.subr.mxu0 0.0
    %972 = vmatpush1.xpose.msra.mxu0 0.0
    %973 = vmatprep.subr.mxu0 0.0
    %974 = vmatpush1.xpose.msra.mxu0 0.0
    %975 = vmatprep.subr.mxu0 0.0
    %976 = vmatpush1.xpose.msra.mxu0 0.0
    %977 = vmatprep.subr.mxu0 0.0
    %978 = vmatpush1.xpose.msra.mxu0 %v945
    %979 = vmatprep.subr.mxu0 0.0
    %980 = vmatpush2.xpose.msra.mxu0 0.0
    %981 = vmatprep.subr.mxu0 0.0
    %982 = vmatpush2.xpose.msra.mxu0 0.0
    %983 = vmatprep.subr.mxu0 0.0
    %984 = vmatpush2.xpose.msra.mxu0 0.0
    %985 = vmatprep.subr.mxu0 0.0
    %986 = vmatpush2.xpose.msra.mxu0 0.0
    %987 = vmatprep.subr.mxu0 0.0
    %988 = vmatpush2.xpose.msra.mxu0 0.0
    %989 = vmatprep.subr.mxu0 0.0
    %990 = vmatpush2.xpose.msra.mxu0 0.0
    %991 = vmatprep.subr.mxu0 0.0
    %992 = vmatpush2.xpose.msra.mxu0 0.0
    %993 = vmatprep.subr.mxu0 0.0
    %994 = vmatpush2.xpose.msra.mxu0 0.0
    %995 = vmatprep.subr.mxu0 0.0
    %996 = vmatpush2.xpose.msra.mxu0 0.0
    %997 = vmatprep.subr.mxu0 0.0
    %998 = vmatpush2.xpose.msra.mxu0 0.0
    %999 = vmatprep.subr.mxu0 0.0
    %1000 = vmatpush2.xpose.msra.mxu0 0.0
    %1001 = vmatprep.subr.mxu0 0.0
    %1002 = vmatpush2.xpose.msra.mxu0 0.0
    %1003 = vmatprep.subr.mxu0 0.0
    %1004 = vmatpush2.xpose.msra.mxu0 0.0
    %1005 = vmatprep.subr.mxu0 0.0
    %1006 = vmatpush2.xpose.msra.mxu0 0.0
    %1007 = vmatprep.subr.mxu0 0.0
    %1008 = vmatpush2.xpose.msra.mxu0 0.0
    %1009 = vmatprep.subr.mxu0 0.0
    %1010 = vmatpush2.xpose.msra.mxu0 0.0
    %1011 = vmatprep.mubr.f32.mxu0 0.0
    %1012 = vmatmul.mubr.f32.gmra.mxu0 %v943
    %v1013 = vpop.f32.mrf.mxu0
    %v1014 = vadd.f32 0.0, %v1013
    %v1015 = vpop.f32.mrf.mxu0
    %1016 = vdwg.mxu0
    %1017 = vrot.lane.b32.xlu0 %v273, 112
    %v1018 = vpop.permute.xlu0 %1017
    %1019 = vrot.lane.b32.xlu0 %v273, 80
    %v1020 = vpop.permute.xlu0 %1019
    %v1021 = vsel %vm279, %v1018, 0
    %v1023 = vsel %vm279, %v1020, 0
    %1025 = vmatprep.subr.mxu0 0.0
    %1026 = vmatpush1.xpose.msra.mxu0 0.0
    %1027 = vmatprep.subr.mxu0 0.0
    %1028 = vmatpush1.xpose.msra.mxu0 0.0
    %1029 = vmatprep.subr.mxu0 0.0
    %1030 = vmatpush1.xpose.msra.mxu0 0.0
    %1031 = vmatprep.subr.mxu0 0.0
    %1032 = vmatpush1.xpose.msra.mxu0 0.0
    %1033 = vmatprep.subr.mxu0 0.0
    %1034 = vmatpush1.xpose.msra.mxu0 0.0
    %1035 = vmatprep.subr.mxu0 0.0
    %1036 = vmatpush1.xpose.msra.mxu0 0.0
    %1037 = vmatprep.subr.mxu0 0.0
    %1038 = vmatpush1.xpose.msra.mxu0 0.0
    %1039 = vmatprep.subr.mxu0 0.0
    %1040 = vmatpush1.xpose.msra.mxu0 0.0
    %1041 = vmatprep.subr.mxu0 0.0
    %1042 = vmatpush1.xpose.msra.mxu0 0.0
    %1043 = vmatprep.subr.mxu0 0.0
    %1044 = vmatpush1.xpose.msra.mxu0 0.0
    %1045 = vmatprep.subr.mxu0 0.0
    %1046 = vmatpush1.xpose.msra.mxu0 0.0
    %1047 = vmatprep.subr.mxu0 0.0
    %1048 = vmatpush1.xpose.msra.mxu0 0.0
    %1049 = vmatprep.subr.mxu0 0.0
    %1050 = vmatpush1.xpose.msra.mxu0 0.0
    %1051 = vmatprep.subr.mxu0 0.0
    %1052 = vmatpush1.xpose.msra.mxu0 0.0
    %1053 = vmatprep.subr.mxu0 0.0
    %1054 = vmatpush1.xpose.msra.mxu0 0.0
    %1055 = vmatprep.subr.mxu0 0.0
    %1056 = vmatpush1.xpose.msra.mxu0 %v1023
    %1057 = vmatprep.subr.mxu0 0.0
    %1058 = vmatpush2.xpose.msra.mxu0 0.0
    %1059 = vmatprep.subr.mxu0 0.0
    %1060 = vmatpush2.xpose.msra.mxu0 0.0
    %1061 = vmatprep.subr.mxu0 0.0
    %1062 = vmatpush2.xpose.msra.mxu0 0.0
    %1063 = vmatprep.subr.mxu0 0.0
    %1064 = vmatpush2.xpose.msra.mxu0 0.0
    %1065 = vmatprep.subr.mxu0 0.0
    %1066 = vmatpush2.xpose.msra.mxu0 0.0
    %1067 = vmatprep.subr.mxu0 0.0
    %1068 = vmatpush2.xpose.msra.mxu0 0.0
    %1069 = vmatprep.subr.mxu0 0.0
    %1070 = vmatpush2.xpose.msra.mxu0 0.0
    %1071 = vmatprep.subr.mxu0 0.0
    %1072 = vmatpush2.xpose.msra.mxu0 0.0
    %1073 = vmatprep.subr.mxu0 0.0
    %1074 = vmatpush2.xpose.msra.mxu0 0.0
    %1075 = vmatprep.subr.mxu0 0.0
    %1076 = vmatpush2.xpose.msra.mxu0 0.0
    %1077 = vmatprep.subr.mxu0 0.0
    %1078 = vmatpush2.xpose.msra.mxu0 0.0
    %1079 = vmatprep.subr.mxu0 0.0
    %1080 = vmatpush2.xpose.msra.mxu0 0.0
    %1081 = vmatprep.subr.mxu0 0.0
    %1082 = vmatpush2.xpose.msra.mxu0 0.0
    %1083 = vmatprep.subr.mxu0 0.0
    %1084 = vmatpush2.xpose.msra.mxu0 0.0
    %1085 = vmatprep.subr.mxu0 0.0
    %1086 = vmatpush2.xpose.msra.mxu0 0.0
    %1087 = vmatprep.subr.mxu0 0.0
    %1088 = vmatpush2.xpose.msra.mxu0 0.0
    %1089 = vmatprep.mubr.f32.mxu0 0.0
    %1090 = vmatmul.mubr.f32.gmra.mxu0 %v1021
    %v1091 = vpop.f32.mrf.mxu0
    %v1092 = vadd.f32 0.0, %v1091
    %v1093 = vpop.f32.mrf.mxu0
    %1094 = vdwg.mxu0
    %v1095 = vmul.f32 %v1014, 0.35355338
    %v1096 = vmul.f32 %v1092, 0.35355338
    %v1097 = vsel %vm279, %v1095, -inf
    %1098 = vmax.xlane.f32.xlu0 %v1097
    %v1099 = vpop.xlane.xlu0 %1098
    %v1100 = vsel %vm279, %v1096, -inf
    %1101 = vmax.xlane.f32.xlu0 %v1100
    %v1102 = vpop.xlane.xlu0 %1101
    %v1103 = vsub.f32 %v1095, %v1099
    %v1104 = vsub.f32 %v1096, %v1102
    %v1105 = vmul.f32 %v1103, 1.442695
    %v1106 = vpow.pop %v1105
    %v1107 = vmul.f32 %v1104, 1.442695
    %v1108 = vpow.pop %v1107
    %v1109 = vsel %vm279, %v1106, 0.0
    %1110 = vadd.xlane.f32.xlu0 %v1109
    %v1111 = vpop.xlane.xlu0 %1110
    %v1112 = vsel %vm279, %v1108, 0.0
    %1113 = vadd.xlane.f32.xlu0 %v1112
    %v1114 = vpop.xlane.xlu0 %1113
    %v1115 = vrcp.pop %v1111
    %v1116 = vrcp.pop %v1114
    %v1117 = vmul.f32 %v1106, %v1115
    %v1118 = vmul.f32 %v1108, %v1116
    %1119 = vrot.lane.b32.xlu0 %v268, 48
    %v1120 = vpop.permute.xlu0 %1119
    %v1123 = vsel %vm279, %v1117, 0
    %1125 = vmatprep.subr.mxu0 0.0
    %1126 = vmatpush1.msra.mxu0 0.0
    %1127 = vmatprep.subr.mxu0 0.0
    %1128 = vmatpush1.msra.mxu0 0.0
    %1129 = vmatprep.subr.mxu0 0.0
    %1130 = vmatpush1.msra.mxu0 0.0
    %1131 = vmatprep.subr.mxu0 0.0
    %1132 = vmatpush1.msra.mxu0 0.0
    %1133 = vmatprep.subr.mxu0 0.0
    %1134 = vmatpush1.msra.mxu0 0.0
    %1135 = vmatprep.subr.mxu0 0.0
    %1136 = vmatpush1.msra.mxu0 0.0
    %1137 = vmatprep.subr.mxu0 0.0
    %1138 = vmatpush1.msra.mxu0 0.0
    %1139 = vmatprep.subr.mxu0 0.0
    %1140 = vmatpush1.msra.mxu0 0.0
    %1141 = vmatprep.subr.mxu0 0.0
    %1142 = vmatpush1.msra.mxu0 0.0
    %1143 = vmatprep.subr.mxu0 0.0
    %1144 = vmatpush1.msra.mxu0 0.0
    %1145 = vmatprep.subr.mxu0 0.0
    %1146 = vmatpush1.msra.mxu0 0.0
    %1147 = vmatprep.subr.mxu0 0.0
    %1148 = vmatpush1.msra.mxu0 0.0
    %1149 = vmatprep.subr.mxu0 0.0
    %1150 = vmatpush1.msra.mxu0 0.0
    %1151 = vmatprep.subr.mxu0 0.0
    %1152 = vmatpush1.msra.mxu0 0.0
    %1153 = vmatprep.subr.mxu0 0.0
    %1154 = vmatpush1.msra.mxu0 0.0
    %1155 = vmatprep.subr.mxu0 0.0
    %1156 = vmatpush1.msra.mxu0 %v1120
    %1157 = vmatprep.subr.mxu0 0.0
    %1158 = vmatpush2.msra.mxu0 0.0
    %1159 = vmatprep.subr.mxu0 0.0
    %1160 = vmatpush2.msra.mxu0 0.0
    %1161 = vmatprep.subr.mxu0 0.0
    %1162 = vmatpush2.msra.mxu0 0.0
    %1163 = vmatprep.subr.mxu0 0.0
    %1164 = vmatpush2.msra.mxu0 0.0
    %1165 = vmatprep.subr.mxu0 0.0
    %1166 = vmatpush2.msra.mxu0 0.0
    %1167 = vmatprep.subr.mxu0 0.0
    %1168 = vmatpush2.msra.mxu0 0.0
    %1169 = vmatprep.subr.mxu0 0.0
    %1170 = vmatpush2.msra.mxu0 0.0
    %1171 = vmatprep.subr.mxu0 0.0
    %1172 = vmatpush2.msra.mxu0 0.0
    %1173 = vmatprep.subr.mxu0 0.0
    %1174 = vmatpush2.msra.mxu0 0.0
    %1175 = vmatprep.subr.mxu0 0.0
    %1176 = vmatpush2.msra.mxu0 0.0
    %1177 = vmatprep.subr.mxu0 0.0
    %1178 = vmatpush2.msra.mxu0 0.0
    %1179 = vmatprep.subr.mxu0 0.0
    %1180 = vmatpush2.msra.mxu0 0.0
    %1181 = vmatprep.subr.mxu0 0.0
    %1182 = vmatpush2.msra.mxu0 0.0
    %1183 = vmatprep.subr.mxu0 0.0
    %1184 = vmatpush2.msra.mxu0 0.0
    %1185 = vmatprep.subr.mxu0 0.0
    %1186 = vmatpush2.msra.mxu0 0.0
    %1187 = vmatprep.subr.mxu0 0.0
    %1188 = vmatpush2.msra.mxu0 0.0
    %1189 = vmatprep.mubr.f32.mxu0 0.0
    %1190 = vmatmul.mubr.f32.gmra.mxu0 %v1123
    %v1191 = vpop.f32.mrf.mxu0
    %v1192 = vadd.f32 0.0, %v1191
    %v1193 = vpop.f32.mrf.mxu0
    %1194 = vdwg.mxu0
    %1195 = vrot.lane.b32.xlu0 %v273, 48
    %v1196 = vpop.permute.xlu0 %1195
    %v1199 = vsel %vm279, %v1118, 0
    %1201 = vmatprep.subr.mxu0 0.0
    %1202 = vmatpush1.msra.mxu0 0.0
    %1203 = vmatprep.subr.mxu0 0.0
    %1204 = vmatpush1.msra.mxu0 0.0
    %1205 = vmatprep.subr.mxu0 0.0
    %1206 = vmatpush1.msra.mxu0 0.0
    %1207 = vmatprep.subr.mxu0 0.0
    %1208 = vmatpush1.msra.mxu0 0.0
    %1209 = vmatprep.subr.mxu0 0.0
    %1210 = vmatpush1.msra.mxu0 0.0
    %1211 = vmatprep.subr.mxu0 0.0
    %1212 = vmatpush1.msra.mxu0 0.0
    %1213 = vmatprep.subr.mxu0 0.0
    %1214 = vmatpush1.msra.mxu0 0.0
    %1215 = vmatprep.subr.mxu0 0.0
    %1216 = vmatpush1.msra.mxu0 0.0
    %1217 = vmatprep.subr.mxu0 0.0
    %1218 = vmatpush1.msra.mxu0 0.0
    %1219 = vmatprep.subr.mxu0 0.0
    %1220 = vmatpush1.msra.mxu0 0.0
    %1221 = vmatprep.subr.mxu0 0.0
    %1222 = vmatpush1.msra.mxu0 0.0
    %1223 = vmatprep.subr.mxu0 0.0
    %1224 = vmatpush1.msra.mxu0 0.0
    %1225 = vmatprep.subr.mxu0 0.0
    %1226 = vmatpush1.msra.mxu0 0.0
    %1227 = vmatprep.subr.mxu0 0.0
    %1228 = vmatpush1.msra.mxu0 0.0
    %1229 = vmatprep.subr.mxu0 0.0
    %1230 = vmatpush1.msra.mxu0 0.0
    %1231 = vmatprep.subr.mxu0 0.0
    %1232 = vmatpush1.msra.mxu0 %v1196
    %1233 = vmatprep.subr.mxu0 0.0
    %1234 = vmatpush2.msra.mxu0 0.0
    %1235 = vmatprep.subr.mxu0 0.0
    %1236 = vmatpush2.msra.mxu0 0.0
    %1237 = vmatprep.subr.mxu0 0.0
    %1238 = vmatpush2.msra.mxu0 0.0
    %1239 = vmatprep.subr.mxu0 0.0
    %1240 = vmatpush2.msra.mxu0 0.0
    %1241 = vmatprep.subr.mxu0 0.0
    %1242 = vmatpush2.msra.mxu0 0.0
    %1243 = vmatprep.subr.mxu0 0.0
    %1244 = vmatpush2.msra.mxu0 0.0
    %1245 = vmatprep.subr.mxu0 0.0
    %1246 = vmatpush2.msra.mxu0 0.0
    %1247 = vmatprep.subr.mxu0 0.0
    %1248 = vmatpush2.msra.mxu0 0.0
    %1249 = vmatprep.subr.mxu0 0.0
    %1250 = vmatpush2.msra.mxu0 0.0
    %1251 = vmatprep.subr.mxu0 0.0
    %1252 = vmatpush2.msra.mxu0 0.0
    %1253 = vmatprep.subr.mxu0 0.0
    %1254 = vmatpush2.msra.mxu0 0.0
    %1255 = vmatprep.subr.mxu0 0.0
    %1256 = vmatpush2.msra.mxu0 0.0
    %1257 = vmatprep.subr.mxu0 0.0
    %1258 = vmatpush2.msra.mxu0 0.0
    %1259 = vmatprep.subr.mxu0 0.0
    %1260 = vmatpush2.msra.mxu0 0.0
    %1261 = vmatprep.subr.mxu0 0.0
    %1262 = vmatpush2.msra.mxu0 0.0
    %1263 = vmatprep.subr.mxu0 0.0
    %1264 = vmatpush2.msra.mxu0 0.0
    %1265 = vmatprep.mubr.f32.mxu0 0.0
    %1266 = vmatmul.mubr.f32.gmra.mxu0 %v1199
    %v1267 = vpop.f32.mrf.mxu0
    %v1268 = vadd.f32 0.0, %v1267
    %v1269 = vpop.f32.mrf.mxu0
    %1270 = vdwg.mxu0
    %1271 = vrot.lane.b32.xlu0 %v268, 104
    %v1272 = vpop.permute.xlu0 %1271
    %1273 = vrot.lane.b32.xlu0 %v268, 72
    %v1274 = vpop.permute.xlu0 %1273
    %v1275 = vsel %vm279, %v1272, 0
    %v1277 = vsel %vm279, %v1274, 0
    %1279 = vmatprep.subr.mxu0 0.0
    %1280 = vmatpush1.xpose.msra.mxu0 0.0
    %1281 = vmatprep.subr.mxu0 0.0
    %1282 = vmatpush1.xpose.msra.mxu0 0.0
    %1283 = vmatprep.subr.mxu0 0.0
    %1284 = vmatpush1.xpose.msra.mxu0 0.0
    %1285 = vmatprep.subr.mxu0 0.0
    %1286 = vmatpush1.xpose.msra.mxu0 0.0
    %1287 = vmatprep.subr.mxu0 0.0
    %1288 = vmatpush1.xpose.msra.mxu0 0.0
    %1289 = vmatprep.subr.mxu0 0.0
    %1290 = vmatpush1.xpose.msra.mxu0 0.0
    %1291 = vmatprep.subr.mxu0 0.0
    %1292 = vmatpush1.xpose.msra.mxu0 0.0
    %1293 = vmatprep.subr.mxu0 0.0
    %1294 = vmatpush1.xpose.msra.mxu0 0.0
    %1295 = vmatprep.subr.mxu0 0.0
    %1296 = vmatpush1.xpose.msra.mxu0 0.0
    %1297 = vmatprep.subr.mxu0 0.0
    %1298 = vmatpush1.xpose.msra.mxu0 0.0
    %1299 = vmatprep.subr.mxu0 0.0
    %1300 = vmatpush1.xpose.msra.mxu0 0.0
    %1301 = vmatprep.subr.mxu0 0.0
    %1302 = vmatpush1.xpose.msra.mxu0 0.0
    %1303 = vmatprep.subr.mxu0 0.0
    %1304 = vmatpush1.xpose.msra.mxu0 0.0
    %1305 = vmatprep.subr.mxu0 0.0
    %1306 = vmatpush1.xpose.msra.mxu0 0.0
    %1307 = vmatprep.subr.mxu0 0.0
    %1308 = vmatpush1.xpose.msra.mxu0 0.0
    %1309 = vmatprep.subr.mxu0 0.0
    %1310 = vmatpush1.xpose.msra.mxu0 %v1277
    %1311 = vmatprep.subr.mxu0 0.0
    %1312 = vmatpush2.xpose.msra.mxu0 0.0
    %1313 = vmatprep.subr.mxu0 0.0
    %1314 = vmatpush2.xpose.msra.mxu0 0.0
    %1315 = vmatprep.subr.mxu0 0.0
    %1316 = vmatpush2.xpose.msra.mxu0 0.0
    %1317 = vmatprep.subr.mxu0 0.0
    %1318 = vmatpush2.xpose.msra.mxu0 0.0
    %1319 = vmatprep.subr.mxu0 0.0
    %1320 = vmatpush2.xpose.msra.mxu0 0.0
    %1321 = vmatprep.subr.mxu0 0.0
    %1322 = vmatpush2.xpose.msra.mxu0 0.0
    %1323 = vmatprep.subr.mxu0 0.0
    %1324 = vmatpush2.xpose.msra.mxu0 0.0
    %1325 = vmatprep.subr.mxu0 0.0
    %1326 = vmatpush2.xpose.msra.mxu0 0.0
    %1327 = vmatprep.subr.mxu0 0.0
    %1328 = vmatpush2.xpose.msra.mxu0 0.0
    %1329 = vmatprep.subr.mxu0 0.0
    %1330 = vmatpush2.xpose.msra.mxu0 0.0
    %1331 = vmatprep.subr.mxu0 0.0
    %1332 = vmatpush2.xpose.msra.mxu0 0.0
    %1333 = vmatprep.subr.mxu0 0.0
    %1334 = vmatpush2.xpose.msra.mxu0 0.0
    %1335 = vmatprep.subr.mxu0 0.0
    %1336 = vmatpush2.xpose.msra.mxu0 0.0
    %1337 = vmatprep.subr.mxu0 0.0
    %1338 = vmatpush2.xpose.msra.mxu0 0.0
    %1339 = vmatprep.subr.mxu0 0.0
    %1340 = vmatpush2.xpose.msra.mxu0 0.0
    %1341 = vmatprep.subr.mxu0 0.0
    %1342 = vmatpush2.xpose.msra.mxu0 0.0
    %1343 = vmatprep.mubr.f32.mxu0 0.0
    %1344 = vmatmul.mubr.f32.gmra.mxu0 %v1275
    %v1345 = vpop.f32.mrf.mxu0
    %v1346 = vadd.f32 0.0, %v1345
    %v1347 = vpop.f32.mrf.mxu0
    %1348 = vdwg.mxu0
    %1349 = vrot.lane.b32.xlu0 %v273, 104
    %v1350 = vpop.permute.xlu0 %1349
    %1351 = vrot.lane.b32.xlu0 %v273, 72
    %v1352 = vpop.permute.xlu0 %1351
    %v1353 = vsel %vm279, %v1350, 0
    %v1355 = vsel %vm279, %v1352, 0
    %1357 = vmatprep.subr.mxu0 0.0
    %1358 = vmatpush1.xpose.msra.mxu0 0.0
    %1359 = vmatprep.subr.mxu0 0.0
    %1360 = vmatpush1.xpose.msra.mxu0 0.0
    %1361 = vmatprep.subr.mxu0 0.0
    %1362 = vmatpush1.xpose.msra.mxu0 0.0
    %1363 = vmatprep.subr.mxu0 0.0
    %1364 = vmatpush1.xpose.msra.mxu0 0.0
    %1365 = vmatprep.subr.mxu0 0.0
    %1366 = vmatpush1.xpose.msra.mxu0 0.0
    %1367 = vmatprep.subr.mxu0 0.0
    %1368 = vmatpush1.xpose.msra.mxu0 0.0
    %1369 = vmatprep.subr.mxu0 0.0
    %1370 = vmatpush1.xpose.msra.mxu0 0.0
    %1371 = vmatprep.subr.mxu0 0.0
    %1372 = vmatpush1.xpose.msra.mxu0 0.0
    %1373 = vmatprep.subr.mxu0 0.0
    %1374 = vmatpush1.xpose.msra.mxu0 0.0
    %1375 = vmatprep.subr.mxu0 0.0
    %1376 = vmatpush1.xpose.msra.mxu0 0.0
    %1377 = vmatprep.subr.mxu0 0.0
    %1378 = vmatpush1.xpose.msra.mxu0 0.0
    %1379 = vmatprep.subr.mxu0 0.0
    %1380 = vmatpush1.xpose.msra.mxu0 0.0
    %1381 = vmatprep.subr.mxu0 0.0
    %1382 = vmatpush1.xpose.msra.mxu0 0.0
    %1383 = vmatprep.subr.mxu0 0.0
    %1384 = vmatpush1.xpose.msra.mxu0 0.0
    %1385 = vmatprep.subr.mxu0 0.0
    %1386 = vmatpush1.xpose.msra.mxu0 0.0
    %1387 = vmatprep.subr.mxu0 0.0
    %1388 = vmatpush1.xpose.msra.mxu0 %v1355
    %1389 = vmatprep.subr.mxu0 0.0
    %1390 = vmatpush2.xpose.msra.mxu0 0.0
    %1391 = vmatprep.subr.mxu0 0.0
    %1392 = vmatpush2.xpose.msra.mxu0 0.0
    %1393 = vmatprep.subr.mxu0 0.0
    %1394 = vmatpush2.xpose.msra.mxu0 0.0
    %1395 = vmatprep.subr.mxu0 0.0
    %1396 = vmatpush2.xpose.msra.mxu0 0.0
    %1397 = vmatprep.subr.mxu0 0.0
    %1398 = vmatpush2.xpose.msra.mxu0 0.0
    %1399 = vmatprep.subr.mxu0 0.0
    %1400 = vmatpush2.xpose.msra.mxu0 0.0
    %1401 = vmatprep.subr.mxu0 0.0
    %1402 = vmatpush2.xpose.msra.mxu0 0.0
    %1403 = vmatprep.subr.mxu0 0.0
    %1404 = vmatpush2.xpose.msra.mxu0 0.0
    %1405 = vmatprep.subr.mxu0 0.0
    %1406 = vmatpush2.xpose.msra.mxu0 0.0
    %1407 = vmatprep.subr.mxu0 0.0
    %1408 = vmatpush2.xpose.msra.mxu0 0.0
    %1409 = vmatprep.subr.mxu0 0.0
    %1410 = vmatpush2.xpose.msra.mxu0 0.0
    %1411 = vmatprep.subr.mxu0 0.0
    %1412 = vmatpush2.xpose.msra.mxu0 0.0
    %1413 = vmatprep.subr.mxu0 0.0
    %1414 = vmatpush2.xpose.msra.mxu0 0.0
    %1415 = vmatprep.subr.mxu0 0.0
    %1416 = vmatpush2.xpose.msra.mxu0 0.0
    %1417 = vmatprep.subr.mxu0 0.0
    %1418 = vmatpush2.xpose.msra.mxu0 0.0
    %1419 = vmatprep.subr.mxu0 0.0
    %1420 = vmatpush2.xpose.msra.mxu0 0.0
    %1421 = vmatprep.mubr.f32.mxu0 0.0
    %1422 = vmatmul.mubr.f32.gmra.mxu0 %v1353
    %v1423 = vpop.f32.mrf.mxu0
    %v1424 = vadd.f32 0.0, %v1423
    %v1425 = vpop.f32.mrf.mxu0
    %1426 = vdwg.mxu0
    %v1427 = vmul.f32 %v1346, 0.35355338
    %v1428 = vmul.f32 %v1424, 0.35355338
    %v1429 = vsel %vm279, %v1427, -inf
    %1430 = vmax.xlane.f32.xlu0 %v1429
    %v1431 = vpop.xlane.xlu0 %1430
    %v1432 = vsel %vm279, %v1428, -inf
    %1433 = vmax.xlane.f32.xlu0 %v1432
    %v1434 = vpop.xlane.xlu0 %1433
    %v1435 = vsub.f32 %v1427, %v1431
    %v1436 = vsub.f32 %v1428, %v1434
    %v1437 = vmul.f32 %v1435, 1.442695
    %v1438 = vpow.pop %v1437
    %v1439 = vmul.f32 %v1436, 1.442695
    %v1440 = vpow.pop %v1439
    %v1441 = vsel %vm279, %v1438, 0.0
    %1442 = vadd.xlane.f32.xlu0 %v1441
    %v1443 = vpop.xlane.xlu0 %1442
    %v1444 = vsel %vm279, %v1440, 0.0
    %1445 = vadd.xlane.f32.xlu0 %v1444
    %v1446 = vpop.xlane.xlu0 %1445
    %v1447 = vrcp.pop %v1443
    %v1448 = vrcp.pop %v1446
    %v1449 = vmul.f32 %v1438, %v1447
    %v1450 = vmul.f32 %v1440, %v1448
    %1451 = vrot.lane.b32.xlu0 %v268, 40
    %v1452 = vpop.permute.xlu0 %1451
    %v1455 = vsel %vm279, %v1449, 0
    %1457 = vmatprep.subr.mxu0 0.0
    %1458 = vmatpush1.msra.mxu0 0.0
    %1459 = vmatprep.subr.mxu0 0.0
    %1460 = vmatpush1.msra.mxu0 0.0
    %1461 = vmatprep.subr.mxu0 0.0
    %1462 = vmatpush1.msra.mxu0 0.0
    %1463 = vmatprep.subr.mxu0 0.0
    %1464 = vmatpush1.msra.mxu0 0.0
    %1465 = vmatprep.subr.mxu0 0.0
    %1466 = vmatpush1.msra.mxu0 0.0
    %1467 = vmatprep.subr.mxu0 0.0
    %1468 = vmatpush1.msra.mxu0 0.0
    %1469 = vmatprep.subr.mxu0 0.0
    %1470 = vmatpush1.msra.mxu0 0.0
    %1471 = vmatprep.subr.mxu0 0.0
    %1472 = vmatpush1.msra.mxu0 0.0
    %1473 = vmatprep.subr.mxu0 0.0
    %1474 = vmatpush1.msra.mxu0 0.0
    %1475 = vmatprep.subr.mxu0 0.0
    %1476 = vmatpush1.msra.mxu0 0.0
    %1477 = vmatprep.subr.mxu0 0.0
    %1478 = vmatpush1.msra.mxu0 0.0
    %1479 = vmatprep.subr.mxu0 0.0
    %1480 = vmatpush1.msra.mxu0 0.0
    %1481 = vmatprep.subr.mxu0 0.0
    %1482 = vmatpush1.msra.mxu0 0.0
    %1483 = vmatprep.subr.mxu0 0.0
    %1484 = vmatpush1.msra.mxu0 0.0
    %1485 = vmatprep.subr.mxu0 0.0
    %1486 = vmatpush1.msra.mxu0 0.0
    %1487 = vmatprep.subr.mxu0 0.0
    %1488 = vmatpush1.msra.mxu0 %v1452
    %1489 = vmatprep.subr.mxu0 0.0
    %1490 = vmatpush2.msra.mxu0 0.0
    %1491 = vmatprep.subr.mxu0 0.0
    %1492 = vmatpush2.msra.mxu0 0.0
    %1493 = vmatprep.subr.mxu0 0.0
    %1494 = vmatpush2.msra.mxu0 0.0
    %1495 = vmatprep.subr.mxu0 0.0
    %1496 = vmatpush2.msra.mxu0 0.0
    %1497 = vmatprep.subr.mxu0 0.0
    %1498 = vmatpush2.msra.mxu0 0.0
    %1499 = vmatprep.subr.mxu0 0.0
    %1500 = vmatpush2.msra.mxu0 0.0
    %1501 = vmatprep.subr.mxu0 0.0
    %1502 = vmatpush2.msra.mxu0 0.0
    %1503 = vmatprep.subr.mxu0 0.0
    %1504 = vmatpush2.msra.mxu0 0.0
    %1505 = vmatprep.subr.mxu0 0.0
    %1506 = vmatpush2.msra.mxu0 0.0
    %1507 = vmatprep.subr.mxu0 0.0
    %1508 = vmatpush2.msra.mxu0 0.0
    %1509 = vmatprep.subr.mxu0 0.0
    %1510 = vmatpush2.msra.mxu0 0.0
    %1511 = vmatprep.subr.mxu0 0.0
    %1512 = vmatpush2.msra.mxu0 0.0
    %1513 = vmatprep.subr.mxu0 0.0
    %1514 = vmatpush2.msra.mxu0 0.0
    %1515 = vmatprep.subr.mxu0 0.0
    %1516 = vmatpush2.msra.mxu0 0.0
    %1517 = vmatprep.subr.mxu0 0.0
    %1518 = vmatpush2.msra.mxu0 0.0
    %1519 = vmatprep.subr.mxu0 0.0
    %1520 = vmatpush2.msra.mxu0 0.0
    %1521 = vmatprep.mubr.f32.mxu0 0.0
    %1522 = vmatmul.mubr.f32.gmra.mxu0 %v1455
    %v1523 = vpop.f32.mrf.mxu0
    %v1524 = vadd.f32 0.0, %v1523
    %v1525 = vpop.f32.mrf.mxu0
    %1526 = vdwg.mxu0
    %1527 = vrot.lane.b32.xlu0 %v273, 40
    %v1528 = vpop.permute.xlu0 %1527
    %v1531 = vsel %vm279, %v1450, 0
    %1533 = vmatprep.subr.mxu0 0.0
    %1534 = vmatpush1.msra.mxu0 0.0
    %1535 = vmatprep.subr.mxu0 0.0
    %1536 = vmatpush1.msra.mxu0 0.0
    %1537 = vmatprep.subr.mxu0 0.0
    %1538 = vmatpush1.msra.mxu0 0.0
    %1539 = vmatprep.subr.mxu0 0.0
    %1540 = vmatpush1.msra.mxu0 0.0
    %1541 = vmatprep.subr.mxu0 0.0
    %1542 = vmatpush1.msra.mxu0 0.0
    %1543 = vmatprep.subr.mxu0 0.0
    %1544 = vmatpush1.msra.mxu0 0.0
    %1545 = vmatprep.subr.mxu0 0.0
    %1546 = vmatpush1.msra.mxu0 0.0
    %1547 = vmatprep.subr.mxu0 0.0
    %1548 = vmatpush1.msra.mxu0 0.0
    %1549 = vmatprep.subr.mxu0 0.0
    %1550 = vmatpush1.msra.mxu0 0.0
    %1551 = vmatprep.subr.mxu0 0.0
    %1552 = vmatpush1.msra.mxu0 0.0
    %1553 = vmatprep.subr.mxu0 0.0
    %1554 = vmatpush1.msra.mxu0 0.0
    %1555 = vmatprep.subr.mxu0 0.0
    %1556 = vmatpush1.msra.mxu0 0.0
    %1557 = vmatprep.subr.mxu0 0.0
    %1558 = vmatpush1.msra.mxu0 0.0
    %1559 = vmatprep.subr.mxu0 0.0
    %1560 = vmatpush1.msra.mxu0 0.0
    %1561 = vmatprep.subr.mxu0 0.0
    %1562 = vmatpush1.msra.mxu0 0.0
    %1563 = vmatprep.subr.mxu0 0.0
    %1564 = vmatpush1.msra.mxu0 %v1528
    %1565 = vmatprep.subr.mxu0 0.0
    %1566 = vmatpush2.msra.mxu0 0.0
    %1567 = vmatprep.subr.mxu0 0.0
    %1568 = vmatpush2.msra.mxu0 0.0
    %1569 = vmatprep.subr.mxu0 0.0
    %1570 = vmatpush2.msra.mxu0 0.0
    %1571 = vmatprep.subr.mxu0 0.0
    %1572 = vmatpush2.msra.mxu0 0.0
    %1573 = vmatprep.subr.mxu0 0.0
    %1574 = vmatpush2.msra.mxu0 0.0
    %1575 = vmatprep.subr.mxu0 0.0
    %1576 = vmatpush2.msra.mxu0 0.0
    %1577 = vmatprep.subr.mxu0 0.0
    %1578 = vmatpush2.msra.mxu0 0.0
    %1579 = vmatprep.subr.mxu0 0.0
    %1580 = vmatpush2.msra.mxu0 0.0
    %1581 = vmatprep.subr.mxu0 0.0
    %1582 = vmatpush2.msra.mxu0 0.0
    %1583 = vmatprep.subr.mxu0 0.0
    %1584 = vmatpush2.msra.mxu0 0.0
    %1585 = vmatprep.subr.mxu0 0.0
    %1586 = vmatpush2.msra.mxu0 0.0
    %1587 = vmatprep.subr.mxu0 0.0
    %1588 = vmatpush2.msra.mxu0 0.0
    %1589 = vmatprep.subr.mxu0 0.0
    %1590 = vmatpush2.msra.mxu0 0.0
    %1591 = vmatprep.subr.mxu0 0.0
    %1592 = vmatpush2.msra.mxu0 0.0
    %1593 = vmatprep.subr.mxu0 0.0
    %1594 = vmatpush2.msra.mxu0 0.0
    %1595 = vmatprep.subr.mxu0 0.0
    %1596 = vmatpush2.msra.mxu0 0.0
    %1597 = vmatprep.mubr.f32.mxu0 0.0
    %1598 = vmatmul.mubr.f32.gmra.mxu0 %v1531
    %v1599 = vpop.f32.mrf.mxu0
    %v1600 = vadd.f32 0.0, %v1599
    %v1601 = vpop.f32.mrf.mxu0
    %1602 = vdwg.mxu0
    %1605 = vrot.lane.b32.xlu0 %v860, 8
    %v1606 = vpop.permute.xlu0 %1605
    %1607 = vrot.lane.b32.xlu0 %v936, 8
    %v1608 = vpop.permute.xlu0 %1607
    %1613 = vrot.lane.b32.xlu0 %v1192, 16
    %v1614 = vpop.permute.xlu0 %1613
    %1615 = vrot.lane.b32.xlu0 %v1268, 16
    %v1616 = vpop.permute.xlu0 %1615
    %1621 = vrot.lane.b32.xlu0 %v1524, 24
    %v1622 = vpop.permute.xlu0 %1621
    %1623 = vrot.lane.b32.xlu0 %v1600, 24
    %v1624 = vpop.permute.xlu0 %1623
    %v1627 = vsel %vm279, %v528, %v1606
    %v1628 = vsel %vm279, %v604, %v1608
    %vm1629 = vcmask 130048
    %v1630 = vsel %vm1629, %v1627, %v1614
    %v1631 = vsel %vm1629, %v1628, %v1616
    %vm1632 = vcmask 195584
    %v1633 = vsel %vm1632, %v1630, %v1622
    %v1634 = vsel %vm1632, %v1631, %v1624
    %v1635 = vld [vmem:[%s5] sm:$0xff]
    %v1636 = vld [vmem:[%s5 + $0x8] sm:$0xff]
    %v1637 = vld [vmem:[%s5 + $0x10] sm:$0xff]
    %v1638 = vld [vmem:[%s5 + $0x18] sm:$0xff]
    %v1639 = vld [vmem:[%s6] sm:$0x1]
    %v1641 = vlaneseq
    %v1642 = vshrl.u32 %v1641, 7
    %v1643 = vsub.s32 0, %v1642
    %v1644 = vrot.slane %v1639, %v1643
    %v1647 = vsel %vm194, %v1633, 0
    %v1650 = vsel %vm194, %v1634, 0
    %1652 = vmatprep.subr.mxu0 0.0
    %1653 = vmatpush1.msra.mxu0 0.0
    %1654 = vmatprep.subr.mxu0 0.0
    %1655 = vmatpush1.msra.mxu0 0.0
    %1656 = vmatprep.subr.mxu0 0.0
    %1657 = vmatpush1.msra.mxu0 0.0
    %1658 = vmatprep.subr.mxu0 0.0
    %1659 = vmatpush1.msra.mxu0 0.0
    %1660 = vmatprep.subr.mxu0 0.0
    %1661 = vmatpush1.msra.mxu0 0.0
    %1662 = vmatprep.subr.mxu0 0.0
    %1663 = vmatpush1.msra.mxu0 0.0
    %1664 = vmatprep.subr.mxu0 0.0
    %1665 = vmatpush1.msra.mxu0 0.0
    %1666 = vmatprep.subr.mxu0 0.0
    %1667 = vmatpush1.msra.mxu0 0.0
    %1668 = vmatprep.subr.mxu0 0.0
    %1669 = vmatpush1.msra.mxu0 0.0
    %1670 = vmatprep.subr.mxu0 0.0
    %1671 = vmatpush1.msra.mxu0 0.0
    %1672 = vmatprep.subr.mxu0 0.0
    %1673 = vmatpush1.msra.mxu0 0.0
    %1674 = vmatprep.subr.mxu0 0.0
    %1675 = vmatpush1.msra.mxu0 0.0
    %1676 = vmatprep.subr.mxu0 0.0
    %1677 = vmatpush1.msra.mxu0 %v1638
    %1678 = vmatprep.subr.mxu0 0.0
    %1679 = vmatpush1.msra.mxu0 %v1637
    %1680 = vmatprep.subr.mxu0 0.0
    %1681 = vmatpush1.msra.mxu0 %v1636
    %1682 = vmatprep.subr.mxu0 0.0
    %1683 = vmatpush1.msra.mxu0 %v1635
    %1684 = vmatprep.subr.mxu0 0.0
    %1685 = vmatpush2.msra.mxu0 0.0
    %1686 = vmatprep.subr.mxu0 0.0
    %1687 = vmatpush2.msra.mxu0 0.0
    %1688 = vmatprep.subr.mxu0 0.0
    %1689 = vmatpush2.msra.mxu0 0.0
    %1690 = vmatprep.subr.mxu0 0.0
    %1691 = vmatpush2.msra.mxu0 0.0
    %1692 = vmatprep.subr.mxu0 0.0
    %1693 = vmatpush2.msra.mxu0 0.0
    %1694 = vmatprep.subr.mxu0 0.0
    %1695 = vmatpush2.msra.mxu0 0.0
    %1696 = vmatprep.subr.mxu0 0.0
    %1697 = vmatpush2.msra.mxu0 0.0
    %1698 = vmatprep.subr.mxu0 0.0
    %1699 = vmatpush2.msra.mxu0 0.0
    %1700 = vmatprep.subr.mxu0 0.0
    %1701 = vmatpush2.msra.mxu0 0.0
    %1702 = vmatprep.subr.mxu0 0.0
    %1703 = vmatpush2.msra.mxu0 0.0
    %1704 = vmatprep.subr.mxu0 0.0
    %1705 = vmatpush2.msra.mxu0 0.0
    %1706 = vmatprep.subr.mxu0 0.0
    %1707 = vmatpush2.msra.mxu0 0.0
    %1708 = vmatprep.subr.mxu0 0.0
    %1709 = vmatpush2.msra.mxu0 0.0
    %1710 = vmatprep.subr.mxu0 0.0
    %1711 = vmatpush2.msra.mxu0 0.0
    %1712 = vmatprep.subr.mxu0 0.0
    %1713 = vmatpush2.msra.mxu0 0.0
    %1714 = vmatprep.subr.mxu0 0.0
    %1715 = vmatpush2.msra.mxu0 0.0
    %1716 = vmatprep.mubr.f32.mxu0 0.0
    %1717 = vmatmul.mubr.f32.gmra.mxu0 %v1647
    %v1718 = vpop.f32.mrf.mxu0
    %v1719 = vadd.f32 %v1644, %v1718
    %v1720 = vpop.f32.mrf.mxu0
    %1721 = vmatprep.mubr.f32.mxu0 0.0
    %1722 = vmatmul.mubr.f32.gmra.mxu0 %v1650
    %v1723 = vpop.f32.mrf.mxu0
    %v1724 = vadd.f32 %v1644, %v1723
    %v1725 = vpop.f32.mrf.mxu0
    %1726 = vdwg.mxu0
    %v1727 = vadd.f32 %v181, %v1719
    %v1728 = vadd.f32 %v182, %v1724
    %v1729 = vld [vmem:[%s7] sm:$0x1]
    %v1730 = vld [vmem:[%s8] sm:$0x1]
    %v1731 = vsel %vm194, %v1727, 0.0
    %1732 = vadd.xlane.f32.xlu0 %v1731
    %v1733 = vpop.xlane.xlu0 %1732
    %v1734 = vsel %vm194, %v1728, 0.0
    %1735 = vadd.xlane.f32.xlu0 %v1734
    %v1736 = vpop.xlane.xlu0 %1735
    %v1737 = vrcp.pop 32.0
    %v1738 = vmul.f32 %v1733, %v1737
    %v1739 = vmul.f32 %v1736, %v1737
    %v1740 = vsub.f32 %v1727, %v1738
    %v1741 = vsub.f32 %v1728, %v1739
    %v1742 = vmul.f32 %v1740, %v1740
    %v1743 = vmul.f32 %v1741, %v1741
    %v1744 = vsel %vm194, %v1742, 0.0
    %1745 = vadd.xlane.f32.xlu0 %v1744
    %v1746 = vpop.xlane.xlu0 %1745
    %v1747 = vsel %vm194, %v1743, 0.0
    %1748 = vadd.xlane.f32.xlu0 %v1747
    %v1749 = vpop.xlane.xlu0 %1748
    %v1750 = vmul.f32 %v1746, %v1737
    %v1751 = vmul.f32 %v1749, %v1737
    %v1752 = vadd.f32 %v1750, 1e-05
    %v1753 = vadd.f32 %v1751, 1e-05
    %v1754 = vrsqrt.pop %v1752
    %v1755 = vrsqrt.pop %v1753
    %v1756 = vmul.f32 %v1740, %v1754
    %v1757 = vmul.f32 %v1741, %v1755
    %v1759 = vlaneseq
    %v1760 = vshrl.u32 %v1759, 7
    %v1761 = vsub.s32 0, %v1760
    %v1762 = vrot.slane %v1729, %v1761
    %v1764 = vmul.f32 %v1756, %v1762
    %v1765 = vmul.f32 %v1757, %v1762
    %v1767 = vlaneseq
    %v1768 = vshrl.u32 %v1767, 7
    %v1769 = vsub.s32 0, %v1768
    %v1770 = vrot.slane %v1730, %v1769
    %v1772 = vadd.f32 %v1764, %v1770
    %v1773 = vadd.f32 %v1765, %v1770
    %v1774 = vld [vmem:[%s9] sm:$0xff]
    %v1775 = vld [vmem:[%s9 + $0x8] sm:$0xff]
    %v1776 = vld [vmem:[%s9 + $0x10] sm:$0xff]
    %v1777 = vld [vmem:[%s9 + $0x18] sm:$0xff]
    %v1778 = vld [vmem:[%s10] sm:$0x1]
    %v1780 = vlaneseq
    %v1781 = vshrl.u32 %v1780, 7
    %v1782 = vsub.s32 0, %v1781
    %v1783 = vrot.slane %v1778, %v1782
    %v1786 = vsel %vm194, %v1772, 0
    %v1789 = vsel %vm194, %v1773, 0
    %1791 = vmatprep.subr.mxu0 0.0
    %1792 = vmatpush1.msra.mxu0 0.0
    %1793 = vmatprep.subr.mxu0 0.0
    %1794 = vmatpush1.msra.mxu0 0.0
    %1795 = vmatprep.subr.mxu0 0.0
    %1796 = vmatpush1.msra.mxu0 0.0
    %1797 = vmatprep.subr.mxu0 0.0
    %1798 = vmatpush1.msra.mxu0 0.0
    %1799 = vmatprep.subr.mxu0 0.0
    %1800 = vmatpush1.msra.mxu0 0.0
    %1801 = vmatprep.subr.mxu0 0.0
    %1802 = vmatpush1.msra.mxu0 0.0
    %1803 = vmatprep.subr.mxu0 0.0
    %1804 = vmatpush1.msra.mxu0 0.0
    %1805 = vmatprep.subr.mxu0 0.0
    %1806 = vmatpush1.msra.mxu0 0.0
    %1807 = vmatprep.subr.mxu0 0.0
    %1808 = vmatpush1.msra.mxu0 0.0
    %1809 = vmatprep.subr.mxu0 0.0
    %1810 = vmatpush1.msra.mxu0 0.0
    %1811 = vmatprep.subr.mxu0 0.0
    %1812 = vmatpush1.msra.mxu0 0.0
    %1813 = vmatprep.subr.mxu0 0.0
    %1814 = vmatpush1.msra.mxu0 0.0
    %1815 = vmatprep.subr.mxu0 0.0
    %1816 = vmatpush1.msra.mxu0 %v1777
    %1817 = vmatprep.subr.mxu0 0.0
    %1818 = vmatpush1.msra.mxu0 %v1776
    %1819 = vmatprep.subr.mxu0 0.0
    %1820 = vmatpush1.msra.mxu0 %v1775
    %1821 = vmatprep.subr.mxu0 0.0
    %1822 = vmatpush1.msra.mxu0 %v1774
    %1823 = vmatprep.subr.mxu0 0.0
    %1824 = vmatpush2.msra.mxu0 0.0
    %1825 = vmatprep.subr.mxu0 0.0
    %1826 = vmatpush2.msra.mxu0 0.0
    %1827 = vmatprep.subr.mxu0 0.0
    %1828 = vmatpush2.msra.mxu0 0.0
    %1829 = vmatprep.subr.mxu0 0.0
    %1830 = vmatpush2.msra.mxu0 0.0
    %1831 = vmatprep.subr.mxu0 0.0
    %1832 = vmatpush2.msra.mxu0 0.0
    %1833 = vmatprep.subr.mxu0 0.0
    %1834 = vmatpush2.msra.mxu0 0.0
    %1835 = vmatprep.subr.mxu0 0.0
    %1836 = vmatpush2.msra.mxu0 0.0
    %1837 = vmatprep.subr.mxu0 0.0
    %1838 = vmatpush2.msra.mxu0 0.0
    %1839 = vmatprep.subr.mxu0 0.0
    %1840 = vmatpush2.msra.mxu0 0.0
    %1841 = vmatprep.subr.mxu0 0.0
    %1842 = vmatpush2.msra.mxu0 0.0
    %1843 = vmatprep.subr.mxu0 0.0
    %1844 = vmatpush2.msra.mxu0 0.0
    %1845 = vmatprep.subr.mxu0 0.0
    %1846 = vmatpush2.msra.mxu0 0.0
    %1847 = vmatprep.subr.mxu0 0.0
    %1848 = vmatpush2.msra.mxu0 0.0
    %1849 = vmatprep.subr.mxu0 0.0
    %1850 = vmatpush2.msra.mxu0 0.0
    %1851 = vmatprep.subr.mxu0 0.0
    %1852 = vmatpush2.msra.mxu0 0.0
    %1853 = vmatprep.subr.mxu0 0.0
    %1854 = vmatpush2.msra.mxu0 0.0
    %1855 = vmatprep.mubr.f32.mxu0 0.0
    %1856 = vmatmul.mubr.f32.gmra.mxu0 %v1786
    %v1857 = vpop.f32.mrf.mxu0
    %v1858 = vadd.f32 %v1783, %v1857
    %v1859 = vpop.f32.mrf.mxu0
    %1860 = vmatprep.mubr.f32.mxu0 0.0
    %1861 = vmatmul.mubr.f32.gmra.mxu0 %v1789
    %v1862 = vpop.f32.mrf.mxu0
    %v1863 = vadd.f32 %v1783, %v1862
    %v1864 = vpop.f32.mrf.mxu0
    %1865 = vdwg.mxu0
    %v1866 = vmax.f32 %v1858, 0.0
    %v1867 = vmax.f32 %v1863, 0.0
    %v1868 = vld [vmem:[%s11] sm:$0xff]
    %v1869 = vld [vmem:[%s11 + $0x8] sm:$0xff]
    %v1870 = vld [vmem:[%s11 + $0x10] sm:$0xff]
    %v1871 = vld [vmem:[%s11 + $0x18] sm:$0xff]
    %v1872 = vld [vmem:[%s11 + $0x20] sm:$0xff]
    %v1873 = vld [vmem:[%s11 + $0x28] sm:$0xff]
    %v1874 = vld [vmem:[%s11 + $0x30] sm:$0xff]
    %v1875 = vld [vmem:[%s11 + $0x38] sm:$0xff]
    %v1876 = vld [vmem:[%s11 + $0x40] sm:$0xff]
    %v1877 = vld [vmem:[%s11 + $0x48] sm:$0xff]
    %v1878 = vld [vmem:[%s11 + $0x50] sm:$0xff]
    %v1879 = vld [vmem:[%s11 + $0x58] sm:$0xff]
    %v1880 = vld [vmem:[%s11 + $0x60] sm:$0xff]
    %v1881 = vld [vmem:[%s11 + $0x68] sm:$0xff]
    %v1882 = vld [vmem:[%s11 + $0x70] sm:$0xff]
    %v1883 = vld [vmem:[%s11 + $0x78] sm:$0xff]
    %v1884 = vld [vmem:[%s12] sm:$0x1]
    %v1886 = vlaneseq
    %v1887 = vshrl.u32 %v1886, 7
    %v1888 = vsub.s32 0, %v1887
    %v1889 = vrot.slane %v1884, %v1888
    %1891 = vmatprep.subr.mxu0 0.0
    %1892 = vmatpush1.msra.mxu0 %v1883
    %1893 = vmatprep.subr.mxu0 0.0
    %1894 = vmatpush1.msra.mxu0 %v1882
    %1895 = vmatprep.subr.mxu0 0.0
    %1896 = vmatpush1.msra.mxu0 %v1881
    %1897 = vmatprep.subr.mxu0 0.0
    %1898 = vmatpush1.msra.mxu0 %v1880
    %1899 = vmatprep.subr.mxu0 0.0
    %1900 = vmatpush1.msra.mxu0 %v1879
    %1901 = vmatprep.subr.mxu0 0.0
    %1902 = vmatpush1.msra.mxu0 %v1878
    %1903 = vmatprep.subr.mxu0 0.0
    %1904 = vmatpush1.msra.mxu0 %v1877
    %1905 = vmatprep.subr.mxu0 0.0
    %1906 = vmatpush1.msra.mxu0 %v1876
    %1907 = vmatprep.subr.mxu0 0.0
    %1908 = vmatpush1.msra.mxu0 %v1875
    %1909 = vmatprep.subr.mxu0 0.0
    %1910 = vmatpush1.msra.mxu0 %v1874
    %1911 = vmatprep.subr.mxu0 0.0
    %1912 = vmatpush1.msra.mxu0 %v1873
    %1913 = vmatprep.subr.mxu0 0.0
    %1914 = vmatpush1.msra.mxu0 %v1872
    %1915 = vmatprep.subr.mxu0 0.0
    %1916 = vmatpush1.msra.mxu0 %v1871
    %1917 = vmatprep.subr.mxu0 0.0
    %1918 = vmatpush1.msra.mxu0 %v1870
    %1919 = vmatprep.subr.mxu0 0.0
    %1920 = vmatpush1.msra.mxu0 %v1869
    %1921 = vmatprep.subr.mxu0 0.0
    %1922 = vmatpush1.msra.mxu0 %v1868
    %1923 = vmatprep.subr.mxu0 0.0
    %1924 = vmatpush2.msra.mxu0 0.0
    %1925 = vmatprep.subr.mxu0 0.0
    %1926 = vmatpush2.msra.mxu0 0.0
    %1927 = vmatprep.subr.mxu0 0.0
    %1928 = vmatpush2.msra.mxu0 0.0
    %1929 = vmatprep.subr.mxu0 0.0
    %1930 = vmatpush2.msra.mxu0 0.0
    %1931 = vmatprep.subr.mxu0 0.0
    %1932 = vmatpush2.msra.mxu0 0.0
    %1933 = vmatprep.subr.mxu0 0.0
    %1934 = vmatpush2.msra.mxu0 0.0
    %1935 = vmatprep.subr.mxu0 0.0
    %1936 = vmatpush2.msra.mxu0 0.0
    %1937 = vmatprep.subr.mxu0 0.0
    %1938 = vmatpush2.msra.mxu0 0.0
    %1939 = vmatprep.subr.mxu0 0.0
    %1940 = vmatpush2.msra.mxu0 0.0
    %1941 = vmatprep.subr.mxu0 0.0
    %1942 = vmatpush2.msra.mxu0 0.0
    %1943 = vmatprep.subr.mxu0 0.0
    %1944 = vmatpush2.msra.mxu0 0.0
    %1945 = vmatprep.subr.mxu0 0.0
    %1946 = vmatpush2.msra.mxu0 0.0
    %1947 = vmatprep.subr.mxu0 0.0
    %1948 = vmatpush2.msra.mxu0 0.0
    %1949 = vmatprep.subr.mxu0 0.0
    %1950 = vmatpush2.msra.mxu0 0.0
    %1951 = vmatprep.subr.mxu0 0.0
    %1952 = vmatpush2.msra.mxu0 0.0
    %1953 = vmatprep.subr.mxu0 0.0
    %1954 = vmatpush2.msra.mxu0 0.0
    %1955 = vmatprep.mubr.f32.mxu0 0.0
    %1956 = vmatmul.mubr.f32.gmra.mxu0 %v1866
    %v1957 = vpop.f32.mrf.mxu0
    %v1958 = vadd.f32 %v1889, %v1957
    %v1959 = vpop.f32.mrf.mxu0
    %1960 = vmatprep.mubr.f32.mxu0 0.0
    %1961 = vmatmul.mubr.f32.gmra.mxu0 %v1867
    %v1962 = vpop.f32.mrf.mxu0
    %v1963 = vadd.f32 %v1889, %v1962
    %v1964 = vpop.f32.mrf.mxu0
    %1965 = vdwg.mxu0
    %v1966 = vadd.f32 %v1772, %v1958
    %v1967 = vadd.f32 %v1773, %v1963
    %v1968 = vld [vmem:[%s13] sm:$0x1]
    %v1969 = vld [vmem:[%s14] sm:$0x1]
    %v1970 = vsel %vm194, %v1966, 0.0
    %1971 = vadd.xlane.f32.xlu0 %v1970
    %v1972 = vpop.xlane.xlu0 %1971
    %v1973 = vsel %vm194, %v1967, 0.0
    %1974 = vadd.xlane.f32.xlu0 %v1973
    %v1975 = vpop.xlane.xlu0 %1974
    %v1976 = vmul.f32 %v1972, %v1737
    %v1977 = vmul.f32 %v1975, %v1737
    %v1978 = vsub.f32 %v1966, %v1976
    %v1979 = vsub.f32 %v1967, %v1977
    %v1980 = vmul.f32 %v1978, %v1978
    %v1981 = vmul.f32 %v1979, %v1979
    %v1982 = vsel %vm194, %v1980, 0.0
    %1983 = vadd.xlane.f32.xlu0 %v1982
    %v1984 = vpop.xlane.xlu0 %1983
    %v1985 = vsel %vm194, %v1981, 0.0
    %1986 = vadd.xlane.f32.xlu0 %v1985
    %v1987 = vpop.xlane.xlu0 %1986
    %v1988 = vmul.f32 %v1984, %v1737
    %v1989 = vmul.f32 %v1987, %v1737
    %v1990 = vadd.f32 %v1988, 1e-05
    %v1991 = vadd.f32 %v1989, 1e-05
    %v1992 = vrsqrt.pop %v1990
    %v1993 = vrsqrt.pop %v1991
    %v1994 = vmul.f32 %v1978, %v1992
    %v1995 = vmul.f32 %v1979, %v1993
    %v1997 = vlaneseq
    %v1998 = vshrl.u32 %v1997, 7
    %v1999 = vsub.s32 0, %v1998
    %v2000 = vrot.slane %v1968, %v1999
    %v2002 = vmul.f32 %v1994, %v2000
    %v2003 = vmul.f32 %v1995, %v2000
    %v2005 = vlaneseq
    %v2006 = vshrl.u32 %v2005, 7
    %v2007 = vsub.s32 0, %v2006
    %v2008 = vrot.slane %v1969, %v2007
    %v2010 = vadd.f32 %v2002, %v2008
    %v2011 = vadd.f32 %v2003, %v2008
    %s2012 = scalar_lea.vmem %s3, 32
    %v2013 = vld [vmem:[%s2012] sm:$0xff]
    %v2014 = vld [vmem:[%s2012 + $0x8] sm:$0xff]
    %v2015 = vld [vmem:[%s2012 + $0x10] sm:$0xff]
    %v2016 = vld [vmem:[%s2012 + $0x18] sm:$0xff]
    %s2017 = scalar_lea.vmem %s4, 1
    %v2018 = vld [vmem:[%s2017] sm:$0x1]
    %v2020 = vlaneseq
    %v2021 = vshrl.u32 %v2020, 7
    %v2022 = vsub.s32 0, %v2021
    %v2023 = vrot.slane %v2018, %v2022
    %v2026 = vsel %vm194, %v2010, 0
    %v2029 = vsel %vm194, %v2011, 0
    %2031 = vmatprep.subr.mxu0 0.0
    %2032 = vmatpush1.msra.mxu0 0.0
    %2033 = vmatprep.subr.mxu0 0.0
    %2034 = vmatpush1.msra.mxu0 0.0
    %2035 = vmatprep.subr.mxu0 0.0
    %2036 = vmatpush1.msra.mxu0 0.0
    %2037 = vmatprep.subr.mxu0 0.0
    %2038 = vmatpush1.msra.mxu0 0.0
    %2039 = vmatprep.subr.mxu0 0.0
    %2040 = vmatpush1.msra.mxu0 0.0
    %2041 = vmatprep.subr.mxu0 0.0
    %2042 = vmatpush1.msra.mxu0 0.0
    %2043 = vmatprep.subr.mxu0 0.0
    %2044 = vmatpush1.msra.mxu0 0.0
    %2045 = vmatprep.subr.mxu0 0.0
    %2046 = vmatpush1.msra.mxu0 0.0
    %2047 = vmatprep.subr.mxu0 0.0
    %2048 = vmatpush1.msra.mxu0 0.0
    %2049 = vmatprep.subr.mxu0 0.0
    %2050 = vmatpush1.msra.mxu0 0.0
    %2051 = vmatprep.subr.mxu0 0.0
    %2052 = vmatpush1.msra.mxu0 0.0
    %2053 = vmatprep.subr.mxu0 0.0
    %2054 = vmatpush1.msra.mxu0 0.0
    %2055 = vmatprep.subr.mxu0 0.0
    %2056 = vmatpush1.msra.mxu0 %v2016
    %2057 = vmatprep.subr.mxu0 0.0
    %2058 = vmatpush1.msra.mxu0 %v2015
    %2059 = vmatprep.subr.mxu0 0.0
    %2060 = vmatpush1.msra.mxu0 %v2014
    %2061 = vmatprep.subr.mxu0 0.0
    %2062 = vmatpush1.msra.mxu0 %v2013
    %2063 = vmatprep.subr.mxu0 0.0
    %2064 = vmatpush2.msra.mxu0 0.0
    %2065 = vmatprep.subr.mxu0 0.0
    %2066 = vmatpush2.msra.mxu0 0.0
    %2067 = vmatprep.subr.mxu0 0.0
    %2068 = vmatpush2.msra.mxu0 0.0
    %2069 = vmatprep.subr.mxu0 0.0
    %2070 = vmatpush2.msra.mxu0 0.0
    %2071 = vmatprep.subr.mxu0 0.0
    %2072 = vmatpush2.msra.mxu0 0.0
    %2073 = vmatprep.subr.mxu0 0.0
    %2074 = vmatpush2.msra.mxu0 0.0
    %2075 = vmatprep.subr.mxu0 0.0
    %2076 = vmatpush2.msra.mxu0 0.0
    %2077 = vmatprep.subr.mxu0 0.0
    %2078 = vmatpush2.msra.mxu0 0.0
    %2079 = vmatprep.subr.mxu0 0.0
    %2080 = vmatpush2.msra.mxu0 0.0
    %2081 = vmatprep.subr.mxu0 0.0
    %2082 = vmatpush2.msra.mxu0 0.0
    %2083 = vmatprep.subr.mxu0 0.0
    %2084 = vmatpush2.msra.mxu0 0.0
    %2085 = vmatprep.subr.mxu0 0.0
    %2086 = vmatpush2.msra.mxu0 0.0
    %2087 = vmatprep.subr.mxu0 0.0
    %2088 = vmatpush2.msra.mxu0 0.0
    %2089 = vmatprep.subr.mxu0 0.0
    %2090 = vmatpush2.msra.mxu0 0.0
    %2091 = vmatprep.subr.mxu0 0.0
    %2092 = vmatpush2.msra.mxu0 0.0
    %2093 = vmatprep.subr.mxu0 0.0
    %2094 = vmatpush2.msra.mxu0 0.0
    %2095 = vmatprep.mubr.f32.mxu0 0.0
    %2096 = vmatmul.mubr.f32.gmra.mxu0 %v2026
    %v2097 = vpop.f32.mrf.mxu0
    %v2098 = vadd.f32 %v2023, %v2097
    %v2099 = vpop.f32.mrf.mxu0
    %2100 = vmatprep.mubr.f32.mxu0 0.0
    %2101 = vmatmul.mubr.f32.gmra.mxu0 %v2029
    %v2102 = vpop.f32.mrf.mxu0
    %v2103 = vadd.f32 %v2023, %v2102
    %v2104 = vpop.f32.mrf.mxu0
    %2105 = vdwg.mxu0
    %2107 = vrot.lane.b32.xlu0 %v2098, 96
    %v2108 = vpop.permute.xlu0 %2107
    %v2109 = vsel %vm279, %v2098, 0
    %v2111 = vsel %vm279, %v2108, 0
    %2113 = vmatprep.subr.mxu0 0.0
    %2114 = vmatpush1.xpose.msra.mxu0 0.0
    %2115 = vmatprep.subr.mxu0 0.0
    %2116 = vmatpush1.xpose.msra.mxu0 0.0
    %2117 = vmatprep.subr.mxu0 0.0
    %2118 = vmatpush1.xpose.msra.mxu0 0.0
    %2119 = vmatprep.subr.mxu0 0.0
    %2120 = vmatpush1.xpose.msra.mxu0 0.0
    %2121 = vmatprep.subr.mxu0 0.0
    %2122 = vmatpush1.xpose.msra.mxu0 0.0
    %2123 = vmatprep.subr.mxu0 0.0
    %2124 = vmatpush1.xpose.msra.mxu0 0.0
    %2125 = vmatprep.subr.mxu0 0.0
    %2126 = vmatpush1.xpose.msra.mxu0 0.0
    %2127 = vmatprep.subr.mxu0 0.0
    %2128 = vmatpush1.xpose.msra.mxu0 0.0
    %2129 = vmatprep.subr.mxu0 0.0
    %2130 = vmatpush1.xpose.msra.mxu0 0.0
    %2131 = vmatprep.subr.mxu0 0.0
    %2132 = vmatpush1.xpose.msra.mxu0 0.0
    %2133 = vmatprep.subr.mxu0 0.0
    %2134 = vmatpush1.xpose.msra.mxu0 0.0
    %2135 = vmatprep.subr.mxu0 0.0
    %2136 = vmatpush1.xpose.msra.mxu0 0.0
    %2137 = vmatprep.subr.mxu0 0.0
    %2138 = vmatpush1.xpose.msra.mxu0 0.0
    %2139 = vmatprep.subr.mxu0 0.0
    %2140 = vmatpush1.xpose.msra.mxu0 0.0
    %2141 = vmatprep.subr.mxu0 0.0
    %2142 = vmatpush1.xpose.msra.mxu0 0.0
    %2143 = vmatprep.subr.mxu0 0.0
    %2144 = vmatpush1.xpose.msra.mxu0 %v2111
    %2145 = vmatprep.subr.mxu0 0.0
    %2146 = vmatpush2.xpose.msra.mxu0 0.0
    %2147 = vmatprep.subr.mxu0 0.0
    %2148 = vmatpush2.xpose.msra.mxu0 0.0
    %2149 = vmatprep.subr.mxu0 0.0
    %2150 = vmatpush2.xpose.msra.mxu0 0.0
    %2151 = vmatprep.subr.mxu0 0.0
    %2152 = vmatpush2.xpose.msra.mxu0 0.0
    %2153 = vmatprep.subr.mxu0 0.0
    %2154 = vmatpush2.xpose.msra.mxu0 0.0
    %2155 = vmatprep.subr.mxu0 0.0
    %2156 = vmatpush2.xpose.msra.mxu0 0.0
    %2157 = vmatprep.subr.mxu0 0.0
    %2158 = vmatpush2.xpose.msra.mxu0 0.0
    %2159 = vmatprep.subr.mxu0 0.0
    %2160 = vmatpush2.xpose.msra.mxu0 0.0
    %2161 = vmatprep.subr.mxu0 0.0
    %2162 = vmatpush2.xpose.msra.mxu0 0.0
    %2163 = vmatprep.subr.mxu0 0.0
    %2164 = vmatpush2.xpose.msra.mxu0 0.0
    %2165 = vmatprep.subr.mxu0 0.0
    %2166 = vmatpush2.xpose.msra.mxu0 0.0
    %2167 = vmatprep.subr.mxu0 0.0
    %2168 = vmatpush2.xpose.msra.mxu0 0.0
    %2169 = vmatprep.subr.mxu0 0.0
    %2170 = vmatpush2.xpose.msra.mxu0 0.0
    %2171 = vmatprep.subr.mxu0 0.0
    %2172 = vmatpush2.xpose.msra.mxu0 0.0
    %2173 = vmatprep.subr.mxu0 0.0
    %2174 = vmatpush2.xpose.msra.mxu0 0.0
    %2175 = vmatprep.subr.mxu0 0.0
    %2176 = vmatpush2.xpose.msra.mxu0 0.0
    %2177 = vmatprep.mubr.f32.mxu0 0.0
    %2178 = vmatmul.mubr.f32.gmra.mxu0 %v2109
    %v2179 = vpop.f32.mrf.mxu0
    %v2180 = vadd.f32 0.0, %v2179
    %v2181 = vpop.f32.mrf.mxu0
    %2182 = vdwg.mxu0
    %2184 = vrot.lane.b32.xlu0 %v2103, 96
    %v2185 = vpop.permute.xlu0 %2184
    %v2186 = vsel %vm279, %v2103, 0
    %v2188 = vsel %vm279, %v2185, 0
    %2190 = vmatprep.subr.mxu0 0.0
    %2191 = vmatpush1.xpose.msra.mxu0 0.0
    %2192 = vmatprep.subr.mxu0 0.0
    %2193 = vmatpush1.xpose.msra.mxu0 0.0
    %2194 = vmatprep.subr.mxu0 0.0
    %2195 = vmatpush1.xpose.msra.mxu0 0.0
    %2196 = vmatprep.subr.mxu0 0.0
    %2197 = vmatpush1.xpose.msra.mxu0 0.0
    %2198 = vmatprep.subr.mxu0 0.0
    %2199 = vmatpush1.xpose.msra.mxu0 0.0
    %2200 = vmatprep.subr.mxu0 0.0
    %2201 = vmatpush1.xpose.msra.mxu0 0.0
    %2202 = vmatprep.subr.mxu0 0.0
    %2203 = vmatpush1.xpose.msra.mxu0 0.0
    %2204 = vmatprep.subr.mxu0 0.0
    %2205 = vmatpush1.xpose.msra.mxu0 0.0
    %2206 = vmatprep.subr.mxu0 0.0
    %2207 = vmatpush1.xpose.msra.mxu0 0.0
    %2208 = vmatprep.subr.mxu0 0.0
    %2209 = vmatpush1.xpose.msra.mxu0 0.0
    %2210 = vmatprep.subr.mxu0 0.0
    %2211 = vmatpush1.xpose.msra.mxu0 0.0
    %2212 = vmatprep.subr.mxu0 0.0
    %2213 = vmatpush1.xpose.msra.mxu0 0.0
    %2214 = vmatprep.subr.mxu0 0.0
    %2215 = vmatpush1.xpose.msra.mxu0 0.0
    %2216 = vmatprep.subr.mxu0 0.0
    %2217 = vmatpush1.xpose.msra.mxu0 0.0
    %2218 = vmatprep.subr.mxu0 0.0
    %2219 = vmatpush1.xpose.msra.mxu0 0.0
    %2220 = vmatprep.subr.mxu0 0.0
    %2221 = vmatpush1.xpose.msra.mxu0 %v2188
    %2222 = vmatprep.subr.mxu0 0.0
    %2223 = vmatpush2.xpose.msra.mxu0 0.0
    %2224 = vmatprep.subr.mxu0 0.0
    %2225 = vmatpush2.xpose.msra.mxu0 0.0
    %2226 = vmatprep.subr.mxu0 0.0
    %2227 = vmatpush2.xpose.msra.mxu0 0.0
    %2228 = vmatprep.subr.mxu0 0.0
    %2229 = vmatpush2.xpose.msra.mxu0 0.0
    %2230 = vmatprep.subr.mxu0 0.0
    %2231 = vmatpush2.xpose.msra.mxu0 0.0
    %2232 = vmatprep.subr.mxu0 0.0
    %2233 = vmatpush2.xpose.msra.mxu0 0.0
    %2234 = vmatprep.subr.mxu0 0.0
    %2235 = vmatpush2.xpose.msra.mxu0 0.0
    %2236 = vmatprep.subr.mxu0 0.0
    %2237 = vmatpush2.xpose.msra.mxu0 0.0
    %2238 = vmatprep.subr.mxu0 0.0
    %2239 = vmatpush2.xpose.msra.mxu0 0.0
    %2240 = vmatprep.subr.mxu0 0.0
    %2241 = vmatpush2.xpose.msra.mxu0 0.0
    %2242 = vmatprep.subr.mxu0 0.0
    %2243 = vmatpush2.xpose.msra.mxu0 0.0
    %2244 = vmatprep.subr.mxu0 0.0
    %2245 = vmatpush2.xpose.msra.mxu0 0.0
    %2246 = vmatprep.subr.mxu0 0.0
    %2247 = vmatpush2.xpose.msra.mxu0 0.0
    %2248 = vmatprep.subr.mxu0 0.0
    %2249 = vmatpush2.xpose.msra.mxu0 0.0
    %2250 = vmatprep.subr.mxu0 0.0
    %2251 = vmatpush2.xpose.msra.mxu0 0.0
    %2252 = vmatprep.subr.mxu0 0.0
    %2253 = vmatpush2.xpose.msra.mxu0 0.0
    %2254 = vmatprep.mubr.f32.mxu0 0.0
    %2255 = vmatmul.mubr.f32.gmra.mxu0 %v2186
    %v2256 = vpop.f32.mrf.mxu0
    %v2257 = vadd.f32 0.0, %v2256
    %v2258 = vpop.f32.mrf.mxu0
    %2259 = vdwg.mxu0
    %v2260 = vmul.f32 %v2180, 0.35355338
    %v2261 = vmul.f32 %v2257, 0.35355338
    %v2262 = vsel %vm279, %v2260, -inf
    %2263 = vmax.xlane.f32.xlu0 %v2262
    %v2264 = vpop.xlane.xlu0 %2263
    %v2265 = vsel %vm279, %v2261, -inf
    %2266 = vmax.xlane.f32.xlu0 %v2265
    %v2267 = vpop.xlane.xlu0 %2266
    %v2268 = vsub.f32 %v2260, %v2264
    %v2269 = vsub.f32 %v2261, %v2267
    %v2270 = vmul.f32 %v2268, 1.442695
    %v2271 = vpow.pop %v2270
    %v2272 = vmul.f32 %v2269, 1.442695
    %v2273 = vpow.pop %v2272
    %v2274 = vsel %vm279, %v2271, 0.0
    %2275 = vadd.xlane.f32.xlu0 %v2274
    %v2276 = vpop.xlane.xlu0 %2275
    %v2277 = vsel %vm279, %v2273, 0.0
    %2278 = vadd.xlane.f32.xlu0 %v2277
    %v2279 = vpop.xlane.xlu0 %2278
    %v2280 = vrcp.pop %v2276
    %v2281 = vrcp.pop %v2279
    %v2282 = vmul.f32 %v2271, %v2280
    %v2283 = vmul.f32 %v2273, %v2281
    %2284 = vrot.lane.b32.xlu0 %v2098, 64
    %v2285 = vpop.permute.xlu0 %2284
    %v2288 = vsel %vm279, %v2282, 0
    %2290 = vmatprep.subr.mxu0 0.0
    %2291 = vmatpush1.msra.mxu0 0.0
    %2292 = vmatprep.subr.mxu0 0.0
    %2293 = vmatpush1.msra.mxu0 0.0
    %2294 = vmatprep.subr.mxu0 0.0
    %2295 = vmatpush1.msra.mxu0 0.0
    %2296 = vmatprep.subr.mxu0 0.0
    %2297 = vmatpush1.msra.mxu0 0.0
    %2298 = vmatprep.subr.mxu0 0.0
    %2299 = vmatpush1.msra.mxu0 0.0
    %2300 = vmatprep.subr.mxu0 0.0
    %2301 = vmatpush1.msra.mxu0 0.0
    %2302 = vmatprep.subr.mxu0 0.0
    %2303 = vmatpush1.msra.mxu0 0.0
    %2304 = vmatprep.subr.mxu0 0.0
    %2305 = vmatpush1.msra.mxu0 0.0
    %2306 = vmatprep.subr.mxu0 0.0
    %2307 = vmatpush1.msra.mxu0 0.0
    %2308 = vmatprep.subr.mxu0 0.0
    %2309 = vmatpush1.msra.mxu0 0.0
    %2310 = vmatprep.subr.mxu0 0.0
    %2311 = vmatpush1.msra.mxu0 0.0
    %2312 = vmatprep.subr.mxu0 0.0
    %2313 = vmatpush1.msra.mxu0 0.0
    %2314 = vmatprep.subr.mxu0 0.0
    %2315 = vmatpush1.msra.mxu0 0.0
    %2316 = vmatprep.subr.mxu0 0.0
    %2317 = vmatpush1.msra.mxu0 0.0
    %2318 = vmatprep.subr.mxu0 0.0
    %2319 = vmatpush1.msra.mxu0 0.0
    %2320 = vmatprep.subr.mxu0 0.0
    %2321 = vmatpush1.msra.mxu0 %v2285
    %2322 = vmatprep.subr.mxu0 0.0
    %2323 = vmatpush2.msra.mxu0 0.0
    %2324 = vmatprep.subr.mxu0 0.0
    %2325 = vmatpush2.msra.mxu0 0.0
    %2326 = vmatprep.subr.mxu0 0.0
    %2327 = vmatpush2.msra.mxu0 0.0
    %2328 = vmatprep.subr.mxu0 0.0
    %2329 = vmatpush2.msra.mxu0 0.0
    %2330 = vmatprep.subr.mxu0 0.0
    %2331 = vmatpush2.msra.mxu0 0.0
    %2332 = vmatprep.subr.mxu0 0.0
    %2333 = vmatpush2.msra.mxu0 0.0
    %2334 = vmatprep.subr.mxu0 0.0
    %2335 = vmatpush2.msra.mxu0 0.0
    %2336 = vmatprep.subr.mxu0 0.0
    %2337 = vmatpush2.msra.mxu0 0.0
    %2338 = vmatprep.subr.mxu0 0.0
    %2339 = vmatpush2.msra.mxu0 0.0
    %2340 = vmatprep.subr.mxu0 0.0
    %2341 = vmatpush2.msra.mxu0 0.0
    %2342 = vmatprep.subr.mxu0 0.0
    %2343 = vmatpush2.msra.mxu0 0.0
    %2344 = vmatprep.subr.mxu0 0.0
    %2345 = vmatpush2.msra.mxu0 0.0
    %2346 = vmatprep.subr.mxu0 0.0
    %2347 = vmatpush2.msra.mxu0 0.0
    %2348 = vmatprep.subr.mxu0 0.0
    %2349 = vmatpush2.msra.mxu0 0.0
    %2350 = vmatprep.subr.mxu0 0.0
    %2351 = vmatpush2.msra.mxu0 0.0
    %2352 = vmatprep.subr.mxu0 0.0
    %2353 = vmatpush2.msra.mxu0 0.0
    %2354 = vmatprep.mubr.f32.mxu0 0.0
    %2355 = vmatmul.mubr.f32.gmra.mxu0 %v2288
    %v2356 = vpop.f32.mrf.mxu0
    %v2357 = vadd.f32 0.0, %v2356
    %v2358 = vpop.f32.mrf.mxu0
    %2359 = vdwg.mxu0
    %2360 = vrot.lane.b32.xlu0 %v2103, 64
    %v2361 = vpop.permute.xlu0 %2360
    %v2364 = vsel %vm279, %v2283, 0
    %2366 = vmatprep.subr.mxu0 0.0
    %2367 = vmatpush1.msra.mxu0 0.0
    %2368 = vmatprep.subr.mxu0 0.0
    %2369 = vmatpush1.msra.mxu0 0.0
    %2370 = vmatprep.subr.mxu0 0.0
    %2371 = vmatpush1.msra.mxu0 0.0
    %2372 = vmatprep.subr.mxu0 0.0
    %2373 = vmatpush1.msra.mxu0 0.0
    %2374 = vmatprep.subr.mxu0 0.0
    %2375 = vmatpush1.msra.mxu0 0.0
    %2376 = vmatprep.subr.mxu0 0.0
    %2377 = vmatpush1.msra.mxu0 0.0
    %2378 = vmatprep.subr.mxu0 0.0
    %2379 = vmatpush1.msra.mxu0 0.0
    %2380 = vmatprep.subr.mxu0 0.0
    %2381 = vmatpush1.msra.mxu0 0.0
    %2382 = vmatprep.subr.mxu0 0.0
    %2383 = vmatpush1.msra.mxu0 0.0
    %2384 = vmatprep.subr.mxu0 0.0
    %2385 = vmatpush1.msra.mxu0 0.0
    %2386 = vmatprep.subr.mxu0 0.0
    %2387 = vmatpush1.msra.mxu0 0.0
    %2388 = vmatprep.subr.mxu0 0.0
    %2389 = vmatpush1.msra.mxu0 0.0
    %2390 = vmatprep.subr.mxu0 0.0
    %2391 = vmatpush1.msra.mxu0 0.0
    %2392 = vmatprep.subr.mxu0 0.0
    %2393 = vmatpush1.msra.mxu0 0.0
    %2394 = vmatprep.subr.mxu0 0.0
    %2395 = vmatpush1.msra.mxu0 0.0
    %2396 = vmatprep.subr.mxu0 0.0
    %2397 = vmatpush1.msra.mxu0 %v2361
    %2398 = vmatprep.subr.mxu0 0.0
    %2399 = vmatpush2.msra.mxu0 0.0
    %2400 = vmatprep.subr.mxu0 0.0
    %2401 = vmatpush2.msra.mxu0 0.0
    %2402 = vmatprep.subr.mxu0 0.0
    %2403 = vmatpush2.msra.mxu0 0.0
    %2404 = vmatprep.subr.mxu0 0.0
    %2405 = vmatpush2.msra.mxu0 0.0
    %2406 = vmatprep.subr.mxu0 0.0
    %2407 = vmatpush2.msra.mxu0 0.0
    %2408 = vmatprep.subr.mxu0 0.0
    %2409 = vmatpush2.msra.mxu0 0.0
    %2410 = vmatprep.subr.mxu0 0.0
    %2411 = vmatpush2.msra.mxu0 0.0
    %2412 = vmatprep.subr.mxu0 0.0
    %2413 = vmatpush2.msra.mxu0 0.0
    %2414 = vmatprep.subr.mxu0 0.0
    %2415 = vmatpush2.msra.mxu0 0.0
    %2416 = vmatprep.subr.mxu0 0.0
    %2417 = vmatpush2.msra.mxu0 0.0
    %2418 = vmatprep.subr.mxu0 0.0
    %2419 = vmatpush2.msra.mxu0 0.0
    %2420 = vmatprep.subr.mxu0 0.0
    %2421 = vmatpush2.msra.mxu0 0.0
    %2422 = vmatprep.subr.mxu0 0.0
    %2423 = vmatpush2.msra.mxu0 0.0
    %2424 = vmatprep.subr.mxu0 0.0
    %2425 = vmatpush2.msra.mxu0 0.0
    %2426 = vmatprep.subr.mxu0 0.0
    %2427 = vmatpush2.msra.mxu0 0.0
    %2428 = vmatprep.subr.mxu0 0.0
    %2429 = vmatpush2.msra.mxu0 0.0
    %2430 = vmatprep.mubr.f32.mxu0 0.0
    %2431 = vmatmul.mubr.f32.gmra.mxu0 %v2364
    %v2432 = vpop.f32.mrf.mxu0
    %v2433 = vadd.f32 0.0, %v2432
    %v2434 = vpop.f32.mrf.mxu0
    %2435 = vdwg.mxu0
    %2436 = vrot.lane.b32.xlu0 %v2098, 120
    %v2437 = vpop.permute.xlu0 %2436
    %2438 = vrot.lane.b32.xlu0 %v2098, 88
    %v2439 = vpop.permute.xlu0 %2438
    %v2440 = vsel %vm279, %v2437, 0
    %v2442 = vsel %vm279, %v2439, 0
    %2444 = vmatprep.subr.mxu0 0.0
    %2445 = vmatpush1.xpose.msra.mxu0 0.0
    %2446 = vmatprep.subr.mxu0 0.0
    %2447 = vmatpush1.xpose.msra.mxu0 0.0
    %2448 = vmatprep.subr.mxu0 0.0
    %2449 = vmatpush1.xpose.msra.mxu0 0.0
    %2450 = vmatprep.subr.mxu0 0.0
    %2451 = vmatpush1.xpose.msra.mxu0 0.0
    %2452 = vmatprep.subr.mxu0 0.0
    %2453 = vmatpush1.xpose.msra.mxu0 0.0
    %2454 = vmatprep.subr.mxu0 0.0
    %2455 = vmatpush1.xpose.msra.mxu0 0.0
    %2456 = vmatprep.subr.mxu0 0.0
    %2457 = vmatpush1.xpose.msra.mxu0 0.0
    %2458 = vmatprep.subr.mxu0 0.0
    %2459 = vmatpush1.xpose.msra.mxu0 0.0
    %2460 = vmatprep.subr.mxu0 0.0
    %2461 = vmatpush1.xpose.msra.mxu0 0.0
    %2462 = vmatprep.subr.mxu0 0.0
    %2463 = vmatpush1.xpose.msra.mxu0 0.0
    %2464 = vmatprep.subr.mxu0 0.0
    %2465 = vmatpush1.xpose.msra.mxu0 0.0
    %2466 = vmatprep.subr.mxu0 0.0
    %2467 = vmatpush1.xpose.msra.mxu0 0.0
    %2468 = vmatprep.subr.mxu0 0.0
    %2469 = vmatpush1.xpose.msra.mxu0 0.0
    %2470 = vmatprep.subr.mxu0 0.0
    %2471 = vmatpush1.xpose.msra.mxu0 0.0
    %2472 = vmatprep.subr.mxu0 0.0
    %2473 = vmatpush1.xpose.msra.mxu0 0.0
    %2474 = vmatprep.subr.mxu0 0.0
    %2475 = vmatpush1.xpose.msra.mxu0 %v2442
    %2476 = vmatprep.subr.mxu0 0.0
    %2477 = vmatpush2.xpose.msra.mxu0 0.0
    %2478 = vmatprep.subr.mxu0 0.0
    %2479 = vmatpush2.xpose.msra.mxu0 0.0
    %2480 = vmatprep.subr.mxu0 0.0
    %2481 = vmatpush2.xpose.msra.mxu0 0.0
    %2482 = vmatprep.subr.mxu0 0.0
    %2483 = vmatpush2.xpose.msra.mxu0 0.0
    %2484 = vmatprep.subr.mxu0 0.0
    %2485 = vmatpush2.xpose.msra.mxu0 0.0
    %2486 = vmatprep.subr.mxu0 0.0
    %2487 = vmatpush2.xpose.msra.mxu0 0.0
    %2488 = vmatprep.subr.mxu0 0.0
    %2489 = vmatpush2.xpose.msra.mxu0 0.0
    %2490 = vmatprep.subr.mxu0 0.0
    %2491 = vmatpush2.xpose.msra.mxu0 0.0
    %2492 = vmatprep.subr.mxu0 0.0
    %2493 = vmatpush2.xpose.msra.mxu0 0.0
    %2494 = vmatprep.subr.mxu0 0.0
    %2495 = vmatpush2.xpose.msra.mxu0 0.0
    %2496 = vmatprep.subr.mxu0 0.0
    %2497 = vmatpush2.xpose.msra.mxu0 0.0
    %2498 = vmatprep.subr.mxu0 0.0
    %2499 = vmatpush2.xpose.msra.mxu0 0.0
    %2500 = vmatprep.subr.mxu0 0.0
    %2501 = vmatpush2.xpose.msra.mxu0 0.0
    %2502 = vmatprep.subr.mxu0 0.0
    %2503 = vmatpush2.xpose.msra.mxu0 0.0
    %2504 = vmatprep.subr.mxu0 0.0
    %2505 = vmatpush2.xpose.msra.mxu0 0.0
    %2506 = vmatprep.subr.mxu0 0.0
    %2507 = vmatpush2.xpose.msra.mxu0 0.0
    %2508 = vmatprep.mubr.f32.mxu0 0.0
    %2509 = vmatmul.mubr.f32.gmra.mxu0 %v2440
    %v2510 = vpop.f32.mrf.mxu0
    %v2511 = vadd.f32 0.0, %v2510
    %v2512 = vpop.f32.mrf.mxu0
    %2513 = vdwg.mxu0
    %2514 = vrot.lane.b32.xlu0 %v2103, 120
    %v2515 = vpop.permute.xlu0 %2514
    %2516 = vrot.lane.b32.xlu0 %v2103, 88
    %v2517 = vpop.permute.xlu0 %2516
    %v2518 = vsel %vm279, %v2515, 0
    %v2520 = vsel %vm279, %v2517, 0
    %2522 = vmatprep.subr.mxu0 0.0
    %2523 = vmatpush1.xpose.msra.mxu0 0.0
    %2524 = vmatprep.subr.mxu0 0.0
    %2525 = vmatpush1.xpose.msra.mxu0 0.0
    %2526 = vmatprep.subr.mxu0 0.0
    %2527 = vmatpush1.xpose.msra.mxu0 0.0
    %2528 = vmatprep.subr.mxu0 0.0
    %2529 = vmatpush1.xpose.msra.mxu0 0.0
    %2530 = vmatprep.subr.mxu0 0.0
    %2531 = vmatpush1.xpose.msra.mxu0 0.0
    %2532 = vmatprep.subr.mxu0 0.0
    %2533 = vmatpush1.xpose.msra.mxu0 0.0
    %2534 = vmatprep.subr.mxu0 0.0
    %2535 = vmatpush1.xpose.msra.mxu0 0.0
    %2536 = vmatprep.subr.mxu0 0.0
    %2537 = vmatpush1.xpose.msra.mxu0 0.0
    %2538 = vmatprep.subr.mxu0 0.0
    %2539 = vmatpush1.xpose.msra.mxu0 0.0
    %2540 = vmatprep.subr.mxu0 0.0
    %2541 = vmatpush1.xpose.msra.mxu0 0.0
    %2542 = vmatprep.subr.mxu0 0.0
    %2543 = vmatpush1.xpose.msra.mxu0 0.0
    %2544 = vmatprep.subr.mxu0 0.0
    %2545 = vmatpush1.xpose.msra.mxu0 0.0
    %2546 = vmatprep.subr.mxu0 0.0
    %2547 = vmatpush1.xpose.msra.mxu0 0.0
    %2548 = vmatprep.subr.mxu0 0.0
    %2549 = vmatpush1.xpose.msra.mxu0 0.0
    %2550 = vmatprep.subr.mxu0 0.0
    %2551 = vmatpush1.xpose.msra.mxu0 0.0
    %2552 = vmatprep.subr.mxu0 0.0
    %2553 = vmatpush1.xpose.msra.mxu0 %v2520
    %2554 = vmatprep.subr.mxu0 0.0
    %2555 = vmatpush2.xpose.msra.mxu0 0.0
    %2556 = vmatprep.subr.mxu0 0.0
    %2557 = vmatpush2.xpose.msra.mxu0 0.0
    %2558 = vmatprep.subr.mxu0 0.0
    %2559 = vmatpush2.xpose.msra.mxu0 0.0
    %2560 = vmatprep.subr.mxu0 0.0
    %2561 = vmatpush2.xpose.msra.mxu0 0.0
    %2562 = vmatprep.subr.mxu0 0.0
    %2563 = vmatpush2.xpose.msra.mxu0 0.0
    %2564 = vmatprep.subr.mxu0 0.0
    %2565 = vmatpush2.xpose.msra.mxu0 0.0
    %2566 = vmatprep.subr.mxu0 0.0
    %2567 = vmatpush2.xpose.msra.mxu0 0.0
    %2568 = vmatprep.subr.mxu0 0.0
    %2569 = vmatpush2.xpose.msra.mxu0 0.0
    %2570 = vmatprep.subr.mxu0 0.0
    %2571 = vmatpush2.xpose.msra.mxu0 0.0
    %2572 = vmatprep.subr.mxu0 0.0
    %2573 = vmatpush2.xpose.msra.mxu0 0.0
    %2574 = vmatprep.subr.mxu0 0.0
    %2575 = vmatpush2.xpose.msra.mxu0 0.0
    %2576 = vmatprep.subr.mxu0 0.0
    %2577 = vmatpush2.xpose.msra.mxu0 0.0
    %2578 = vmatprep.subr.mxu0 0.0
    %2579 = vmatpush2.xpose.msra.mxu0 0.0
    %2580 = vmatprep.subr.mxu0 0.0
    %2581 = vmatpush2.xpose.msra.mxu0 0.0
    %2582 = vmatprep.subr.mxu0 0.0
    %2583 = vmatpush2.xpose.msra.mxu0 0.0
    %2584 = vmatprep.subr.mxu0 0.0
    %2585 = vmatpush2.xpose.msra.mxu0 0.0
    %2586 = vmatprep.mubr.f32.mxu0 0.0
    %2587 = vmatmul.mubr.f32.gmra.mxu0 %v2518
    %v2588 = vpop.f32.mrf.mxu0
    %v2589 = vadd.f32 0.0, %v2588
    %v2590 = vpop.f32.mrf.mxu0
    %2591 = vdwg.mxu0
    %v2592 = vmul.f32 %v2511, 0.35355338
    %v2593 = vmul.f32 %v2589, 0.35355338
    %v2594 = vsel %vm279, %v2592, -inf
    %2595 = vmax.xlane.f32.xlu0 %v2594
    %v2596 = vpop.xlane.xlu0 %2595
    %v2597 = vsel %vm279, %v2593, -inf
    %2598 = vmax.xlane.f32.xlu0 %v2597
    %v2599 = vpop.xlane.xlu0 %2598
    %v2600 = vsub.f32 %v2592, %v2596
    %v2601 = vsub.f32 %v2593, %v2599
    %v2602 = vmul.f32 %v2600, 1.442695
    %v2603 = vpow.pop %v2602
    %v2604 = vmul.f32 %v2601, 1.442695
    %v2605 = vpow.pop %v2604
    %v2606 = vsel %vm279, %v2603, 0.0
    %2607 = vadd.xlane.f32.xlu0 %v2606
    %v2608 = vpop.xlane.xlu0 %2607
    %v2609 = vsel %vm279, %v2605, 0.0
    %2610 = vadd.xlane.f32.xlu0 %v2609
    %v2611 = vpop.xlane.xlu0 %2610
    %v2612 = vrcp.pop %v2608
    %v2613 = vrcp.pop %v2611
    %v2614 = vmul.f32 %v2603, %v2612
    %v2615 = vmul.f32 %v2605, %v2613
    %2616 = vrot.lane.b32.xlu0 %v2098, 56
    %v2617 = vpop.permute.xlu0 %2616
    %v2620 = vsel %vm279, %v2614, 0
    %2622 = vmatprep.subr.mxu0 0.0
    %2623 = vmatpush1.msra.mxu0 0.0
    %2624 = vmatprep.subr.mxu0 0.0
    %2625 = vmatpush1.msra.mxu0 0.0
    %2626 = vmatprep.subr.mxu0 0.0
    %2627 = vmatpush1.msra.mxu0 0.0
    %2628 = vmatprep.subr.mxu0 0.0
    %2629 = vmatpush1.msra.mxu0 0.0
    %2630 = vmatprep.subr.mxu0 0.0
    %2631 = vmatpush1.msra.mxu0 0.0
    %2632 = vmatprep.subr.mxu0 0.0
    %2633 = vmatpush1.msra.mxu0 0.0
    %2634 = vmatprep.subr.mxu0 0.0
    %2635 = vmatpush1.msra.mxu0 0.0
    %2636 = vmatprep.subr.mxu0 0.0
    %2637 = vmatpush1.msra.mxu0 0.0
    %2638 = vmatprep.subr.mxu0 0.0
    %2639 = vmatpush1.msra.mxu0 0.0
    %2640 = vmatprep.subr.mxu0 0.0
    %2641 = vmatpush1.msra.mxu0 0.0
    %2642 = vmatprep.subr.mxu0 0.0
    %2643 = vmatpush1.msra.mxu0 0.0
    %2644 = vmatprep.subr.mxu0 0.0
    %2645 = vmatpush1.msra.mxu0 0.0
    %2646 = vmatprep.subr.mxu0 0.0
    %2647 = vmatpush1.msra.mxu0 0.0
    %2648 = vmatprep.subr.mxu0 0.0
    %2649 = vmatpush1.msra.mxu0 0.0
    %2650 = vmatprep.subr.mxu0 0.0
    %2651 = vmatpush1.msra.mxu0 0.0
    %2652 = vmatprep.subr.mxu0 0.0
    %2653 = vmatpush1.msra.mxu0 %v2617
    %2654 = vmatprep.subr.mxu0 0.0
    %2655 = vmatpush2.msra.mxu0 0.0
    %2656 = vmatprep.subr.mxu0 0.0
    %2657 = vmatpush2.msra.mxu0 0.0
    %2658 = vmatprep.subr.mxu0 0.0
    %2659 = vmatpush2.msra.mxu0 0.0
    %2660 = vmatprep.subr.mxu0 0.0
    %2661 = vmatpush2.msra.mxu0 0.0
    %2662 = vmatprep.subr.mxu0 0.0
    %2663 = vmatpush2.msra.mxu0 0.0
    %2664 = vmatprep.subr.mxu0 0.0
    %2665 = vmatpush2.msra.mxu0 0.0
    %2666 = vmatprep.subr.mxu0 0.0
    %2667 = vmatpush2.msra.mxu0 0.0
    %2668 = vmatprep.subr.mxu0 0.0
    %2669 = vmatpush2.msra.mxu0 0.0
    %2670 = vmatprep.subr.mxu0 0.0
    %2671 = vmatpush2.msra.mxu0 0.0
    %2672 = vmatprep.subr.mxu0 0.0
    %2673 = vmatpush2.msra.mxu0 0.0
    %2674 = vmatprep.subr.mxu0 0.0
    %2675 = vmatpush2.msra.mxu0 0.0
    %2676 = vmatprep.subr.mxu0 0.0
    %2677 = vmatpush2.msra.mxu0 0.0
    %2678 = vmatprep.subr.mxu0 0.0
    %2679 = vmatpush2.msra.mxu0 0.0
    %2680 = vmatprep.subr.mxu0 0.0
    %2681 = vmatpush2.msra.mxu0 0.0
    %2682 = vmatprep.subr.mxu0 0.0
    %2683 = vmatpush2.msra.mxu0 0.0
    %2684 = vmatprep.subr.mxu0 0.0
    %2685 = vmatpush2.msra.mxu0 0.0
    %2686 = vmatprep.mubr.f32.mxu0 0.0
    %2687 = vmatmul.mubr.f32.gmra.mxu0 %v2620
    %v2688 = vpop.f32.mrf.mxu0
    %v2689 = vadd.f32 0.0, %v2688
    %v2690 = vpop.f32.mrf.mxu0
    %2691 = vdwg.mxu0
    %2692 = vrot.lane.b32.xlu0 %v2103, 56
    %v2693 = vpop.permute.xlu0 %2692
    %v2696 = vsel %vm279, %v2615, 0
    %2698 = vmatprep.subr.mxu0 0.0
    %2699 = vmatpush1.msra.mxu0 0.0
    %2700 = vmatprep.subr.mxu0 0.0
    %2701 = vmatpush1.msra.mxu0 0.0
    %2702 = vmatprep.subr.mxu0 0.0
    %2703 = vmatpush1.msra.mxu0 0.0
    %2704 = vmatprep.subr.mxu0 0.0
    %2705 = vmatpush1.msra.mxu0 0.0
    %2706 = vmatprep.subr.mxu0 0.0
    %2707 = vmatpush1.msra.mxu0 0.0
    %2708 = vmatprep.subr.mxu0 0.0
    %2709 = vmatpush1.msra.mxu0 0.0
    %2710 = vmatprep.subr.mxu0 0.0
    %2711 = vmatpush1.msra.mxu0 0.0
    %2712 = vmatprep.subr.mxu0 0.0
    %2713 = vmatpush1.msra.mxu0 0.0
    %2714 = vmatprep.subr.mxu0 0.0
    %2715 = vmatpush1.msra.mxu0 0.0
    %2716 = vmatprep.subr.mxu0 0.0
    %2717 = vmatpush1.msra.mxu0 0.0
    %2718 = vmatprep.subr.mxu0 0.0
    %2719 = vmatpush1.msra.mxu0 0.0
    %2720 = vmatprep.subr.mxu0 0.0
    %2721 = vmatpush1.msra.mxu0 0.0
    %2722 = vmatprep.subr.mxu0 0.0
    %2723 = vmatpush1.msra.mxu0 0.0
    %2724 = vmatprep.subr.mxu0 0.0
    %2725 = vmatpush1.msra.mxu0 0.0
    %2726 = vmatprep.subr.mxu0 0.0
    %2727 = vmatpush1.msra.mxu0 0.0
    %2728 = vmatprep.subr.mxu0 0.0
    %2729 = vmatpush1.msra.mxu0 %v2693
    %2730 = vmatprep.subr.mxu0 0.0
    %2731 = vmatpush2.msra.mxu0 0.0
    %2732 = vmatprep.subr.mxu0 0.0
    %2733 = vmatpush2.msra.mxu0 0.0
    %2734 = vmatprep.subr.mxu0 0.0
    %2735 = vmatpush2.msra.mxu0 0.0
    %2736 = vmatprep.subr.mxu0 0.0
    %2737 = vmatpush2.msra.mxu0 0.0
    %2738 = vmatprep.subr.mxu0 0.0
    %2739 = vmatpush2.msra.mxu0 0.0
    %2740 = vmatprep.subr.mxu0 0.0
    %2741 = vmatpush2.msra.mxu0 0.0
    %2742 = vmatprep.subr.mxu0 0.0
    %2743 = vmatpush2.msra.mxu0 0.0
    %2744 = vmatprep.subr.mxu0 0.0
    %2745 = vmatpush2.msra.mxu0 0.0
    %2746 = vmatprep.subr.mxu0 0.0
    %2747 = vmatpush2.msra.mxu0 0.0
    %2748 = vmatprep.subr.mxu0 0.0
    %2749 = vmatpush2.msra.mxu0 0.0
    %2750 = vmatprep.subr.mxu0 0.0
    %2751 = vmatpush2.msra.mxu0 0.0
    %2752 = vmatprep.subr.mxu0 0.0
    %2753 = vmatpush2.msra.mxu0 0.0
    %2754 = vmatprep.subr.mxu0 0.0
    %2755 = vmatpush2.msra.mxu0 0.0
    %2756 = vmatprep.subr.mxu0 0.0
    %2757 = vmatpush2.msra.mxu0 0.0
    %2758 = vmatprep.subr.mxu0 0.0
    %2759 = vmatpush2.msra.mxu0 0.0
    %2760 = vmatprep.subr.mxu0 0.0
    %2761 = vmatpush2.msra.mxu0 0.0
    %2762 = vmatprep.mubr.f32.mxu0 0.0
    %2763 = vmatmul.mubr.f32.gmra.mxu0 %v2696
    %v2764 = vpop.f32.mrf.mxu0
    %v2765 = vadd.f32 0.0, %v2764
    %v2766 = vpop.f32.mrf.mxu0
    %2767 = vdwg.mxu0
    %2768 = vrot.lane.b32.xlu0 %v2098, 112
    %v2769 = vpop.permute.xlu0 %2768
    %2770 = vrot.lane.b32.xlu0 %v2098, 80
    %v2771 = vpop.permute.xlu0 %2770
    %v2772 = vsel %vm279, %v2769, 0
    %v2774 = vsel %vm279, %v2771, 0
    %2776 = vmatprep.subr.mxu0 0.0
    %2777 = vmatpush1.xpose.msra.mxu0 0.0
    %2778 = vmatprep.subr.mxu0 0.0
    %2779 = vmatpush1.xpose.msra.mxu0 0.0
    %2780 = vmatprep.subr.mxu0 0.0
    %2781 = vmatpush1.xpose.msra.mxu0 0.0
    %2782 = vmatprep.subr.mxu0 0.0
    %2783 = vmatpush1.xpose.msra.mxu0 0.0
    %2784 = vmatprep.subr.mxu0 0.0
    %2785 = vmatpush1.xpose.msra.mxu0 0.0
    %2786 = vmatprep.subr.mxu0 0.0
    %2787 = vmatpush1.xpose.msra.mxu0 0.0
    %2788 = vmatprep.subr.mxu0 0.0
    %2789 = vmatpush1.xpose.msra.mxu0 0.0
    %2790 = vmatprep.subr.mxu0 0.0
    %2791 = vmatpush1.xpose.msra.mxu0 0.0
    %2792 = vmatprep.subr.mxu0 0.0
    %2793 = vmatpush1.xpose.msra.mxu0 0.0
    %2794 = vmatprep.subr.mxu0 0.0
    %2795 = vmatpush1.xpose.msra.mxu0 0.0
    %2796 = vmatprep.subr.mxu0 0.0
    %2797 = vmatpush1.xpose.msra.mxu0 0.0
    %2798 = vmatprep.subr.mxu0 0.0
    %2799 = vmatpush1.xpose.msra.mxu0 0.0
    %2800 = vmatprep.subr.mxu0 0.0
    %2801 = vmatpush1.xpose.msra.mxu0 0.0
    %2802 = vmatprep.subr.mxu0 0.0
    %2803 = vmatpush1.xpose.msra.mxu0 0.0
    %2804 = vmatprep.subr.mxu0 0.0
    %2805 = vmatpush1.xpose.msra.mxu0 0.0
    %2806 = vmatprep.subr.mxu0 0.0
    %2807 = vmatpush1.xpose.msra.mxu0 %v2774
    %2808 = vmatprep.subr.mxu0 0.0
    %2809 = vmatpush2.xpose.msra.mxu0 0.0
    %2810 = vmatprep.subr.mxu0 0.0
    %2811 = vmatpush2.xpose.msra.mxu0 0.0
    %2812 = vmatprep.subr.mxu0 0.0
    %2813 = vmatpush2.xpose.msra.mxu0 0.0
    %2814 = vmatprep.subr.mxu0 0.0
    %2815 = vmatpush2.xpose.msra.mxu0 0.0
    %2816 = vmatprep.subr.mxu0 0.0
    %2817 = vmatpush2.xpose.msra.mxu0 0.0
    %2818 = vmatprep.subr.mxu0 0.0
    %2819 = vmatpush2.xpose.msra.mxu0 0.0
    %2820 = vmatprep.subr.mxu0 0.0
    %2821 = vmatpush2.xpose.msra.mxu0 0.0
    %2822 = vmatprep.subr.mxu0 0.0
    %2823 = vmatpush2.xpose.msra.mxu0 0.0
    %2824 = vmatprep.subr.mxu0 0.0
    %2825 = vmatpush2.xpose.msra.mxu0 0.0
    %2826 = vmatprep.subr.mxu0 0.0
    %2827 = vmatpush2.xpose.msra.mxu0 0.0
    %2828 = vmatprep.subr.mxu0 0.0
    %2829 = vmatpush2.xpose.msra.mxu0 0.0
    %2830 = vmatprep.subr.mxu0 0.0
    %2831 = vmatpush2.xpose.msra.mxu0 0.0
    %2832 = vmatprep.subr.mxu0 0.0
    %2833 = vmatpush2.xpose.msra.mxu0 0.0
    %2834 = vmatprep.subr.mxu0 0.0
    %2835 = vmatpush2.xpose.msra.mxu0 0.0
    %2836 = vmatprep.subr.mxu0 0.0
    %2837 = vmatpush2.xpose.msra.mxu0 0.0
    %2838 = vmatprep.subr.mxu0 0.0
    %2839 = vmatpush2.xpose.msra.mxu0 0.0
    %2840 = vmatprep.mubr.f32.mxu0 0.0
    %2841 = vmatmul.mubr.f32.gmra.mxu0 %v2772
    %v2842 = vpop.f32.mrf.mxu0
    %v2843 = vadd.f32 0.0, %v2842
    %v2844 = vpop.f32.mrf.mxu0
    %2845 = vdwg.mxu0
    %2846 = vrot.lane.b32.xlu0 %v2103, 112
    %v2847 = vpop.permute.xlu0 %2846
    %2848 = vrot.lane.b32.xlu0 %v2103, 80
    %v2849 = vpop.permute.xlu0 %2848
    %v2850 = vsel %vm279, %v2847, 0
    %v2852 = vsel %vm279, %v2849, 0
    %2854 = vmatprep.subr.mxu0 0.0
    %2855 = vmatpush1.xpose.msra.mxu0 0.0
    %2856 = vmatprep.subr.mxu0 0.0
    %2857 = vmatpush1.xpose.msra.mxu0 0.0
    %2858 = vmatprep.subr.mxu0 0.0
    %2859 = vmatpush1.xpose.msra.mxu0 0.0
    %2860 = vmatprep.subr.mxu0 0.0
    %2861 = vmatpush1.xpose.msra.mxu0 0.0
    %2862 = vmatprep.subr.mxu0 0.0
    %2863 = vmatpush1.xpose.msra.mxu0 0.0
    %2864 = vmatprep.subr.mxu0 0.0
    %2865 = vmatpush1.xpose.msra.mxu0 0.0
    %2866 = vmatprep.subr.mxu0 0.0
    %2867 = vmatpush1.xpose.msra.mxu0 0.0
    %2868 = vmatprep.subr.mxu0 0.0
    %2869 = vmatpush1.xpose.msra.mxu0 0.0
    %2870 = vmatprep.subr.mxu0 0.0
    %2871 = vmatpush1.xpose.msra.mxu0 0.0
    %2872 = vmatprep.subr.mxu0 0.0
    %2873 = vmatpush1.xpose.msra.mxu0 0.0
    %2874 = vmatprep.subr.mxu0 0.0
    %2875 = vmatpush1.xpose.msra.mxu0 0.0
    %2876 = vmatprep.subr.mxu0 0.0
    %2877 = vmatpush1.xpose.msra.mxu0 0.0
    %2878 = vmatprep.subr.mxu0 0.0
    %2879 = vmatpush1.xpose.msra.mxu0 0.0
    %2880 = vmatprep.subr.mxu0 0.0
    %2881 = vmatpush1.xpose.msra.mxu0 0.0
    %2882 = vmatprep.subr.mxu0 0.0
    %2883 = vmatpush1.xpose.msra.mxu0 0.0
    %2884 = vmatprep.subr.mxu0 0.0
    %2885 = vmatpush1.xpose.msra.mxu0 %v2852
    %2886 = vmatprep.subr.mxu0 0.0
    %2887 = vmatpush2.xpose.msra.mxu0 0.0
    %2888 = vmatprep.subr.mxu0 0.0
    %2889 = vmatpush2.xpose.msra.mxu0 0.0
    %2890 = vmatprep.subr.mxu0 0.0
    %2891 = vmatpush2.xpose.msra.mxu0 0.0
    %2892 = vmatprep.subr.mxu0 0.0
    %2893 = vmatpush2.xpose.msra.mxu0 0.0
    %2894 = vmatprep.subr.mxu0 0.0
    %2895 = vmatpush2.xpose.msra.mxu0 0.0
    %2896 = vmatprep.subr.mxu0 0.0
    %2897 = vmatpush2.xpose.msra.mxu0 0.0
    %2898 = vmatprep.subr.mxu0 0.0
    %2899 = vmatpush2.xpose.msra.mxu0 0.0
    %2900 = vmatprep.subr.mxu0 0.0
    %2901 = vmatpush2.xpose.msra.mxu0 0.0
    %2902 = vmatprep.subr.mxu0 0.0
    %2903 = vmatpush2.xpose.msra.mxu0 0.0
    %2904 = vmatprep.subr.mxu0 0.0
    %2905 = vmatpush2.xpose.msra.mxu0 0.0
    %2906 = vmatprep.subr.mxu0 0.0
    %2907 = vmatpush2.xpose.msra.mxu0 0.0
    %2908 = vmatprep.subr.mxu0 0.0
    %2909 = vmatpush2.xpose.msra.mxu0 0.0
    %2910 = vmatprep.subr.mxu0 0.0
    %2911 = vmatpush2.xpose.msra.mxu0 0.0
    %2912 = vmatprep.subr.mxu0 0.0
    %2913 = vmatpush2.xpose.msra.mxu0 0.0
    %2914 = vmatprep.subr.mxu0 0.0
    %2915 = vmatpush2.xpose.msra.mxu0 0.0
    %2916 = vmatprep.subr.mxu0 0.0
    %2917 = vmatpush2.xpose.msra.mxu0 0.0
    %2918 = vmatprep.mubr.f32.mxu0 0.0
    %2919 = vmatmul.mubr.f32.gmra.mxu0 %v2850
    %v2920 = vpop.f32.mrf.mxu0
    %v2921 = vadd.f32 0.0, %v2920
    %v2922 = vpop.f32.mrf.mxu0
    %2923 = vdwg.mxu0
    %v2924 = vmul.f32 %v2843, 0.35355338
    %v2925 = vmul.f32 %v2921, 0.35355338
    %v2926 = vsel %vm279, %v2924, -inf
    %2927 = vmax.xlane.f32.xlu0 %v2926
    %v2928 = vpop.xlane.xlu0 %2927
    %v2929 = vsel %vm279, %v2925, -inf
    %2930 = vmax.xlane.f32.xlu0 %v2929
    %v2931 = vpop.xlane.xlu0 %2930
    %v2932 = vsub.f32 %v2924, %v2928
    %v2933 = vsub.f32 %v2925, %v2931
    %v2934 = vmul.f32 %v2932, 1.442695
    %v2935 = vpow.pop %v2934
    %v2936 = vmul.f32 %v2933, 1.442695
    %v2937 = vpow.pop %v2936
    %v2938 = vsel %vm279, %v2935, 0.0
    %2939 = vadd.xlane.f32.xlu0 %v2938
    %v2940 = vpop.xlane.xlu0 %2939
    %v2941 = vsel %vm279, %v2937, 0.0
    %2942 = vadd.xlane.f32.xlu0 %v2941
    %v2943 = vpop.xlane.xlu0 %2942
    %v2944 = vrcp.pop %v2940
    %v2945 = vrcp.pop %v2943
    %v2946 = vmul.f32 %v2935, %v2944
    %v2947 = vmul.f32 %v2937, %v2945
    %2948 = vrot.lane.b32.xlu0 %v2098, 48
    %v2949 = vpop.permute.xlu0 %2948
    %v2952 = vsel %vm279, %v2946, 0
    %2954 = vmatprep.subr.mxu0 0.0
    %2955 = vmatpush1.msra.mxu0 0.0
    %2956 = vmatprep.subr.mxu0 0.0
    %2957 = vmatpush1.msra.mxu0 0.0
    %2958 = vmatprep.subr.mxu0 0.0
    %2959 = vmatpush1.msra.mxu0 0.0
    %2960 = vmatprep.subr.mxu0 0.0
    %2961 = vmatpush1.msra.mxu0 0.0
    %2962 = vmatprep.subr.mxu0 0.0
    %2963 = vmatpush1.msra.mxu0 0.0
    %2964 = vmatprep.subr.mxu0 0.0
    %2965 = vmatpush1.msra.mxu0 0.0
    %2966 = vmatprep.subr.mxu0 0.0
    %2967 = vmatpush1.msra.mxu0 0.0
    %2968 = vmatprep.subr.mxu0 0.0
    %2969 = vmatpush1.msra.mxu0 0.0
    %2970 = vmatprep.subr.mxu0 0.0
    %2971 = vmatpush1.msra.mxu0 0.0
    %2972 = vmatprep.subr.mxu0 0.0
    %2973 = vmatpush1.msra.mxu0 0.0
    %2974 = vmatprep.subr.mxu0 0.0
    %2975 = vmatpush1.msra.mxu0 0.0
    %2976 = vmatprep.subr.mxu0 0.0
    %2977 = vmatpush1.msra.mxu0 0.0
    %2978 = vmatprep.subr.mxu0 0.0
    %2979 = vmatpush1.msra.mxu0 0.0
    %2980 = vmatprep.subr.mxu0 0.0
    %2981 = vmatpush1.msra.mxu0 0.0
    %2982 = vmatprep.subr.mxu0 0.0
    %2983 = vmatpush1.msra.mxu0 0.0
    %2984 = vmatprep.subr.mxu0 0.0
    %2985 = vmatpush1.msra.mxu0 %v2949
    %2986 = vmatprep.subr.mxu0 0.0
    %2987 = vmatpush2.msra.mxu0 0.0
    %2988 = vmatprep.subr.mxu0 0.0
    %2989 = vmatpush2.msra.mxu0 0.0
    %2990 = vmatprep.subr.mxu0 0.0
    %2991 = vmatpush2.msra.mxu0 0.0
    %2992 = vmatprep.subr.mxu0 0.0
    %2993 = vmatpush2.msra.mxu0 0.0
    %2994 = vmatprep.subr.mxu0 0.0
    %2995 = vmatpush2.msra.mxu0 0.0
    %2996 = vmatprep.subr.mxu0 0.0
    %2997 = vmatpush2.msra.mxu0 0.0
    %2998 = vmatprep.subr.mxu0 0.0
    %2999 = vmatpush2.msra.mxu0 0.0
    %3000 = vmatprep.subr.mxu0 0.0
    %3001 = vmatpush2.msra.mxu0 0.0
    %3002 = vmatprep.subr.mxu0 0.0
    %3003 = vmatpush2.msra.mxu0 0.0
    %3004 = vmatprep.subr.mxu0 0.0
    %3005 = vmatpush2.msra.mxu0 0.0
    %3006 = vmatprep.subr.mxu0 0.0
    %3007 = vmatpush2.msra.mxu0 0.0
    %3008 = vmatprep.subr.mxu0 0.0
    %3009 = vmatpush2.msra.mxu0 0.0
    %3010 = vmatprep.subr.mxu0 0.0
    %3011 = vmatpush2.msra.mxu0 0.0
    %3012 = vmatprep.subr.mxu0 0.0
    %3013 = vmatpush2.msra.mxu0 0.0
    %3014 = vmatprep.subr.mxu0 0.0
    %3015 = vmatpush2.msra.mxu0 0.0
    %3016 = vmatprep.subr.mxu0 0.0
    %3017 = vmatpush2.msra.mxu0 0.0
    %3018 = vmatprep.mubr.f32.mxu0 0.0
    %3019 = vmatmul.mubr.f32.gmra.mxu0 %v2952
    %v3020 = vpop.f32.mrf.mxu0
    %v3021 = vadd.f32 0.0, %v3020
    %v3022 = vpop.f32.mrf.mxu0
    %3023 = vdwg.mxu0
    %3024 = vrot.lane.b32.xlu0 %v2103, 48
    %v3025 = vpop.permute.xlu0 %3024
    %v3028 = vsel %vm279, %v2947, 0
    %3030 = vmatprep.subr.mxu0 0.0
    %3031 = vmatpush1.msra.mxu0 0.0
    %3032 = vmatprep.subr.mxu0 0.0
    %3033 = vmatpush1.msra.mxu0 0.0
    %3034 = vmatprep.subr.mxu0 0.0
    %3035 = vmatpush1.msra.mxu0 0.0
    %3036 = vmatprep.subr.mxu0 0.0
    %3037 = vmatpush1.msra.mxu0 0.0
    %3038 = vmatprep.subr.mxu0 0.0
    %3039 = vmatpush1.msra.mxu0 0.0
    %3040 = vmatprep.subr.mxu0 0.0
    %3041 = vmatpush1.msra.mxu0 0.0
    %3042 = vmatprep.subr.mxu0 0.0
    %3043 = vmatpush1.msra.mxu0 0.0
    %3044 = vmatprep.subr.mxu0 0.0
    %3045 = vmatpush1.msra.mxu0 0.0
    %3046 = vmatprep.subr.mxu0 0.0
    %3047 = vmatpush1.msra.mxu0 0.0
    %3048 = vmatprep.subr.mxu0 0.0
    %3049 = vmatpush1.msra.mxu0 0.0
    %3050 = vmatprep.subr.mxu0 0.0
    %3051 = vmatpush1.msra.mxu0 0.0
    %3052 = vmatprep.subr.mxu0 0.0
    %3053 = vmatpush1.msra.mxu0 0.0
    %3054 = vmatprep.subr.mxu0 0.0
    %3055 = vmatpush1.msra.mxu0 0.0
    %3056 = vmatprep.subr.mxu0 0.0
    %3057 = vmatpush1.msra.mxu0 0.0
    %3058 = vmatprep.subr.mxu0 0.0
    %3059 = vmatpush1.msra.mxu0 0.0
    %3060 = vmatprep.subr.mxu0 0.0
    %3061 = vmatpush1.msra.mxu0 %v3025
    %3062 = vmatprep.subr.mxu0 0.0
    %3063 = vmatpush2.msra.mxu0 0.0
    %3064 = vmatprep.subr.mxu0 0.0
    %3065 = vmatpush2.msra.mxu0 0.0
    %3066 = vmatprep.subr.mxu0 0.0
    %3067 = vmatpush2.msra.mxu0 0.0
    %3068 = vmatprep.subr.mxu0 0.0
    %3069 = vmatpush2.msra.mxu0 0.0
    %3070 = vmatprep.subr.mxu0 0.0
    %3071 = vmatpush2.msra.mxu0 0.0
    %3072 = vmatprep.subr.mxu0 0.0
    %3073 = vmatpush2.msra.mxu0 0.0
    %3074 = vmatprep.subr.mxu0 0.0
    %3075 = vmatpush2.msra.mxu0 0.0
    %3076 = vmatprep.subr.mxu0 0.0
    %3077 = vmatpush2.msra.mxu0 0.0
    %3078 = vmatprep.subr.mxu0 0.0
    %3079 = vmatpush2.msra.mxu0 0.0
    %3080 = vmatprep.subr.mxu0 0.0
    %3081 = vmatpush2.msra.mxu0 0.0
    %3082 = vmatprep.subr.mxu0 0.0
    %3083 = vmatpush2.msra.mxu0 0.0
    %3084 = vmatprep.subr.mxu0 0.0
    %3085 = vmatpush2.msra.mxu0 0.0
    %3086 = vmatprep.subr.mxu0 0.0
    %3087 = vmatpush2.msra.mxu0 0.0
    %3088 = vmatprep.subr.mxu0 0.0
    %3089 = vmatpush2.msra.mxu0 0.0
    %3090 = vmatprep.subr.mxu0 0.0
    %3091 = vmatpush2.msra.mxu0 0.0
    %3092 = vmatprep.subr.mxu0 0.0
    %3093 = vmatpush2.msra.mxu0 0.0
    %3094 = vmatprep.mubr.f32.mxu0 0.0
    %3095 = vmatmul.mubr.f32.gmra.mxu0 %v3028
    %v3096 = vpop.f32.mrf.mxu0
    %v3097 = vadd.f32 0.0, %v3096
    %v3098 = vpop.f32.mrf.mxu0
    %3099 = vdwg.mxu0
    %3100 = vrot.lane.b32.xlu0 %v2098, 104
    %v3101 = vpop.permute.xlu0 %3100
    %3102 = vrot.lane.b32.xlu0 %v2098, 72
    %v3103 = vpop.permute.xlu0 %3102
    %v3104 = vsel %vm279, %v3101, 0
    %v3106 = vsel %vm279, %v3103, 0
    %3108 = vmatprep.subr.mxu0 0.0
    %3109 = vmatpush1.xpose.msra.mxu0 0.0
    %3110 = vmatprep.subr.mxu0 0.0
    %3111 = vmatpush1.xpose.msra.mxu0 0.0
    %3112 = vmatprep.subr.mxu0 0.0
    %3113 = vmatpush1.xpose.msra.mxu0 0.0
    %3114 = vmatprep.subr.mxu0 0.0
    %3115 = vmatpush1.xpose.msra.mxu0 0.0
    %3116 = vmatprep.subr.mxu0 0.0
    %3117 = vmatpush1.xpose.msra.mxu0 0.0
    %3118 = vmatprep.subr.mxu0 0.0
    %3119 = vmatpush1.xpose.msra.mxu0 0.0
    %3120 = vmatprep.subr.mxu0 0.0
    %3121 = vmatpush1.xpose.msra.mxu0 0.0
    %3122 = vmatprep.subr.mxu0 0.0
    %3123 = vmatpush1.xpose.msra.mxu0 0.0
    %3124 = vmatprep.subr.mxu0 0.0
    %3125 = vmatpush1.xpose.msra.mxu0 0.0
    %3126 = vmatprep.subr.mxu0 0.0
    %3127 = vmatpush1.xpose.msra.mxu0 0.0
    %3128 = vmatprep.subr.mxu0 0.0
    %3129 = vmatpush1.xpose.msra.mxu0 0.0
    %3130 = vmatprep.subr.mxu0 0.0
    %3131 = vmatpush1.xpose.msra.mxu0 0.0
    %3132 = vmatprep.subr.mxu0 0.0
    %3133 = vmatpush1.xpose.msra.mxu0 0.0
    %3134 = vmatprep.subr.mxu0 0.0
    %3135 = vmatpush1.xpose.msra.mxu0 0.0
    %3136 = vmatprep.subr.mxu0 0.0
    %3137 = vmatpush1.xpose.msra.mxu0 0.0
    %3138 = vmatprep.subr.mxu0 0.0
    %3139 = vmatpush1.xpose.msra.mxu0 %v3106
    %3140 = vmatprep.subr.mxu0 0.0
    %3141 = vmatpush2.xpose.msra.mxu0 0.0
    %3142 = vmatprep.subr.mxu0 0.0
    %3143 = vmatpush2.xpose.msra.mxu0 0.0
    %3144 = vmatprep.subr.mxu0 0.0
    %3145 = vmatpush2.xpose.msra.mxu0 0.0
    %3146 = vmatprep.subr.mxu0 0.0
    %3147 = vmatpush2.xpose.msra.mxu0 0.0
    %3148 = vmatprep.subr.mxu0 0.0
    %3149 = vmatpush2.xpose.msra.mxu0 0.0
    %3150 = vmatprep.subr.mxu0 0.0
    %3151 = vmatpush2.xpose.msra.mxu0 0.0
    %3152 = vmatprep.subr.mxu0 0.0
    %3153 = vmatpush2.xpose.msra.mxu0 0.0
    %3154 = vmatprep.subr.mxu0 0.0
    %3155 = vmatpush2.xpose.msra.mxu0 0.0
    %3156 = vmatprep.subr.mxu0 0.0
    %3157 = vmatpush2.xpose.msra.mxu0 0.0
    %3158 = vmatprep.subr.mxu0 0.0
    %3159 = vmatpush2.xpose.msra.mxu0 0.0
    %3160 = vmatprep.subr.mxu0 0.0
    %3161 = vmatpush2.xpose.msra.mxu0 0.0
    %3162 = vmatprep.subr.mxu0 0.0
    %3163 = vmatpush2.xpose.msra.mxu0 0.0
    %3164 = vmatprep.subr.mxu0 0.0
    %3165 = vmatpush2.xpose.msra.mxu0 0.0
    %3166 = vmatprep.subr.mxu0 0.0
    %3167 = vmatpush2.xpose.msra.mxu0 0.0
    %3168 = vmatprep.subr.mxu0 0.0
    %3169 = vmatpush2.xpose.msra.mxu0 0.0
    %3170 = vmatprep.subr.mxu0 0.0
    %3171 = vmatpush2.xpose.msra.mxu0 0.0
    %3172 = vmatprep.mubr.f32.mxu0 0.0
    %3173 = vmatmul.mubr.f32.gmra.mxu0 %v3104
    %v3174 = vpop.f32.mrf.mxu0
    %v3175 = vadd.f32 0.0, %v3174
    %v3176 = vpop.f32.mrf.mxu0
    %3177 = vdwg.mxu0
    %3178 = vrot.lane.b32.xlu0 %v2103, 104
    %v3179 = vpop.permute.xlu0 %3178
    %3180 = vrot.lane.b32.xlu0 %v2103, 72
    %v3181 = vpop.permute.xlu0 %3180
    %v3182 = vsel %vm279, %v3179, 0
    %v3184 = vsel %vm279, %v3181, 0
    %3186 = vmatprep.subr.mxu0 0.0
    %3187 = vmatpush1.xpose.msra.mxu0 0.0
    %3188 = vmatprep.subr.mxu0 0.0
    %3189 = vmatpush1.xpose.msra.mxu0 0.0
    %3190 = vmatprep.subr.mxu0 0.0
    %3191 = vmatpush1.xpose.msra.mxu0 0.0
    %3192 = vmatprep.subr.mxu0 0.0
    %3193 = vmatpush1.xpose.msra.mxu0 0.0
    %3194 = vmatprep.subr.mxu0 0.0
    %3195 = vmatpush1.xpose.msra.mxu0 0.0
    %3196 = vmatprep.subr.mxu0 0.0
    %3197 = vmatpush1.xpose.msra.mxu0 0.0
    %3198 = vmatprep.subr.mxu0 0.0
    %3199 = vmatpush1.xpose.msra.mxu0 0.0
    %3200 = vmatprep.subr.mxu0 0.0
    %3201 = vmatpush1.xpose.msra.mxu0 0.0
    %3202 = vmatprep.subr.mxu0 0.0
    %3203 = vmatpush1.xpose.msra.mxu0 0.0
    %3204 = vmatprep.subr.mxu0 0.0
    %3205 = vmatpush1.xpose.msra.mxu0 0.0
    %3206 = vmatprep.subr.mxu0 0.0
    %3207 = vmatpush1.xpose.msra.mxu0 0.0
    %3208 = vmatprep.subr.mxu0 0.0
    %3209 = vmatpush1.xpose.msra.mxu0 0.0
    %3210 = vmatprep.subr.mxu0 0.0
    %3211 = vmatpush1.xpose.msra.mxu0 0.0
    %3212 = vmatprep.subr.mxu0 0.0
    %3213 = vmatpush1.xpose.msra.mxu0 0.0
    %3214 = vmatprep.subr.mxu0 0.0
    %3215 = vmatpush1.xpose.msra.mxu0 0.0
    %3216 = vmatprep.subr.mxu0 0.0
    %3217 = vmatpush1.xpose.msra.mxu0 %v3184
    %3218 = vmatprep.subr.mxu0 0.0
    %3219 = vmatpush2.xpose.msra.mxu0 0.0
    %3220 = vmatprep.subr.mxu0 0.0
    %3221 = vmatpush2.xpose.msra.mxu0 0.0
    %3222 = vmatprep.subr.mxu0 0.0
    %3223 = vmatpush2.xpose.msra.mxu0 0.0
    %3224 = vmatprep.subr.mxu0 0.0
    %3225 = vmatpush2.xpose.msra.mxu0 0.0
    %3226 = vmatprep.subr.mxu0 0.0
    %3227 = vmatpush2.xpose.msra.mxu0 0.0
    %3228 = vmatprep.subr.mxu0 0.0
    %3229 = vmatpush2.xpose.msra.mxu0 0.0
    %3230 = vmatprep.subr.mxu0 0.0
    %3231 = vmatpush2.xpose.msra.mxu0 0.0
    %3232 = vmatprep.subr.mxu0 0.0
    %3233 = vmatpush2.xpose.msra.mxu0 0.0
    %3234 = vmatprep.subr.mxu0 0.0
    %3235 = vmatpush2.xpose.msra.mxu0 0.0
    %3236 = vmatprep.subr.mxu0 0.0
    %3237 = vmatpush2.xpose.msra.mxu0 0.0
    %3238 = vmatprep.subr.mxu0 0.0
    %3239 = vmatpush2.xpose.msra.mxu0 0.0
    %3240 = vmatprep.subr.mxu0 0.0
    %3241 = vmatpush2.xpose.msra.mxu0 0.0
    %3242 = vmatprep.subr.mxu0 0.0
    %3243 = vmatpush2.xpose.msra.mxu0 0.0
    %3244 = vmatprep.subr.mxu0 0.0
    %3245 = vmatpush2.xpose.msra.mxu0 0.0
    %3246 = vmatprep.subr.mxu0 0.0
    %3247 = vmatpush2.xpose.msra.mxu0 0.0
    %3248 = vmatprep.subr.mxu0 0.0
    %3249 = vmatpush2.xpose.msra.mxu0 0.0
    %3250 = vmatprep.mubr.f32.mxu0 0.0
    %3251 = vmatmul.mubr.f32.gmra.mxu0 %v3182
    %v3252 = vpop.f32.mrf.mxu0
    %v3253 = vadd.f32 0.0, %v3252
    %v3254 = vpop.f32.mrf.mxu0
    %3255 = vdwg.mxu0
    %v3256 = vmul.f32 %v3175, 0.35355338
    %v3257 = vmul.f32 %v3253, 0.35355338
    %v3258 = vsel %vm279, %v3256, -inf
    %3259 = vmax.xlane.f32.xlu0 %v3258
    %v3260 = vpop.xlane.xlu0 %3259
    %v3261 = vsel %vm279, %v3257, -inf
    %3262 = vmax.xlane.f32.xlu0 %v3261
    %v3263 = vpop.xlane.xlu0 %3262
    %v3264 = vsub.f32 %v3256, %v3260
    %v3265 = vsub.f32 %v3257, %v3263
    %v3266 = vmul.f32 %v3264, 1.442695
    %v3267 = vpow.pop %v3266
    %v3268 = vmul.f32 %v3265, 1.442695
    %v3269 = vpow.pop %v3268
    %v3270 = vsel %vm279, %v3267, 0.0
    %3271 = vadd.xlane.f32.xlu0 %v3270
    %v3272 = vpop.xlane.xlu0 %3271
    %v3273 = vsel %vm279, %v3269, 0.0
    %3274 = vadd.xlane.f32.xlu0 %v3273
    %v3275 = vpop.xlane.xlu0 %3274
    %v3276 = vrcp.pop %v3272
    %v3277 = vrcp.pop %v3275
    %v3278 = vmul.f32 %v3267, %v3276
    %v3279 = vmul.f32 %v3269, %v3277
    %3280 = vrot.lane.b32.xlu0 %v2098, 40
    %v3281 = vpop.permute.xlu0 %3280
    %v3284 = vsel %vm279, %v3278, 0
    %3286 = vmatprep.subr.mxu0 0.0
    %3287 = vmatpush1.msra.mxu0 0.0
    %3288 = vmatprep.subr.mxu0 0.0
    %3289 = vmatpush1.msra.mxu0 0.0
    %3290 = vmatprep.subr.mxu0 0.0
    %3291 = vmatpush1.msra.mxu0 0.0
    %3292 = vmatprep.subr.mxu0 0.0
    %3293 = vmatpush1.msra.mxu0 0.0
    %3294 = vmatprep.subr.mxu0 0.0
    %3295 = vmatpush1.msra.mxu0 0.0
    %3296 = vmatprep.subr.mxu0 0.0
    %3297 = vmatpush1.msra.mxu0 0.0
    %3298 = vmatprep.subr.mxu0 0.0
    %3299 = vmatpush1.msra.mxu0 0.0
    %3300 = vmatprep.subr.mxu0 0.0
    %3301 = vmatpush1.msra.mxu0 0.0
    %3302 = vmatprep.subr.mxu0 0.0
    %3303 = vmatpush1.msra.mxu0 0.0
    %3304 = vmatprep.subr.mxu0 0.0
    %3305 = vmatpush1.msra.mxu0 0.0
    %3306 = vmatprep.subr.mxu0 0.0
    %3307 = vmatpush1.msra.mxu0 0.0
    %3308 = vmatprep.subr.mxu0 0.0
    %3309 = vmatpush1.msra.mxu0 0.0
    %3310 = vmatprep.subr.mxu0 0.0
    %3311 = vmatpush1.msra.mxu0 0.0
    %3312 = vmatprep.subr.mxu0 0.0
    %3313 = vmatpush1.msra.mxu0 0.0
    %3314 = vmatprep.subr.mxu0 0.0
    %3315 = vmatpush1.msra.mxu0 0.0
    %3316 = vmatprep.subr.mxu0 0.0
    %3317 = vmatpush1.msra.mxu0 %v3281
    %3318 = vmatprep.subr.mxu0 0.0
    %3319 = vmatpush2.msra.mxu0 0.0
    %3320 = vmatprep.subr.mxu0 0.0
    %3321 = vmatpush2.msra.mxu0 0.0
    %3322 = vmatprep.subr.mxu0 0.0
    %3323 = vmatpush2.msra.mxu0 0.0
    %3324 = vmatprep.subr.mxu0 0.0
    %3325 = vmatpush2.msra.mxu0 0.0
    %3326 = vmatprep.subr.mxu0 0.0
    %3327 = vmatpush2.msra.mxu0 0.0
    %3328 = vmatprep.subr.mxu0 0.0
    %3329 = vmatpush2.msra.mxu0 0.0
    %3330 = vmatprep.subr.mxu0 0.0
    %3331 = vmatpush2.msra.mxu0 0.0
    %3332 = vmatprep.subr.mxu0 0.0
    %3333 = vmatpush2.msra.mxu0 0.0
    %3334 = vmatprep.subr.mxu0 0.0
    %3335 = vmatpush2.msra.mxu0 0.0
    %3336 = vmatprep.subr.mxu0 0.0
    %3337 = vmatpush2.msra.mxu0 0.0
    %3338 = vmatprep.subr.mxu0 0.0
    %3339 = vmatpush2.msra.mxu0 0.0
    %3340 = vmatprep.subr.mxu0 0.0
    %3341 = vmatpush2.msra.mxu0 0.0
    %3342 = vmatprep.subr.mxu0 0.0
    %3343 = vmatpush2.msra.mxu0 0.0
    %3344 = vmatprep.subr.mxu0 0.0
    %3345 = vmatpush2.msra.mxu0 0.0
    %3346 = vmatprep.subr.mxu0 0.0
    %3347 = vmatpush2.msra.mxu0 0.0
    %3348 = vmatprep.subr.mxu0 0.0
    %3349 = vmatpush2.msra.mxu0 0.0
    %3350 = vmatprep.mubr.f32.mxu0 0.0
    %3351 = vmatmul.mubr.f32.gmra.mxu0 %v3284
    %v3352 = vpop.f32.mrf.mxu0
    %v3353 = vadd.f32 0.0, %v3352
    %v3354 = vpop.f32.mrf.mxu0
    %3355 = vdwg.mxu0
    %3356 = vrot.lane.b32.xlu0 %v2103, 40
    %v3357 = vpop.permute.xlu0 %3356
    %v3360 = vsel %vm279, %v3279, 0
    %3362 = vmatprep.subr.mxu0 0.0
    %3363 = vmatpush1.msra.mxu0 0.0
    %3364 = vmatprep.subr.mxu0 0.0
    %3365 = vmatpush1.msra.mxu0 0.0
    %3366 = vmatprep.subr.mxu0 0.0
    %3367 = vmatpush1.msra.mxu0 0.0
    %3368 = vmatprep.subr.mxu0 0.0
    %3369 = vmatpush1.msra.mxu0 0.0
    %3370 = vmatprep.subr.mxu0 0.0
    %3371 = vmatpush1.msra.mxu0 0.0
    %3372 = vmatprep.subr.mxu0 0.0
    %3373 = vmatpush1.msra.mxu0 0.0
    %3374 = vmatprep.subr.mxu0 0.0
    %3375 = vmatpush1.msra.mxu0 0.0
    %3376 = vmatprep.subr.mxu0 0.0
    %3377 = vmatpush1.msra.mxu0 0.0
    %3378 = vmatprep.subr.mxu0 0.0
    %3379 = vmatpush1.msra.mxu0 0.0
    %3380 = vmatprep.subr.mxu0 0.0
    %3381 = vmatpush1.msra.mxu0 0.0
    %3382 = vmatprep.subr.mxu0 0.0
    %3383 = vmatpush1.msra.mxu0 0.0
    %3384 = vmatprep.subr.mxu0 0.0
    %3385 = vmatpush1.msra.mxu0 0.0
    %3386 = vmatprep.subr.mxu0 0.0
    %3387 = vmatpush1.msra.mxu0 0.0
    %3388 = vmatprep.subr.mxu0 0.0
    %3389 = vmatpush1.msra.mxu0 0.0
    %3390 = vmatprep.subr.mxu0 0.0
    %3391 = vmatpush1.msra.mxu0 0.0
    %3392 = vmatprep.subr.mxu0 0.0
    %3393 = vmatpush1.msra.mxu0 %v3357
    %3394 = vmatprep.subr.mxu0 0.0
    %3395 = vmatpush2.msra.mxu0 0.0
    %3396 = vmatprep.subr.mxu0 0.0
    %3397 = vmatpush2.msra.mxu0 0.0
    %3398 = vmatprep.subr.mxu0 0.0
    %3399 = vmatpush2.msra.mxu0 0.0
    %3400 = vmatprep.subr.mxu0 0.0
    %3401 = vmatpush2.msra.mxu0 0.0
    %3402 = vmatprep.subr.mxu0 0.0
    %3403 = vmatpush2.msra.mxu0 0.0
    %3404 = vmatprep.subr.mxu0 0.0
    %3405 = vmatpush2.msra.mxu0 0.0
    %3406 = vmatprep.subr.mxu0 0.0
    %3407 = vmatpush2.msra.mxu0 0.0
    %3408 = vmatprep.subr.mxu0 0.0
    %3409 = vmatpush2.msra.mxu0 0.0
    %3410 = vmatprep.subr.mxu0 0.0
    %3411 = vmatpush2.msra.mxu0 0.0
    %3412 = vmatprep.subr.mxu0 0.0
    %3413 = vmatpush2.msra.mxu0 0.0
    %3414 = vmatprep.subr.mxu0 0.0
    %3415 = vmatpush2.msra.mxu0 0.0
    %3416 = vmatprep.subr.mxu0 0.0
    %3417 = vmatpush2.msra.mxu0 0.0
    %3418 = vmatprep.subr.mxu0 0.0
    %3419 = vmatpush2.msra.mxu0 0.0
    %3420 = vmatprep.subr.mxu0 0.0
    %3421 = vmatpush2.msra.mxu0 0.0
    %3422 = vmatprep.subr.mxu0 0.0
    %3423 = vmatpush2.msra.mxu0 0.0
    %3424 = vmatprep.subr.mxu0 0.0
    %3425 = vmatpush2.msra.mxu0 0.0
    %3426 = vmatprep.mubr.f32.mxu0 0.0
    %3427 = vmatmul.mubr.f32.gmra.mxu0 %v3360
    %v3428 = vpop.f32.mrf.mxu0
    %v3429 = vadd.f32 0.0, %v3428
    %v3430 = vpop.f32.mrf.mxu0
    %3431 = vdwg.mxu0
    %3434 = vrot.lane.b32.xlu0 %v2689, 8
    %v3435 = vpop.permute.xlu0 %3434
    %3436 = vrot.lane.b32.xlu0 %v2765, 8
    %v3437 = vpop.permute.xlu0 %3436
    %3442 = vrot.lane.b32.xlu0 %v3021, 16
    %v3443 = vpop.permute.xlu0 %3442
    %3444 = vrot.lane.b32.xlu0 %v3097, 16
    %v3445 = vpop.permute.xlu0 %3444
    %3450 = vrot.lane.b32.xlu0 %v3353, 24
    %v3451 = vpop.permute.xlu0 %3450
    %3452 = vrot.lane.b32.xlu0 %v3429, 24
    %v3453 = vpop.permute.xlu0 %3452
    %v3456 = vsel %vm279, %v2357, %v3435
    %v3457 = vsel %vm279, %v2433, %v3437
    %v3458 = vsel %vm1629, %v3456, %v3443
    %v3459 = vsel %vm1629, %v3457, %v3445
    %v3460 = vsel %vm1632, %v3458, %v3451
    %v3461 = vsel %vm1632, %v3459, %v3453
    %s3462 = scalar_lea.vmem %s5, 32
    %v3463 = vld [vmem:[%s3462] sm:$0xff]
    %v3464 = vld [vmem:[%s3462 + $0x8] sm:$0xff]
    %v3465 = vld [vmem:[%s3462 + $0x10] sm:$0xff]
    %v3466 = vld [vmem:[%s3462 + $0x18] sm:$0xff]
    %s3467 = scalar_lea.vmem %s6, 1
    %v3468 = vld [vmem:[%s3467] sm:$0x1]
    %v3470 = vlaneseq
    %v3471 = vshrl.u32 %v3470, 7
    %v3472 = vsub.s32 0, %v3471
    %v3473 = vrot.slane %v3468, %v3472
    %v3476 = vsel %vm194, %v3460, 0
    %v3479 = vsel %vm194, %v3461, 0
    %3481 = vmatprep.subr.mxu0 0.0
    %3482 = vmatpush1.msra.mxu0 0.0
    %3483 = vmatprep.subr.mxu0 0.0
    %3484 = vmatpush1.msra.mxu0 0.0
    %3485 = vmatprep.subr.mxu0 0.0
    %3486 = vmatpush1.msra.mxu0 0.0
    %3487 = vmatprep.subr.mxu0 0.0
    %3488 = vmatpush1.msra.mxu0 0.0
    %3489 = vmatprep.subr.mxu0 0.0
    %3490 = vmatpush1.msra.mxu0 0.0
    %3491 = vmatprep.subr.mxu0 0.0
    %3492 = vmatpush1.msra.mxu0 0.0
    %3493 = vmatprep.subr.mxu0 0.0
    %3494 = vmatpush1.msra.mxu0 0.0
    %3495 = vmatprep.subr.mxu0 0.0
    %3496 = vmatpush1.msra.mxu0 0.0
    %3497 = vmatprep.subr.mxu0 0.0
    %3498 = vmatpush1.msra.mxu0 0.0
    %3499 = vmatprep.subr.mxu0 0.0
    %3500 = vmatpush1.msra.mxu0 0.0
    %3501 = vmatprep.subr.mxu0 0.0
    %3502 = vmatpush1.msra.mxu0 0.0
    %3503 = vmatprep.subr.mxu0 0.0
    %3504 = vmatpush1.msra.mxu0 0.0
    %3505 = vmatprep.subr.mxu0 0.0
    %3506 = vmatpush1.msra.mxu0 %v3466
    %3507 = vmatprep.subr.mxu0 0.0
    %3508 = vmatpush1.msra.mxu0 %v3465
    %3509 = vmatprep.subr.mxu0 0.0
    %3510 = vmatpush1.msra.mxu0 %v3464
    %3511 = vmatprep.subr.mxu0 0.0
    %3512 = vmatpush1.msra.mxu0 %v3463
    %3513 = vmatprep.subr.mxu0 0.0
    %3514 = vmatpush2.msra.mxu0 0.0
    %3515 = vmatprep.subr.mxu0 0.0
    %3516 = vmatpush2.msra.mxu0 0.0
    %3517 = vmatprep.subr.mxu0 0.0
    %3518 = vmatpush2.msra.mxu0 0.0
    %3519 = vmatprep.subr.mxu0 0.0
    %3520 = vmatpush2.msra.mxu0 0.0
    %3521 = vmatprep.subr.mxu0 0.0
    %3522 = vmatpush2.msra.mxu0 0.0
    %3523 = vmatprep.subr.mxu0 0.0
    %3524 = vmatpush2.msra.mxu0 0.0
    %3525 = vmatprep.subr.mxu0 0.0
    %3526 = vmatpush2.msra.mxu0 0.0
    %3527 = vmatprep.subr.mxu0 0.0
    %3528 = vmatpush2.msra.mxu0 0.0
    %3529 = vmatprep.subr.mxu0 0.0
    %3530 = vmatpush2.msra.mxu0 0.0
    %3531 = vmatprep.subr.mxu0 0.0
    %3532 = vmatpush2.msra.mxu0 0.0
    %3533 = vmatprep.subr.mxu0 0.0
    %3534 = vmatpush2.msra.mxu0 0.0
    %3535 = vmatprep.subr.mxu0 0.0
    %3536 = vmatpush2.msra.mxu0 0.0
    %3537 = vmatprep.subr.mxu0 0.0
    %3538 = vmatpush2.msra.mxu0 0.0
    %3539 = vmatprep.subr.mxu0 0.0
    %3540 = vmatpush2.msra.mxu0 0.0
    %3541 = vmatprep.subr.mxu0 0.0
    %3542 = vmatpush2.msra.mxu0 0.0
    %3543 = vmatprep.subr.mxu0 0.0
    %3544 = vmatpush2.msra.mxu0 0.0
    %3545 = vmatprep.mubr.f32.mxu0 0.0
    %3546 = vmatmul.mubr.f32.gmra.mxu0 %v3476
    %v3547 = vpop.f32.mrf.mxu0
    %v3548 = vadd.f32 %v3473, %v3547
    %v3549 = vpop.f32.mrf.mxu0
    %3550 = vmatprep.mubr.f32.mxu0 0.0
    %3551 = vmatmul.mubr.f32.gmra.mxu0 %v3479
    %v3552 = vpop.f32.mrf.mxu0
    %v3553 = vadd.f32 %v3473, %v3552
    %v3554 = vpop.f32.mrf.mxu0
    %3555 = vdwg.mxu0
    %v3556 = vadd.f32 %v2010, %v3548
    %v3557 = vadd.f32 %v2011, %v3553
    %s3558 = scalar_lea.vmem %s7, 1
    %v3559 = vld [vmem:[%s3558] sm:$0x1]
    %s3560 = scalar_lea.vmem %s8, 1
    %v3561 = vld [vmem:[%s3560] sm:$0x1]
    %v3562 = vsel %vm194, %v3556, 0.0
    %3563 = vadd.xlane.f32.xlu0 %v3562
    %v3564 = vpop.xlane.xlu0 %3563
    %v3565 = vsel %vm194, %v3557, 0.0
    %3566 = vadd.xlane.f32.xlu0 %v3565
    %v3567 = vpop.xlane.xlu0 %3566
    %v3568 = vmul.f32 %v3564, %v1737
    %v3569 = vmul.f32 %v3567, %v1737
    %v3570 = vsub.f32 %v3556, %v3568
    %v3571 = vsub.f32 %v3557, %v3569
    %v3572 = vmul.f32 %v3570, %v3570
    %v3573 = vmul.f32 %v3571, %v3571
    %v3574 = vsel %vm194, %v3572, 0.0
    %3575 = vadd.xlane.f32.xlu0 %v3574
    %v3576 = vpop.xlane.xlu0 %3575
    %v3577 = vsel %vm194, %v3573, 0.0
    %3578 = vadd.xlane.f32.xlu0 %v3577
    %v3579 = vpop.xlane.xlu0 %3578
    %v3580 = vmul.f32 %v3576, %v1737
    %v3581 = vmul.f32 %v3579, %v1737
    %v3582 = vadd.f32 %v3580, 1e-05
    %v3583 = vadd.f32 %v3581, 1e-05
    %v3584 = vrsqrt.pop %v3582
    %v3585 = vrsqrt.pop %v3583
    %v3586 = vmul.f32 %v3570, %v3584
    %v3587 = vmul.f32 %v3571, %v3585
    %v3589 = vlaneseq
    %v3590 = vshrl.u32 %v3589, 7
    %v3591 = vsub.s32 0, %v3590
    %v3592 = vrot.slane %v3559, %v3591
    %v3594 = vmul.f32 %v3586, %v3592
    %v3595 = vmul.f32 %v3587, %v3592
    %v3597 = vlaneseq
    %v3598 = vshrl.u32 %v3597, 7
    %v3599 = vsub.s32 0, %v3598
    %v3600 = vrot.slane %v3561, %v3599
    %v3602 = vadd.f32 %v3594, %v3600
    %v3603 = vadd.f32 %v3595, %v3600
    %s3604 = scalar_lea.vmem %s9, 32
    %v3605 = vld [vmem:[%s3604] sm:$0xff]
    %v3606 = vld [vmem:[%s3604 + $0x8] sm:$0xff]
    %v3607 = vld [vmem:[%s3604 + $0x10] sm:$0xff]
    %v3608 = vld [vmem:[%s3604 + $0x18] sm:$0xff]
    %s3609 = scalar_lea.vmem %s10, 1
    %v3610 = vld [vmem:[%s3609] sm:$0x1]
    %v3612 = vlaneseq
    %v3613 = vshrl.u32 %v3612, 7
    %v3614 = vsub.s32 0, %v3613
    %v3615 = vrot.slane %v3610, %v3614
    %v3618 = vsel %vm194, %v3602, 0
    %v3621 = vsel %vm194, %v3603, 0
    %3623 = vmatprep.subr.mxu0 0.0
    %3624 = vmatpush1.msra.mxu0 0.0
    %3625 = vmatprep.subr.mxu0 0.0
    %3626 = vmatpush1.msra.mxu0 0.0
    %3627 = vmatprep.subr.mxu0 0.0
    %3628 = vmatpush1.msra.mxu0 0.0
    %3629 = vmatprep.subr.mxu0 0.0
    %3630 = vmatpush1.msra.mxu0 0.0
    %3631 = vmatprep.subr.mxu0 0.0
    %3632 = vmatpush1.msra.mxu0 0.0
    %3633 = vmatprep.subr.mxu0 0.0
    %3634 = vmatpush1.msra.mxu0 0.0
    %3635 = vmatprep.subr.mxu0 0.0
    %3636 = vmatpush1.msra.mxu0 0.0
    %3637 = vmatprep.subr.mxu0 0.0
    %3638 = vmatpush1.msra.mxu0 0.0
    %3639 = vmatprep.subr.mxu0 0.0
    %3640 = vmatpush1.msra.mxu0 0.0
    %3641 = vmatprep.subr.mxu0 0.0
    %3642 = vmatpush1.msra.mxu0 0.0
    %3643 = vmatprep.subr.mxu0 0.0
    %3644 = vmatpush1.msra.mxu0 0.0
    %3645 = vmatprep.subr.mxu0 0.0
    %3646 = vmatpush1.msra.mxu0 0.0
    %3647 = vmatprep.subr.mxu0 0.0
    %3648 = vmatpush1.msra.mxu0 %v3608
    %3649 = vmatprep.subr.mxu0 0.0
    %3650 = vmatpush1.msra.mxu0 %v3607
    %3651 = vmatprep.subr.mxu0 0.0
    %3652 = vmatpush1.msra.mxu0 %v3606
    %3653 = vmatprep.subr.mxu0 0.0
    %3654 = vmatpush1.msra.mxu0 %v3605
    %3655 = vmatprep.subr.mxu0 0.0
    %3656 = vmatpush2.msra.mxu0 0.0
    %3657 = vmatprep.subr.mxu0 0.0
    %3658 = vmatpush2.msra.mxu0 0.0
    %3659 = vmatprep.subr.mxu0 0.0
    %3660 = vmatpush2.msra.mxu0 0.0
    %3661 = vmatprep.subr.mxu0 0.0
    %3662 = vmatpush2.msra.mxu0 0.0
    %3663 = vmatprep.subr.mxu0 0.0
    %3664 = vmatpush2.msra.mxu0 0.0
    %3665 = vmatprep.subr.mxu0 0.0
    %3666 = vmatpush2.msra.mxu0 0.0
    %3667 = vmatprep.subr.mxu0 0.0
    %3668 = vmatpush2.msra.mxu0 0.0
    %3669 = vmatprep.subr.mxu0 0.0
    %3670 = vmatpush2.msra.mxu0 0.0
    %3671 = vmatprep.subr.mxu0 0.0
    %3672 = vmatpush2.msra.mxu0 0.0
    %3673 = vmatprep.subr.mxu0 0.0
    %3674 = vmatpush2.msra.mxu0 0.0
    %3675 = vmatprep.subr.mxu0 0.0
    %3676 = vmatpush2.msra.mxu0 0.0
    %3677 = vmatprep.subr.mxu0 0.0
    %3678 = vmatpush2.msra.mxu0 0.0
    %3679 = vmatprep.subr.mxu0 0.0
    %3680 = vmatpush2.msra.mxu0 0.0
    %3681 = vmatprep.subr.mxu0 0.0
    %3682 = vmatpush2.msra.mxu0 0.0
    %3683 = vmatprep.subr.mxu0 0.0
    %3684 = vmatpush2.msra.mxu0 0.0
    %3685 = vmatprep.subr.mxu0 0.0
    %3686 = vmatpush2.msra.mxu0 0.0
    %3687 = vmatprep.mubr.f32.mxu0 0.0
    %3688 = vmatmul.mubr.f32.gmra.mxu0 %v3618
    %v3689 = vpop.f32.mrf.mxu0
    %v3690 = vadd.f32 %v3615, %v3689
    %v3691 = vpop.f32.mrf.mxu0
    %3692 = vmatprep.mubr.f32.mxu0 0.0
    %3693 = vmatmul.mubr.f32.gmra.mxu0 %v3621
    %v3694 = vpop.f32.mrf.mxu0
    %v3695 = vadd.f32 %v3615, %v3694
    %v3696 = vpop.f32.mrf.mxu0
    %3697 = vdwg.mxu0
    %v3698 = vmax.f32 %v3690, 0.0
    %v3699 = vmax.f32 %v3695, 0.0
    %s3700 = scalar_lea.vmem %s11, 128
    %v3701 = vld [vmem:[%s3700] sm:$0xff]
    %v3702 = vld [vmem:[%s3700 + $0x8] sm:$0xff]
    %v3703 = vld [vmem:[%s3700 + $0x10] sm:$0xff]
    %v3704 = vld [vmem:[%s3700 + $0x18] sm:$0xff]
    %v3705 = vld [vmem:[%s3700 + $0x20] sm:$0xff]
    %v3706 = vld [vmem:[%s3700 + $0x28] sm:$0xff]
    %v3707 = vld [vmem:[%s3700 + $0x30] sm:$0xff]
    %v3708 = vld [vmem:[%s3700 + $0x38] sm:$0xff]
    %v3709 = vld [vmem:[%s3700 + $0x40] sm:$0xff]
    %v3710 = vld [vmem:[%s3700 + $0x48] sm:$0xff]
    %v3711 = vld [vmem:[%s3700 + $0x50] sm:$0xff]
    %v3712 = vld [vmem:[%s3700 + $0x58] sm:$0xff]
    %v3713 = vld [vmem:[%s3700 + $0x60] sm:$0xff]
    %v3714 = vld [vmem:[%s3700 + $0x68] sm:$0xff]
    %v3715 = vld [vmem:[%s3700 + $0x70] sm:$0xff]
    %v3716 = vld [vmem:[%s3700 + $0x78] sm:$0xff]
    %s3717 = scalar_lea.vmem %s12, 1
    %v3718 = vld [vmem:[%s3717] sm:$0x1]
    %v3720 = vlaneseq
    %v3721 = vshrl.u32 %v3720, 7
    %v3722 = vsub.s32 0, %v3721
    %v3723 = vrot.slane %v3718, %v3722
    %3725 = vmatprep.subr.mxu0 0.0
    %3726 = vmatpush1.msra.mxu0 %v3716
    %3727 = vmatprep.subr.mxu0 0.0
    %3728 = vmatpush1.msra.mxu0 %v3715
    %3729 = vmatprep.subr.mxu0 0.0
    %3730 = vmatpush1.msra.mxu0 %v3714
    %3731 = vmatprep.subr.mxu0 0.0
    %3732 = vmatpush1.msra.mxu0 %v3713
    %3733 = vmatprep.subr.mxu0 0.0
    %3734 = vmatpush1.msra.mxu0 %v3712
    %3735 = vmatprep.subr.mxu0 0.0
    %3736 = vmatpush1.msra.mxu0 %v3711
    %3737 = vmatprep.subr.mxu0 0.0
    %3738 = vmatpush1.msra.mxu0 %v3710
    %3739 = vmatprep.subr.mxu0 0.0
    %3740 = vmatpush1.msra.mxu0 %v3709
    %3741 = vmatprep.subr.mxu0 0.0
    %3742 = vmatpush1.msra.mxu0 %v3708
    %3743 = vmatprep.subr.mxu0 0.0
    %3744 = vmatpush1.msra.mxu0 %v3707
    %3745 = vmatprep.subr.mxu0 0.0
    %3746 = vmatpush1.msra.mxu0 %v3706
    %3747 = vmatprep.subr.mxu0 0.0
    %3748 = vmatpush1.msra.mxu0 %v3705
    %3749 = vmatprep.subr.mxu0 0.0
    %3750 = vmatpush1.msra.mxu0 %v3704
    %3751 = vmatprep.subr.mxu0 0.0
    %3752 = vmatpush1.msra.mxu0 %v3703
    %3753 = vmatprep.subr.mxu0 0.0
    %3754 = vmatpush1.msra.mxu0 %v3702
    %3755 = vmatprep.subr.mxu0 0.0
    %3756 = vmatpush1.msra.mxu0 %v3701
    %3757 = vmatprep.subr.mxu0 0.0
    %3758 = vmatpush2.msra.mxu0 0.0
    %3759 = vmatprep.subr.mxu0 0.0
    %3760 = vmatpush2.msra.mxu0 0.0
    %3761 = vmatprep.subr.mxu0 0.0
    %3762 = vmatpush2.msra.mxu0 0.0
    %3763 = vmatprep.subr.mxu0 0.0
    %3764 = vmatpush2.msra.mxu0 0.0
    %3765 = vmatprep.subr.mxu0 0.0
    %3766 = vmatpush2.msra.mxu0 0.0
    %3767 = vmatprep.subr.mxu0 0.0
    %3768 = vmatpush2.msra.mxu0 0.0
    %3769 = vmatprep.subr.mxu0 0.0
    %3770 = vmatpush2.msra.mxu0 0.0
    %3771 = vmatprep.subr.mxu0 0.0
    %3772 = vmatpush2.msra.mxu0 0.0
    %3773 = vmatprep.subr.mxu0 0.0
    %3774 = vmatpush2.msra.mxu0 0.0
    %3775 = vmatprep.subr.mxu0 0.0
    %3776 = vmatpush2.msra.mxu0 0.0
    %3777 = vmatprep.subr.mxu0 0.0
    %3778 = vmatpush2.msra.mxu0 0.0
    %3779 = vmatprep.subr.mxu0 0.0
    %3780 = vmatpush2.msra.mxu0 0.0
    %3781 = vmatprep.subr.mxu0 0.0
    %3782 = vmatpush2.msra.mxu0 0.0
    %3783 = vmatprep.subr.mxu0 0.0
    %3784 = vmatpush2.msra.mxu0 0.0
    %3785 = vmatprep.subr.mxu0 0.0
    %3786 = vmatpush2.msra.mxu0 0.0
    %3787 = vmatprep.subr.mxu0 0.0
    %3788 = vmatpush2.msra.mxu0 0.0
    %3789 = vmatprep.mubr.f32.mxu0 0.0
    %3790 = vmatmul.mubr.f32.gmra.mxu0 %v3698
    %v3791 = vpop.f32.mrf.mxu0
    %v3792 = vadd.f32 %v3723, %v3791
    %v3793 = vpop.f32.mrf.mxu0
    %3794 = vmatprep.mubr.f32.mxu0 0.0
    %3795 = vmatmul.mubr.f32.gmra.mxu0 %v3699
    %v3796 = vpop.f32.mrf.mxu0
    %v3797 = vadd.f32 %v3723, %v3796
    %v3798 = vpop.f32.mrf.mxu0
    %3799 = vdwg.mxu0
    %v3800 = vadd.f32 %v3602, %v3792
    %v3801 = vadd.f32 %v3603, %v3797
    %s3802 = scalar_lea.vmem %s13, 1
    %v3803 = vld [vmem:[%s3802] sm:$0x1]
    %s3804 = scalar_lea.vmem %s14, 1
    %v3805 = vld [vmem:[%s3804] sm:$0x1]
    %v3806 = vsel %vm194, %v3800, 0.0
    %3807 = vadd.xlane.f32.xlu0 %v3806
    %v3808 = vpop.xlane.xlu0 %3807
    %v3809 = vsel %vm194, %v3801, 0.0
    %3810 = vadd.xlane.f32.xlu0 %v3809
    %v3811 = vpop.xlane.xlu0 %3810
    %v3812 = vmul.f32 %v3808, %v1737
    %v3813 = vmul.f32 %v3811, %v1737
    %v3814 = vsub.f32 %v3800, %v3812
    %v3815 = vsub.f32 %v3801, %v3813
    %v3816 = vmul.f32 %v3814, %v3814
    %v3817 = vmul.f32 %v3815, %v3815
    %v3818 = vsel %vm194, %v3816, 0.0
    %3819 = vadd.xlane.f32.xlu0 %v3818
    %v3820 = vpop.xlane.xlu0 %3819
    %v3821 = vsel %vm194, %v3817, 0.0
    %3822 = vadd.xlane.f32.xlu0 %v3821
    %v3823 = vpop.xlane.xlu0 %3822
    %v3824 = vmul.f32 %v3820, %v1737
    %v3825 = vmul.f32 %v3823, %v1737
    %v3826 = vadd.f32 %v3824, 1e-05
    %v3827 = vadd.f32 %v3825, 1e-05
    %v3828 = vrsqrt.pop %v3826
    %v3829 = vrsqrt.pop %v3827
    %v3830 = vmul.f32 %v3814, %v3828
    %v3831 = vmul.f32 %v3815, %v3829
    %v3833 = vlaneseq
    %v3834 = vshrl.u32 %v3833, 7
    %v3835 = vsub.s32 0, %v3834
    %v3836 = vrot.slane %v3803, %v3835
    %v3838 = vmul.f32 %v3830, %v3836
    %v3839 = vmul.f32 %v3831, %v3836
    %v3841 = vlaneseq
    %v3842 = vshrl.u32 %v3841, 7
    %v3843 = vsub.s32 0, %v3842
    %v3844 = vrot.slane %v3805, %v3843
    %v3846 = vadd.f32 %v3838, %v3844
    %v3847 = vadd.f32 %v3839, %v3844
    %v3848 = vld [vmem:[%s15] sm:$0x1]
    %v3849 = vld [vmem:[%s16] sm:$0x1]
    %v3850 = vsel %vm194, %v3846, 0.0
    %3851 = vadd.xlane.f32.xlu0 %v3850
    %v3852 = vpop.xlane.xlu0 %3851
    %v3853 = vsel %vm194, %v3847, 0.0
    %3854 = vadd.xlane.f32.xlu0 %v3853
    %v3855 = vpop.xlane.xlu0 %3854
    %v3856 = vmul.f32 %v3852, %v1737
    %v3857 = vmul.f32 %v3855, %v1737
    %v3858 = vsub.f32 %v3846, %v3856
    %v3859 = vsub.f32 %v3847, %v3857
    %v3860 = vmul.f32 %v3858, %v3858
    %v3861 = vmul.f32 %v3859, %v3859
    %v3862 = vsel %vm194, %v3860, 0.0
    %3863 = vadd.xlane.f32.xlu0 %v3862
    %v3864 = vpop.xlane.xlu0 %3863
    %v3865 = vsel %vm194, %v3861, 0.0
    %3866 = vadd.xlane.f32.xlu0 %v3865
    %v3867 = vpop.xlane.xlu0 %3866
    %v3868 = vmul.f32 %v3864, %v1737
    %v3869 = vmul.f32 %v3867, %v1737
    %v3870 = vadd.f32 %v3868, 1e-05
    %v3871 = vadd.f32 %v3869, 1e-05
    %v3872 = vrsqrt.pop %v3870
    %v3873 = vrsqrt.pop %v3871
    %v3874 = vmul.f32 %v3858, %v3872
    %v3875 = vmul.f32 %v3859, %v3873
    %v3877 = vlaneseq
    %v3878 = vshrl.u32 %v3877, 7
    %v3879 = vsub.s32 0, %v3878
    %v3880 = vrot.slane %v3848, %v3879
    %v3882 = vmul.f32 %v3874, %v3880
    %v3883 = vmul.f32 %v3875, %v3880
    %v3885 = vlaneseq
    %v3886 = vshrl.u32 %v3885, 7
    %v3887 = vsub.s32 0, %v3886
    %v3888 = vrot.slane %v3849, %v3887
    %v3890 = vadd.f32 %v3882, %v3888
    %v3891 = vadd.f32 %v3883, %v3888
    %v3892 = vsel %vm194, %v3890, 0.0
    %v3893 = vrot.slane %v3892, 4
    %v3894 = vadd.f32 %v3892, %v3893
    %v3895 = vrot.slane %v3894, 2
    %v3896 = vadd.f32 %v3894, %v3895
    %v3897 = vrot.slane %v3896, 1
    %v3898 = vadd.f32 %v3896, %v3897
    %v3899 = vsel %vm194, %v3891, 0.0
    %v3900 = vrot.slane %v3899, 4
    %v3901 = vadd.f32 %v3899, %v3900
    %v3902 = vrot.slane %v3901, 2
    %v3903 = vadd.f32 %v3901, %v3902
    %v3904 = vrot.slane %v3903, 1
    %v3905 = vadd.f32 %v3903, %v3904
    %v3906 = vrcp.pop 8.0
    %v3907 = vmul.f32 %v3898, %v3906
    %v3908 = vmul.f32 %v3905, %v3906
    %v3909 = vld [vmem:[%s17] sm:$0xff]
    %v3910 = vld [vmem:[%s17 + $0x8] sm:$0xff]
    %v3911 = vld [vmem:[%s17 + $0x10] sm:$0xff]
    %v3912 = vld [vmem:[%s17 + $0x18] sm:$0xff]
    %v3913 = vld [vmem:[%s18] sm:$0x1]
    %v3915 = vlaneseq
    %v3916 = vshrl.u32 %v3915, 7
    %v3917 = vsub.s32 0, %v3916
    %v3918 = vrot.slane %v3913, %v3917
    %vm3922 = vcmask 1041409
    %v3923 = vsel %vm3922, %v3908, %v3907
    %v3924 = vsel %vm194, %v3923, 0
    %3926 = vmatprep.subr.mxu0 0.0
    %3927 = vmatpush1.msra.mxu0 0.0
    %3928 = vmatprep.subr.mxu0 0.0
    %3929 = vmatpush1.msra.mxu0 0.0
    %3930 = vmatprep.subr.mxu0 0.0
    %3931 = vmatpush1.msra.mxu0 0.0
    %3932 = vmatprep.subr.mxu0 0.0
    %3933 = vmatpush1.msra.mxu0 0.0
    %3934 = vmatprep.subr.mxu0 0.0
    %3935 = vmatpush1.msra.mxu0 0.0
    %3936 = vmatprep.subr.mxu0 0.0
    %3937 = vmatpush1.msra.mxu0 0.0
    %3938 = vmatprep.subr.mxu0 0.0
    %3939 = vmatpush1.msra.mxu0 0.0
    %3940 = vmatprep.subr.mxu0 0.0
    %3941 = vmatpush1.msra.mxu0 0.0
    %3942 = vmatprep.subr.mxu0 0.0
    %3943 = vmatpush1.msra.mxu0 0.0
    %3944 = vmatprep.subr.mxu0 0.0
    %3945 = vmatpush1.msra.mxu0 0.0
    %3946 = vmatprep.subr.mxu0 0.0
    %3947 = vmatpush1.msra.mxu0 0.0
    %3948 = vmatprep.subr.mxu0 0.0
    %3949 = vmatpush1.msra.mxu0 0.0
    %3950 = vmatprep.subr.mxu0 0.0
    %3951 = vmatpush1.msra.mxu0 %v3912
    %3952 = vmatprep.subr.mxu0 0.0
    %3953 = vmatpush1.msra.mxu0 %v3911
    %3954 = vmatprep.subr.mxu0 0.0
    %3955 = vmatpush1.msra.mxu0 %v3910
    %3956 = vmatprep.subr.mxu0 0.0
    %3957 = vmatpush1.msra.mxu0 %v3909
    %3958 = vmatprep.subr.mxu0 0.0
    %3959 = vmatpush2.msra.mxu0 0.0
    %3960 = vmatprep.subr.mxu0 0.0
    %3961 = vmatpush2.msra.mxu0 0.0
    %3962 = vmatprep.subr.mxu0 0.0
    %3963 = vmatpush2.msra.mxu0 0.0
    %3964 = vmatprep.subr.mxu0 0.0
    %3965 = vmatpush2.msra.mxu0 0.0
    %3966 = vmatprep.subr.mxu0 0.0
    %3967 = vmatpush2.msra.mxu0 0.0
    %3968 = vmatprep.subr.mxu0 0.0
    %3969 = vmatpush2.msra.mxu0 0.0
    %3970 = vmatprep.subr.mxu0 0.0
    %3971 = vmatpush2.msra.mxu0 0.0
    %3972 = vmatprep.subr.mxu0 0.0
    %3973 = vmatpush2.msra.mxu0 0.0
    %3974 = vmatprep.subr.mxu0 0.0
    %3975 = vmatpush2.msra.mxu0 0.0
    %3976 = vmatprep.subr.mxu0 0.0
    %3977 = vmatpush2.msra.mxu0 0.0
    %3978 = vmatprep.subr.mxu0 0.0
    %3979 = vmatpush2.msra.mxu0 0.0
    %3980 = vmatprep.subr.mxu0 0.0
    %3981 = vmatpush2.msra.mxu0 0.0
    %3982 = vmatprep.subr.mxu0 0.0
    %3983 = vmatpush2.msra.mxu0 0.0
    %3984 = vmatprep.subr.mxu0 0.0
    %3985 = vmatpush2.msra.mxu0 0.0
    %3986 = vmatprep.subr.mxu0 0.0
    %3987 = vmatpush2.msra.mxu0 0.0
    %3988 = vmatprep.subr.mxu0 0.0
    %3989 = vmatpush2.msra.mxu0 0.0
    %3990 = vmatprep.mubr.f32.mxu0 0.0
    %3991 = vmatmul.mubr.f32.gmra.mxu0 %v3924
    %v3992 = vpop.f32.mrf.mxu0
    %v3993 = vadd.f32 %v3918, %v3992
    %v3994 = vpop.f32.mrf.mxu0
    %3995 = vdwg.mxu0
    %v3996 = vmax.f32 %v3993, 0.0
    %v3997 = vld [vmem:[%s19] sm:$0xff]
    %v3998 = vld [vmem:[%s19 + $0x8] sm:$0xff]
    %v3999 = vld [vmem:[%s20] sm:$0x1]
    %v4001 = vlaneseq
    %v4002 = vshrl.u32 %v4001, 7
    %v4003 = vsub.s32 0, %v4002
    %v4004 = vrot.slane %v3999, %v4003
    %v4007 = vsel %vm1629, %v3996, 0
    %4009 = vmatprep.subr.mxu0 0.0
    %4010 = vmatpush1.msra.mxu0 0.0
    %4011 = vmatprep.subr.mxu0 0.0
    %4012 = vmatpush1.msra.mxu0 0.0
    %4013 = vmatprep.subr.mxu0 0.0
    %4014 = vmatpush1.msra.mxu0 0.0
    %4015 = vmatprep.subr.mxu0 0.0
    %4016 = vmatpush1.msra.mxu0 0.0
    %4017 = vmatprep.subr.mxu0 0.0
    %4018 = vmatpush1.msra.mxu0 0.0
    %4019 = vmatprep.subr.mxu0 0.0
    %4020 = vmatpush1.msra.mxu0 0.0
    %4021 = vmatprep.subr.mxu0 0.0
    %4022 = vmatpush1.msra.mxu0 0.0
    %4023 = vmatprep.subr.mxu0 0.0
    %4024 = vmatpush1.msra.mxu0 0.0
    %4025 = vmatprep.subr.mxu0 0.0
    %4026 = vmatpush1.msra.mxu0 0.0
    %4027 = vmatprep.subr.mxu0 0.0
    %4028 = vmatpush1.msra.mxu0 0.0
    %4029 = vmatprep.subr.mxu0 0.0
    %4030 = vmatpush1.msra.mxu0 0.0
    %4031 = vmatprep.subr.mxu0 0.0
    %4032 = vmatpush1.msra.mxu0 0.0
    %4033 = vmatprep.subr.mxu0 0.0
    %4034 = vmatpush1.msra.mxu0 0.0
    %4035 = vmatprep.subr.mxu0 0.0
    %4036 = vmatpush1.msra.mxu0 0.0
    %4037 = vmatprep.subr.mxu0 0.0
    %4038 = vmatpush1.msra.mxu0 %v3998
    %4039 = vmatprep.subr.mxu0 0.0
    %4040 = vmatpush1.msra.mxu0 %v3997
    %4041 = vmatprep.subr.mxu0 0.0
    %4042 = vmatpush2.msra.mxu0 0.0
    %4043 = vmatprep.subr.mxu0 0.0
    %4044 = vmatpush2.msra.mxu0 0.0
    %4045 = vmatprep.subr.mxu0 0.0
    %4046 = vmatpush2.msra.mxu0 0.0
    %4047 = vmatprep.subr.mxu0 0.0
    %4048 = vmatpush2.msra.mxu0 0.0
    %4049 = vmatprep.subr.mxu0 0.0
    %4050 = vmatpush2.msra.mxu0 0.0
    %4051 = vmatprep.subr.mxu0 0.0
    %4052 = vmatpush2.msra.mxu0 0.0
    %4053 = vmatprep.subr.mxu0 0.0
    %4054 = vmatpush2.msra.mxu0 0.0
    %4055 = vmatprep.subr.mxu0 0.0
    %4056 = vmatpush2.msra.mxu0 0.0
    %4057 = vmatprep.subr.mxu0 0.0
    %4058 = vmatpush2.msra.mxu0 0.0
    %4059 = vmatprep.subr.mxu0 0.0
    %4060 = vmatpush2.msra.mxu0 0.0
    %4061 = vmatprep.subr.mxu0 0.0
    %4062 = vmatpush2.msra.mxu0 0.0
    %4063 = vmatprep.subr.mxu0 0.0
    %4064 = vmatpush2.msra.mxu0 0.0
    %4065 = vmatprep.subr.mxu0 0.0
    %4066 = vmatpush2.msra.mxu0 0.0
    %4067 = vmatprep.subr.mxu0 0.0
    %4068 = vmatpush2.msra.mxu0 0.0
    %4069 = vmatprep.subr.mxu0 0.0
    %4070 = vmatpush2.msra.mxu0 0.0
    %4071 = vmatprep.subr.mxu0 0.0
    %4072 = vmatpush2.msra.mxu0 0.0
    %4073 = vmatprep.mubr.f32.mxu0 0.0
    %4074 = vmatmul.mubr.f32.gmra.mxu0 %v4007
    %v4075 = vpop.f32.mrf.mxu0
    %v4076 = vadd.f32 %v4004, %v4075
    %v4077 = vpop.f32.mrf.mxu0
    %4078 = vdwg.mxu0
    %4079 = vst [vmem:[#allocation2] sm:$0x3] %v4076
    // Predicated region
    $region86: #{tpu_custom_call.1} parent=1 // pred_check
      _
    $region87: #{tpu_custom_call.1} parent=1 // pred_check_branch
      %4081 = sbr.rel (0) target = $region89
    $region88: #{tpu_custom_call.1} parent=1 // pred_region
      %s4083 = ssub.s32 32, 32
      %4084 = vsyncadd [#allocation3], %s4083
      %s4086 = sshll.u32 [#allocation2], 4
      %s4087 = int_to_ptr.vmem [resolvable:$true] %s4086
      %4089 = dma.vmem_to_hbm [thread:$0]  %s4087, 32, %s21, [#allocation3]
    $region89: #{tpu_custom_call.1} parent=1 // pred_fallthru
      _
    // Predicated region
    $region90: #{tpu_custom_call.1} parent=1 // pred_check
      _
    $region91: #{tpu_custom_call.1} parent=1 // pred_check_branch
      %4091 = sbr.rel (0) target = $region93
    $region92: #{tpu_custom_call.1} parent=1 // pred_region
      %4092 = dma.done [#allocation3], 32
    $region93: #{tpu_custom_call.1} parent=1 // pred_fallthru
      _
    %4093 = vsyncpa [#allocation3], 1

</llo_original>
